<compile_context>
chip_gen: v7x
topology: tpu7x:2x2x1
jax: 0.10.0
libtpu: 0.0.40
codegen_flags: <defaults>
</compile_context>

<pallas_src>
import math
import jax
import jax.numpy as jnp
from jax.experimental import pallas as pl
from jax.experimental.pallas import tpu as pltpu

NUM_HEADS = 4
LN_EPS = 1e-5  # nn.LayerNorm default

PARAM_ORDER = ('wq', 'bq', 'wk', 'bk', 'wv', 'bv', 'wo', 'bo',
               'ln1_g', 'ln1_b', 'w1', 'b1', 'w2', 'b2', 'ln2_g', 'ln2_b')


def _erf_f32(x):
    # Abramowitz & Stegun 7.1.26 (max abs err ~1.5e-7): exact-erf GELU semantics
    # without relying on a lax.erf Mosaic lowering.
    a1, a2, a3, a4, a5 = (0.254829592, -0.284496736, 1.421413741,
                          -1.453152027, 1.061405429)
    p = 0.3275911
    ax = jnp.abs(x)
    t = 1.0 / (1.0 + p * ax)
    poly = ((((a5 * t + a4) * t + a3) * t + a2) * t + a1) * t
    y = 1.0 - poly * jnp.exp(-ax * ax)
    return jnp.where(x >= 0, y, -y)


def _gelu_exact(x):
    return 0.5 * x * (1.0 + _erf_f32(x * jnp.float32(1.0 / math.sqrt(2.0))))


def encoder_layer_kernel(x_ref, mask_ref,
                         wq_ref, bq_ref, wk_ref, bk_ref, wv_ref, bv_ref,
                         wo_ref, bo_ref, ln1_g_ref, ln1_b_ref,
                         w1_ref, b1_ref, w2_ref, b2_ref,
                         ln2_g_ref, ln2_b_ref,
                         out_ref):
    """One batch element per grid step: MHSA + add&LN + FFN + add&LN."""
    x = x_ref[0].astype(jnp.float32)                       # (S, H)
    S, H = x.shape
    nh = NUM_HEADS
    hd = H // nh
    add_mask = mask_ref[...].astype(jnp.float32)           # (1, 1, S) additive (0 / -1e9)

    bf16 = jnp.bfloat16

    def dense2d(inp_f32, w_ref, b_ref):
        # (S, Din) @ (Din, Dout) on the MXU; bf16 operands, f32 accumulation.
        return (jnp.dot(inp_f32.astype(bf16), w_ref[...],
                        preferred_element_type=jnp.float32)
                + b_ref[...].astype(jnp.float32))

    # ---------------- multi-head self-attention (batched einsums) -----------------
    xb = jnp.broadcast_to(x.astype(bf16)[None], (nh, S, H))        # (nh, S, H)

    # Per-head projections: weights pre-split as (nh, H, hd); biases (nh, 1, hd).
    qh = jnp.einsum('hsd,hde->hse', xb, wq_ref[...],
                    preferred_element_type=jnp.float32) + bq_ref[...]
    kh = jnp.einsum('hsd,hde->hse', xb, wk_ref[...],
                    preferred_element_type=jnp.float32) + bk_ref[...]
    vh = jnp.einsum('hsd,hde->hse', xb, wv_ref[...],
                    preferred_element_type=jnp.float32) + bv_ref[...]

    qh = qh * jnp.float32(1.0 / math.sqrt(hd))             # fold scale into q (O(S*H))

    scores = jnp.einsum('hqe,hke->hqk', qh.astype(bf16), kh.astype(bf16),
                        preferred_element_type=jnp.float32)        # (nh, S, S)
    scores = scores + add_mask                              # f32 mask math
    scores = scores - jnp.max(scores, axis=-1, keepdims=True)
    probs = jnp.exp(scores)
    probs = probs * pl.reciprocal(jnp.sum(probs, axis=-1, keepdims=True), approx=True)

    ctx = jnp.einsum('hqk,hke->hqe', probs.astype(bf16), vh.astype(bf16),
                     preferred_element_type=jnp.float32)            # (nh, S, hd)

    # Output projection: wo pre-split as (nh, hd, H); sum over heads.
    attn_heads = jnp.einsum('hqe,heo->hqo', ctx.astype(bf16), wo_ref[...],
                            preferred_element_type=jnp.float32)     # (nh, S, H)
    attn_out = jnp.sum(attn_heads, axis=0) + bo_ref[...].astype(jnp.float32)

    def layer_norm(inp, g_ref, b_ref):
        mu = jnp.mean(inp, axis=-1, keepdims=True)
        var = jnp.mean((inp - mu) ** 2, axis=-1, keepdims=True)
        inv = jax.lax.rsqrt(var + jnp.float32(LN_EPS))
        return (inp - mu) * inv * g_ref[...] + b_ref[...]

    h1 = layer_norm(x + attn_out, ln1_g_ref, ln1_b_ref)

    # ------------------------------- feed-forward ----------------------------------
    inter = dense2d(h1, w1_ref, b1_ref)
    inter = _gelu_exact(inter)                              # exact erf-GELU (torch default)
    ffn_out = dense2d(inter, w2_ref, b2_ref)

    h2 = layer_norm(h1 + ffn_out, ln2_g_ref, ln2_b_ref)
    out_ref[0] = h2.astype(out_ref.dtype)


def run_encoder_layer(x, add_mask, params, *, donate_input=True):
    """Invoke the fused per-layer Pallas kernel (grid over batch)."""
    B, S, H = x.shape
    weights = [params[k] for k in PARAM_ORDER]

    def const_spec(a):
        # Full-array block, constant block index -> weight stays VMEM-resident
        # across the batch grid (fetched once, not re-DMA'd per grid step).
        return pl.BlockSpec(a.shape, lambda b, n=a.ndim: (0,) * n)

    grid_spec = pltpu.PrefetchScalarGridSpec(
        num_scalar_prefetch=0,
        grid=(B,),
        in_specs=[pl.BlockSpec((1, S, H), lambda b: (b, 0, 0)),
                  pl.BlockSpec((1, 1, add_mask.shape[-1]), lambda b: (b, 0, 0))]
                 + [const_spec(w) for w in weights],
        out_specs=pl.BlockSpec((1, S, H), lambda b: (b, 0, 0)),
    )
    return pl.pallas_call(
        encoder_layer_kernel,
        out_shape=jax.ShapeDtypeStruct(x.shape, x.dtype),
        grid_spec=grid_spec,
        compiler_params=pltpu.CompilerParams(
            # batch axis is independent -> shard across TensorCores where available
            dimension_semantics=("parallel",),
            # explicit budget; re-derive for v7x (64 MiB physical) at large shapes
            vmem_limit_bytes=32 * 1024 * 1024,
        ),
        input_output_aliases=({0: 0} if donate_input else {}),
    )(x, add_mask, *weights)


def transformer_encoder(hidden_states, attention_mask, layer_params,
                        head_mask=None,
                        output_hidden_states=False, output_attentions=False):
    """Mirrors TransformerEncoder.forward: loops encoder layers sequentially."""
    # (B, S) keep-mask -> (B, 1, S) additive float mask, kept in f32.
    add_mask = ((1.0 - attention_mask.astype(jnp.float32))
                * jnp.float32(-1e9))[:, None, :]
    all_hidden_states = ()
    for params in layer_params:
        if output_hidden_states:
            all_hidden_states = all_hidden_states + (hidden_states,)
        hidden_states = run_encoder_layer(
            hidden_states, add_mask, params,
            donate_input=not output_hidden_states)
        # TODO(synk): prefetch next layer's weights behind this layer's compute
        # (cross-call DMA futures) instead of paying an exposed DMA per layer.
    if output_hidden_states:
        all_hidden_states = all_hidden_states + (hidden_states,)
    outputs = (hidden_states,)
    if output_hidden_states:
        outputs = outputs + (all_hidden_states,)
    # TODO(synk): output_attentions unsupported (probs stay in VMEM); head_mask ignored.
    return outputs


def init_layer_params(key, hidden, intermediate):
    """Torch-style params: Linear weights stored (in_features, out_features), f32."""
    ks = jax.random.split(key, 6)
    std = 0.02
    return {
        'wq': jax.random.normal(ks[0], (hidden, hidden), jnp.float32) * std,
        'bq': jnp.zeros((hidden,), jnp.float32),
        'wk': jax.random.normal(ks[1], (hidden, hidden), jnp.float32) * std,
        'bk': jnp.zeros((hidden,), jnp.float32),
        'wv': jax.random.normal(ks[2], (hidden, hidden), jnp.float32) * std,
        'bv': jnp.zeros((hidden,), jnp.float32),
        'wo': jax.random.normal(ks[3], (hidden, hidden), jnp.float32) * std,
        'bo': jnp.zeros((hidden,), jnp.float32),
        'ln1_g': jnp.ones((hidden,), jnp.float32),
        'ln1_b': jnp.zeros((hidden,), jnp.float32),
        'w1': jax.random.normal(ks[4], (hidden, intermediate), jnp.float32) * std,
        'b1': jnp.zeros((intermediate,), jnp.float32),
        'w2': jax.random.normal(ks[5], (intermediate, hidden), jnp.float32) * std,
        'b2': jnp.zeros((hidden,), jnp.float32),
        'ln2_g': jnp.ones((hidden,), jnp.float32),
        'ln2_b': jnp.zeros((hidden,), jnp.float32),
    }


def prepare_layer_params(p, num_heads):
    """Semantics-preserving repack for the TPU kernel:
       - split heads into the weight leading dim (avoids in-kernel reshapes),
       - bf16 matmul weights (MXU operands), f32 biases / LayerNorm params."""
    H = p['wq'].shape[0]
    hd = H // num_heads
    bf = jnp.bfloat16

    def split_out(w):  # (H, H) -> (nh, H, hd): split the *output* features per head
        return w.reshape(H, num_heads, hd).transpose(1, 0, 2).astype(bf)

    return {
        'wq': split_out(p['wq']), 'bq': p['bq'].reshape(num_heads, 1, hd),
        'wk': split_out(p['wk']), 'bk': p['bk'].reshape(num_heads, 1, hd),
        'wv': split_out(p['wv']), 'bv': p['bv'].reshape(num_heads, 1, hd),
        'wo': p['wo'].reshape(num_heads, hd, H).astype(bf),   # split *input* features
        'bo': p['bo'].reshape(1, H),
        'ln1_g': p['ln1_g'].reshape(1, H), 'ln1_b': p['ln1_b'].reshape(1, H),
        'w1': p['w1'].astype(bf), 'b1': p['b1'].reshape(1, -1),
        'w2': p['w2'].astype(bf), 'b2': p['b2'].reshape(1, H),
        'ln2_g': p['ln2_g'].reshape(1, H), 'ln2_b': p['ln2_b'].reshape(1, H),
    }


if __name__ == "__main__":
    B, S, H, I = 2, 8, 32, 64
    NUM_LAYERS = 2

    key = jax.random.PRNGKey(0)
    k_x, k_layers = jax.random.split(key)
    hidden_states = jax.random.normal(k_x, (B, S, H), jnp.float32)

    # keep-mask: second sequence has its last 2 positions padded out
    attention_mask = jnp.ones((B, S), jnp.float32).at[1, -2:].set(0.0)

    layer_keys = jax.random.split(k_layers, NUM_LAYERS)
    layer_params = [
        prepare_layer_params(init_layer_params(layer_keys[i], H, I), NUM_HEADS)
        for i in range(NUM_LAYERS)
    ]

    fwd = jax.jit(lambda hs, mask, params: transformer_encoder(hs, mask, params)[0])
    out = jax.block_until_ready(fwd(hidden_states, attention_mask, layer_params))

    assert out.shape == (B, S, H) and bool(jnp.all(jnp.isfinite(out)))
    print("KERNEL_OK")
</pallas_src>

<mosaic_0001>
module attributes {stable_mosaic.version = 11 : i64} {
  func.func @encoder_layer_kernel(%arg0: i32, %arg1: memref<1x8x32xf32, #tpu.memory_space<vmem>>, %arg2: memref<1x1x8xf32, #tpu.memory_space<vmem>>, %arg3: memref<4x32x8xbf16, #tpu.memory_space<vmem>>, %arg4: memref<4x1x8xf32, #tpu.memory_space<vmem>>, %arg5: memref<4x32x8xbf16, #tpu.memory_space<vmem>>, %arg6: memref<4x1x8xf32, #tpu.memory_space<vmem>>, %arg7: memref<4x32x8xbf16, #tpu.memory_space<vmem>>, %arg8: memref<4x1x8xf32, #tpu.memory_space<vmem>>, %arg9: memref<4x8x32xbf16, #tpu.memory_space<vmem>>, %arg10: memref<1x32xf32, #tpu.memory_space<vmem>>, %arg11: memref<1x32xf32, #tpu.memory_space<vmem>>, %arg12: memref<1x32xf32, #tpu.memory_space<vmem>>, %arg13: memref<32x64xbf16, #tpu.memory_space<vmem>>, %arg14: memref<1x64xf32, #tpu.memory_space<vmem>>, %arg15: memref<64x32xbf16, #tpu.memory_space<vmem>>, %arg16: memref<1x32xf32, #tpu.memory_space<vmem>>, %arg17: memref<1x32xf32, #tpu.memory_space<vmem>>, %arg18: memref<1x32xf32, #tpu.memory_space<vmem>>, %arg19: memref<1x8x32xf32, #tpu.memory_space<vmem>>) attributes {dimension_semantics = [#tpu.dimension_semantics<parallel>], iteration_bounds = array<i64: 2>, scalar_prefetch = 0 : i64, scratch_operands = 0 : i64, tpu.core_type = #tpu.core_type<tc>, window_params = [{transform_indices = @transform_0, window_bounds = array<i64: 1, 8, 32>}, {transform_indices = @transform_1, window_bounds = array<i64: 1, 1, 8>}, {pipeline_mode = #tpu.pipeline_mode<synchronous>, transform_indices = @transform_2, window_bounds = array<i64: 4, 32, 8>}, {pipeline_mode = #tpu.pipeline_mode<synchronous>, transform_indices = @transform_3, window_bounds = array<i64: 4, 1, 8>}, {pipeline_mode = #tpu.pipeline_mode<synchronous>, transform_indices = @transform_4, window_bounds = array<i64: 4, 32, 8>}, {pipeline_mode = #tpu.pipeline_mode<synchronous>, transform_indices = @transform_5, window_bounds = array<i64: 4, 1, 8>}, {pipeline_mode = #tpu.pipeline_mode<synchronous>, transform_indices = @transform_6, window_bounds = array<i64: 4, 32, 8>}, {pipeline_mode = #tpu.pipeline_mode<synchronous>, transform_indices = @transform_7, window_bounds = array<i64: 4, 1, 8>}, {pipeline_mode = #tpu.pipeline_mode<synchronous>, transform_indices = @transform_8, window_bounds = array<i64: 4, 8, 32>}, {pipeline_mode = #tpu.pipeline_mode<synchronous>, transform_indices = @transform_9, window_bounds = array<i64: 1, 32>}, {pipeline_mode = #tpu.pipeline_mode<synchronous>, transform_indices = @transform_10, window_bounds = array<i64: 1, 32>}, {pipeline_mode = #tpu.pipeline_mode<synchronous>, transform_indices = @transform_11, window_bounds = array<i64: 1, 32>}, {pipeline_mode = #tpu.pipeline_mode<synchronous>, transform_indices = @transform_12, window_bounds = array<i64: 32, 64>}, {pipeline_mode = #tpu.pipeline_mode<synchronous>, transform_indices = @transform_13, window_bounds = array<i64: 1, 64>}, {pipeline_mode = #tpu.pipeline_mode<synchronous>, transform_indices = @transform_14, window_bounds = array<i64: 64, 32>}, {pipeline_mode = #tpu.pipeline_mode<synchronous>, transform_indices = @transform_15, window_bounds = array<i64: 1, 32>}, {pipeline_mode = #tpu.pipeline_mode<synchronous>, transform_indices = @transform_16, window_bounds = array<i64: 1, 32>}, {pipeline_mode = #tpu.pipeline_mode<synchronous>, transform_indices = @transform_17, window_bounds = array<i64: 1, 32>}, {transform_indices = @transform_18, window_bounds = array<i64: 1, 8, 32>}]} {
    %c0 = arith.constant 0 : index
    %c0_0 = arith.constant 0 : index
    %c0_1 = arith.constant 0 : index
    %0 = vector.load %arg1[%c0, %c0_0, %c0_1] : memref<1x8x32xf32, #tpu.memory_space<vmem>>, vector<1x8x32xf32>
    %1 = vector.shape_cast %0 : vector<1x8x32xf32> to vector<8x32xf32>
    %c0_2 = arith.constant 0 : index
    %c0_3 = arith.constant 0 : index
    %c0_4 = arith.constant 0 : index
    %2 = vector.load %arg2[%c0_2, %c0_3, %c0_4] : memref<1x1x8xf32, #tpu.memory_space<vmem>>, vector<1x1x8xf32>
    %3 = arith.truncf %1 : vector<8x32xf32> to vector<8x32xbf16>
    %4 = vector.shape_cast %3 : vector<8x32xbf16> to vector<1x8x32xbf16>
    %5 = vector.shape_cast %4 : vector<1x8x32xbf16> to vector<1x8x32xbf16>
    %6 = vector.broadcast %5 : vector<1x8x32xbf16> to vector<4x8x32xbf16>
    %c0_5 = arith.constant 0 : index
    %c0_6 = arith.constant 0 : index
    %c0_7 = arith.constant 0 : index
    %7 = vector.load %arg3[%c0_5, %c0_6, %c0_7] : memref<4x32x8xbf16, #tpu.memory_space<vmem>>, vector<4x32x8xbf16>
    "tpu.trace_start"() <{level = 10 : i32, message = "hsd,hde->hse"}> : () -> ()
    %cst = arith.constant dense<0.000000e+00> : vector<4x8x8xf32>
    %8 = tpu.matmul %6, %7, %cst {dimension_numbers = #tpu.dot_dimension_numbers<[2], [1], [1], [2], [0, 0, 0, 1, 1, 2], [0], [0]>} : vector<4x8x32xbf16>, vector<4x32x8xbf16>, vector<4x8x8xf32> -> vector<4x8x8xf32>
    "tpu.trace_stop"() : () -> ()
    %c0_8 = arith.constant 0 : index
    %c0_9 = arith.constant 0 : index
    %c0_10 = arith.constant 0 : index
    %9 = vector.load %arg4[%c0_8, %c0_9, %c0_10] : memref<4x1x8xf32, #tpu.memory_space<vmem>>, vector<4x1x8xf32>
    %10 = vector.broadcast %9 : vector<4x1x8xf32> to vector<4x8x8xf32>
    %11 = arith.addf %8, %10 : vector<4x8x8xf32>
    %c0_11 = arith.constant 0 : index
    %c0_12 = arith.constant 0 : index
    %c0_13 = arith.constant 0 : index
    %12 = vector.load %arg5[%c0_11, %c0_12, %c0_13] : memref<4x32x8xbf16, #tpu.memory_space<vmem>>, vector<4x32x8xbf16>
    "tpu.trace_start"() <{level = 10 : i32, message = "hsd,hde->hse"}> : () -> ()
    %cst_14 = arith.constant dense<0.000000e+00> : vector<4x8x8xf32>
    %13 = tpu.matmul %6, %12, %cst_14 {dimension_numbers = #tpu.dot_dimension_numbers<[2], [1], [1], [2], [0, 0, 0, 1, 1, 2], [0], [0]>} : vector<4x8x32xbf16>, vector<4x32x8xbf16>, vector<4x8x8xf32> -> vector<4x8x8xf32>
    "tpu.trace_stop"() : () -> ()
    %c0_15 = arith.constant 0 : index
    %c0_16 = arith.constant 0 : index
    %c0_17 = arith.constant 0 : index
    %14 = vector.load %arg6[%c0_15, %c0_16, %c0_17] : memref<4x1x8xf32, #tpu.memory_space<vmem>>, vector<4x1x8xf32>
    %15 = vector.broadcast %14 : vector<4x1x8xf32> to vector<4x8x8xf32>
    %16 = arith.addf %13, %15 : vector<4x8x8xf32>
    %c0_18 = arith.constant 0 : index
    %c0_19 = arith.constant 0 : index
    %c0_20 = arith.constant 0 : index
    %17 = vector.load %arg7[%c0_18, %c0_19, %c0_20] : memref<4x32x8xbf16, #tpu.memory_space<vmem>>, vector<4x32x8xbf16>
    "tpu.trace_start"() <{level = 10 : i32, message = "hsd,hde->hse"}> : () -> ()
    %cst_21 = arith.constant dense<0.000000e+00> : vector<4x8x8xf32>
    %18 = tpu.matmul %6, %17, %cst_21 {dimension_numbers = #tpu.dot_dimension_numbers<[2], [1], [1], [2], [0, 0, 0, 1, 1, 2], [0], [0]>} : vector<4x8x32xbf16>, vector<4x32x8xbf16>, vector<4x8x8xf32> -> vector<4x8x8xf32>
    "tpu.trace_stop"() : () -> ()
    %c0_22 = arith.constant 0 : index
    %c0_23 = arith.constant 0 : index
    %c0_24 = arith.constant 0 : index
    %19 = vector.load %arg8[%c0_22, %c0_23, %c0_24] : memref<4x1x8xf32, #tpu.memory_space<vmem>>, vector<4x1x8xf32>
    %20 = vector.broadcast %19 : vector<4x1x8xf32> to vector<4x8x8xf32>
    %21 = arith.addf %18, %20 : vector<4x8x8xf32>
    %cst_25 = arith.constant 0.353553385 : f32
    %22 = vector.broadcast %cst_25 : f32 to vector<4x8x8xf32>
    %23 = arith.mulf %11, %22 : vector<4x8x8xf32>
    %24 = arith.truncf %23 : vector<4x8x8xf32> to vector<4x8x8xbf16>
    %25 = arith.truncf %16 : vector<4x8x8xf32> to vector<4x8x8xbf16>
    "tpu.trace_start"() <{level = 10 : i32, message = "hqe,hke->hqk"}> : () -> ()
    %cst_26 = arith.constant dense<0.000000e+00> : vector<4x8x8xf32>
    %26 = tpu.matmul %24, %25, %cst_26 {dimension_numbers = #tpu.dot_dimension_numbers<[2], [2], [1], [1], [0, 0, 0, 1, 1, 1], [0], [0]>} : vector<4x8x8xbf16>, vector<4x8x8xbf16>, vector<4x8x8xf32> -> vector<4x8x8xf32>
    "tpu.trace_stop"() : () -> ()
    %27 = vector.broadcast %2 : vector<1x1x8xf32> to vector<4x8x8xf32>
    %28 = arith.addf %26, %27 : vector<4x8x8xf32>
    %cst_27 = arith.constant dense<0xFF800000> : vector<4x8xf32>
    %29 = vector.multi_reduction <maximumf>, %28, %cst_27 [2] : vector<4x8x8xf32> to vector<4x8xf32>
    %30 = vector.shape_cast %29 : vector<4x8xf32> to vector<4x8x1xf32>
    %31 = vector.broadcast %30 : vector<4x8x1xf32> to vector<4x8x8xf32>
    %32 = arith.subf %28, %31 : vector<4x8x8xf32>
    %33 = math.exp %32 : vector<4x8x8xf32>
    %cst_28 = arith.constant dense<0.000000e+00> : vector<4x8xf32>
    %34 = vector.multi_reduction <add>, %33, %cst_28 [2] : vector<4x8x8xf32> to vector<4x8xf32>
    %35 = vector.shape_cast %34 : vector<4x8xf32> to vector<4x8x1xf32>
    %36 = tpu.reciprocal %35 {approx = true} : vector<4x8x1xf32> -> vector<4x8x1xf32>
    %37 = vector.broadcast %36 : vector<4x8x1xf32> to vector<4x8x8xf32>
    %38 = arith.mulf %33, %37 : vector<4x8x8xf32>
    %39 = arith.truncf %38 : vector<4x8x8xf32> to vector<4x8x8xbf16>
    %40 = arith.truncf %21 : vector<4x8x8xf32> to vector<4x8x8xbf16>
    "tpu.trace_start"() <{level = 10 : i32, message = "hqk,hke->hqe"}> : () -> ()
    %cst_29 = arith.constant dense<0.000000e+00> : vector<4x8x8xf32>
    %41 = tpu.matmul %39, %40, %cst_29 {dimension_numbers = #tpu.dot_dimension_numbers<[2], [1], [1], [2], [0, 0, 0, 1, 1, 2], [0], [0]>} : vector<4x8x8xbf16>, vector<4x8x8xbf16>, vector<4x8x8xf32> -> vector<4x8x8xf32>
    "tpu.trace_stop"() : () -> ()
    %42 = arith.truncf %41 : vector<4x8x8xf32> to vector<4x8x8xbf16>
    %c0_30 = arith.constant 0 : index
    %c0_31 = arith.constant 0 : index
    %c0_32 = arith.constant 0 : index
    %43 = vector.load %arg9[%c0_30, %c0_31, %c0_32] : memref<4x8x32xbf16, #tpu.memory_space<vmem>>, vector<4x8x32xbf16>
    "tpu.trace_start"() <{level = 10 : i32, message = "hqe,heo->hqo"}> : () -> ()
    %cst_33 = arith.constant dense<0.000000e+00> : vector<4x8x32xf32>
    %44 = tpu.matmul %42, %43, %cst_33 {dimension_numbers = #tpu.dot_dimension_numbers<[2], [1], [1], [2], [0, 0, 0, 1, 1, 2], [0], [0]>} : vector<4x8x8xbf16>, vector<4x8x32xbf16>, vector<4x8x32xf32> -> vector<4x8x32xf32>
    "tpu.trace_stop"() : () -> ()
    %cst_34 = arith.constant dense<0.000000e+00> : vector<8x32xf32>
    %45 = vector.multi_reduction <add>, %44, %cst_34 [0] : vector<4x8x32xf32> to vector<8x32xf32>
    %c0_35 = arith.constant 0 : index
    %c0_36 = arith.constant 0 : index
    %46 = vector.load %arg10[%c0_35, %c0_36] : memref<1x32xf32, #tpu.memory_space<vmem>>, vector<1x32xf32>
    %47 = vector.broadcast %46 : vector<1x32xf32> to vector<8x32xf32>
    %48 = arith.addf %45, %47 : vector<8x32xf32>
    %49 = arith.addf %1, %48 : vector<8x32xf32>
    %cst_37 = arith.constant dense<0.000000e+00> : vector<8xf32>
    %50 = vector.multi_reduction <add>, %49, %cst_37 [1] : vector<8x32xf32> to vector<8xf32>
    %51 = vector.shape_cast %50 : vector<8xf32> to vector<8x1xf32>
    %cst_38 = arith.constant 3.200000e+01 : f32
    %52 = vector.broadcast %cst_38 : f32 to vector<8x1xf32>
    %53 = arith.divf %51, %52 : vector<8x1xf32>
    %54 = vector.broadcast %53 : vector<8x1xf32> to vector<8x32xf32>
    %55 = arith.subf %49, %54 : vector<8x32xf32>
    %56 = arith.mulf %55, %55 : vector<8x32xf32>
    %cst_39 = arith.constant dense<0.000000e+00> : vector<8xf32>
    %57 = vector.multi_reduction <add>, %56, %cst_39 [1] : vector<8x32xf32> to vector<8xf32>
    %58 = vector.shape_cast %57 : vector<8xf32> to vector<8x1xf32>
    %cst_40 = arith.constant 3.200000e+01 : f32
    %59 = vector.broadcast %cst_40 : f32 to vector<8x1xf32>
    %60 = arith.divf %58, %59 : vector<8x1xf32>
    %cst_41 = arith.constant 9.99999974E-6 : f32
    %61 = vector.broadcast %cst_41 : f32 to vector<8x1xf32>
    %62 = arith.addf %60, %61 : vector<8x1xf32>
    %63 = math.rsqrt %62 : vector<8x1xf32>
    %64 = vector.broadcast %53 : vector<8x1xf32> to vector<8x32xf32>
    %65 = arith.subf %49, %64 : vector<8x32xf32>
    %66 = vector.broadcast %63 : vector<8x1xf32> to vector<8x32xf32>
    %67 = arith.mulf %65, %66 : vector<8x32xf32>
    %c0_42 = arith.constant 0 : index
    %c0_43 = arith.constant 0 : index
    %68 = vector.load %arg11[%c0_42, %c0_43] : memref<1x32xf32, #tpu.memory_space<vmem>>, vector<1x32xf32>
    %69 = vector.broadcast %68 : vector<1x32xf32> to vector<8x32xf32>
    %70 = arith.mulf %67, %69 : vector<8x32xf32>
    %c0_44 = arith.constant 0 : index
    %c0_45 = arith.constant 0 : index
    %71 = vector.load %arg12[%c0_44, %c0_45] : memref<1x32xf32, #tpu.memory_space<vmem>>, vector<1x32xf32>
    %72 = vector.broadcast %71 : vector<1x32xf32> to vector<8x32xf32>
    %73 = arith.addf %70, %72 : vector<8x32xf32>
    %74 = arith.truncf %73 : vector<8x32xf32> to vector<8x32xbf16>
    %c0_46 = arith.constant 0 : index
    %c0_47 = arith.constant 0 : index
    %75 = vector.load %arg13[%c0_46, %c0_47] : memref<32x64xbf16, #tpu.memory_space<vmem>>, vector<32x64xbf16>
    %cst_48 = arith.constant dense<0.000000e+00> : vector<8x64xf32>
    %76 = tpu.matmul %74, %75, %cst_48 {dimension_numbers = #tpu.dot_dimension_numbers<[1], [0], [0], [1], [0, 0, 1, 1], [], []>} : vector<8x32xbf16>, vector<32x64xbf16>, vector<8x64xf32> -> vector<8x64xf32>
    %c0_49 = arith.constant 0 : index
    %c0_50 = arith.constant 0 : index
    %77 = vector.load %arg14[%c0_49, %c0_50] : memref<1x64xf32, #tpu.memory_space<vmem>>, vector<1x64xf32>
    %78 = vector.broadcast %77 : vector<1x64xf32> to vector<8x64xf32>
    %79 = arith.addf %76, %78 : vector<8x64xf32>
    %cst_51 = arith.constant 5.000000e-01 : f32
    %80 = vector.broadcast %cst_51 : f32 to vector<8x64xf32>
    %81 = arith.mulf %80, %79 : vector<8x64xf32>
    %cst_52 = arith.constant 0.707106769 : f32
    %82 = vector.broadcast %cst_52 : f32 to vector<8x64xf32>
    %83 = arith.mulf %79, %82 : vector<8x64xf32>
    %84 = math.absf %83 : vector<8x64xf32>
    %cst_53 = arith.constant 0.327591091 : f32
    %85 = vector.broadcast %cst_53 : f32 to vector<8x64xf32>
    %86 = arith.mulf %85, %84 : vector<8x64xf32>
    %cst_54 = arith.constant 1.000000e+00 : f32
    %87 = vector.broadcast %cst_54 : f32 to vector<8x64xf32>
    %88 = arith.addf %87, %86 : vector<8x64xf32>
    %cst_55 = arith.constant 1.000000e+00 : f32
    %89 = vector.broadcast %cst_55 : f32 to vector<8x64xf32>
    %90 = arith.divf %89, %88 : vector<8x64xf32>
    %cst_56 = arith.constant 1.06140542 : f32
    %91 = vector.broadcast %cst_56 : f32 to vector<8x64xf32>
    %92 = arith.mulf %91, %90 : vector<8x64xf32>
    %cst_57 = arith.constant -1.45315206 : f32
    %93 = vector.broadcast %cst_57 : f32 to vector<8x64xf32>
    %94 = arith.addf %92, %93 : vector<8x64xf32>
    %95 = arith.mulf %94, %90 : vector<8x64xf32>
    %cst_58 = arith.constant 1.42141378 : f32
    %96 = vector.broadcast %cst_58 : f32 to vector<8x64xf32>
    %97 = arith.addf %95, %96 : vector<8x64xf32>
    %98 = arith.mulf %97, %90 : vector<8x64xf32>
    %cst_59 = arith.constant -0.284496725 : f32
    %99 = vector.broadcast %cst_59 : f32 to vector<8x64xf32>
    %100 = arith.addf %98, %99 : vector<8x64xf32>
    %101 = arith.mulf %100, %90 : vector<8x64xf32>
    %cst_60 = arith.constant 0.254829586 : f32
    %102 = vector.broadcast %cst_60 : f32 to vector<8x64xf32>
    %103 = arith.addf %101, %102 : vector<8x64xf32>
    %104 = arith.mulf %103, %90 : vector<8x64xf32>
    %cst_61 = arith.constant 0.000000e+00 : f32
    %105 = vector.broadcast %cst_61 : f32 to vector<8x64xf32>
    %106 = arith.subf %105, %84 : vector<8x64xf32>
    %107 = arith.mulf %106, %84 : vector<8x64xf32>
    %108 = math.exp %107 : vector<8x64xf32>
    %109 = arith.mulf %104, %108 : vector<8x64xf32>
    %cst_62 = arith.constant 1.000000e+00 : f32
    %110 = vector.broadcast %cst_62 : f32 to vector<8x64xf32>
    %111 = arith.subf %110, %109 : vector<8x64xf32>
    %cst_63 = arith.constant 0.000000e+00 : f32
    %112 = vector.broadcast %cst_63 : f32 to vector<8x64xf32>
    %113 = arith.cmpf oge, %83, %112 : vector<8x64xf32>
    %cst_64 = arith.constant 0.000000e+00 : f32
    %114 = vector.broadcast %cst_64 : f32 to vector<8x64xf32>
    %115 = arith.subf %114, %111 : vector<8x64xf32>
    %116 = arith.select %113, %111, %115 : vector<8x64xi1>, vector<8x64xf32>
    %cst_65 = arith.constant 1.000000e+00 : f32
    %117 = vector.broadcast %cst_65 : f32 to vector<8x64xf32>
    %118 = arith.addf %117, %116 : vector<8x64xf32>
    %119 = arith.mulf %81, %118 : vector<8x64xf32>
    %120 = arith.truncf %119 : vector<8x64xf32> to vector<8x64xbf16>
    %c0_66 = arith.constant 0 : index
    %c0_67 = arith.constant 0 : index
    %121 = vector.load %arg15[%c0_66, %c0_67] : memref<64x32xbf16, #tpu.memory_space<vmem>>, vector<64x32xbf16>
    %cst_68 = arith.constant dense<0.000000e+00> : vector<8x32xf32>
    %122 = tpu.matmul %120, %121, %cst_68 {dimension_numbers = #tpu.dot_dimension_numbers<[1], [0], [0], [1], [0, 0, 1, 1], [], []>} : vector<8x64xbf16>, vector<64x32xbf16>, vector<8x32xf32> -> vector<8x32xf32>
    %c0_69 = arith.constant 0 : index
    %c0_70 = arith.constant 0 : index
    %123 = vector.load %arg16[%c0_69, %c0_70] : memref<1x32xf32, #tpu.memory_space<vmem>>, vector<1x32xf32>
    %124 = vector.broadcast %123 : vector<1x32xf32> to vector<8x32xf32>
    %125 = arith.addf %122, %124 : vector<8x32xf32>
    %126 = arith.addf %73, %125 : vector<8x32xf32>
    %cst_71 = arith.constant dense<0.000000e+00> : vector<8xf32>
    %127 = vector.multi_reduction <add>, %126, %cst_71 [1] : vector<8x32xf32> to vector<8xf32>
    %128 = vector.shape_cast %127 : vector<8xf32> to vector<8x1xf32>
    %cst_72 = arith.constant 3.200000e+01 : f32
    %129 = vector.broadcast %cst_72 : f32 to vector<8x1xf32>
    %130 = arith.divf %128, %129 : vector<8x1xf32>
    %131 = vector.broadcast %130 : vector<8x1xf32> to vector<8x32xf32>
    %132 = arith.subf %126, %131 : vector<8x32xf32>
    %133 = arith.mulf %132, %132 : vector<8x32xf32>
    %cst_73 = arith.constant dense<0.000000e+00> : vector<8xf32>
    %134 = vector.multi_reduction <add>, %133, %cst_73 [1] : vector<8x32xf32> to vector<8xf32>
    %135 = vector.shape_cast %134 : vector<8xf32> to vector<8x1xf32>
    %cst_74 = arith.constant 3.200000e+01 : f32
    %136 = vector.broadcast %cst_74 : f32 to vector<8x1xf32>
    %137 = arith.divf %135, %136 : vector<8x1xf32>
    %cst_75 = arith.constant 9.99999974E-6 : f32
    %138 = vector.broadcast %cst_75 : f32 to vector<8x1xf32>
    %139 = arith.addf %137, %138 : vector<8x1xf32>
    %140 = math.rsqrt %139 : vector<8x1xf32>
    %141 = vector.broadcast %130 : vector<8x1xf32> to vector<8x32xf32>
    %142 = arith.subf %126, %141 : vector<8x32xf32>
    %143 = vector.broadcast %140 : vector<8x1xf32> to vector<8x32xf32>
    %144 = arith.mulf %142, %143 : vector<8x32xf32>
    %c0_76 = arith.constant 0 : index
    %c0_77 = arith.constant 0 : index
    %145 = vector.load %arg17[%c0_76, %c0_77] : memref<1x32xf32, #tpu.memory_space<vmem>>, vector<1x32xf32>
    %146 = vector.broadcast %145 : vector<1x32xf32> to vector<8x32xf32>
    %147 = arith.mulf %144, %146 : vector<8x32xf32>
    %c0_78 = arith.constant 0 : index
    %c0_79 = arith.constant 0 : index
    %148 = vector.load %arg18[%c0_78, %c0_79] : memref<1x32xf32, #tpu.memory_space<vmem>>, vector<1x32xf32>
    %149 = vector.broadcast %148 : vector<1x32xf32> to vector<8x32xf32>
    %150 = arith.addf %147, %149 : vector<8x32xf32>
    %c0_80 = arith.constant 0 : index
    %c0_81 = arith.constant 0 : index
    %c0_82 = arith.constant 0 : index
    %151 = vector.load %arg19[%c0_80, %c0_81, %c0_82] : memref<1x8x32xf32, #tpu.memory_space<vmem>>, vector<1x8x32xf32>
    %152 = vector.shape_cast %151 : vector<1x8x32xf32> to vector<8x32xf32>
    %153 = vector.shape_cast %150 : vector<8x32xf32> to vector<1x8x32xf32>
    tpu.vector_store %arg19[%c0_80, %c0_81, %c0_82], %153 {strides = array<i32>} : memref<1x8x32xf32, #tpu.memory_space<vmem>>, vector<1x8x32xf32>,
    return
  }
  func.func @transform_0(%arg0: i32) -> (i32, i32, i32) {
    %c0_i32 = arith.constant 0 : i32
    %c0_i32_0 = arith.constant 0 : i32
    %c0_i32_1 = arith.constant 0 : i32
    return %arg0, %c0_i32, %c0_i32_0 : i32, i32, i32
  }
  func.func @transform_1(%arg0: i32) -> (i32, i32, i32) {
    %c0_i32 = arith.constant 0 : i32
    %c0_i32_0 = arith.constant 0 : i32
    %c0_i32_1 = arith.constant 0 : i32
    return %arg0, %c0_i32, %c0_i32_0 : i32, i32, i32
  }
  func.func @transform_2(%arg0: i32) -> (i32, i32, i32) {
    %c0_i32 = arith.constant 0 : i32
    %c0_i32_0 = arith.constant 0 : i32
    %c0_i32_1 = arith.constant 0 : i32
    %c0_i32_2 = arith.constant 0 : i32
    return %c0_i32, %c0_i32_0, %c0_i32_1 : i32, i32, i32
  }
  func.func @transform_3(%arg0: i32) -> (i32, i32, i32) {
    %c0_i32 = arith.constant 0 : i32
    %c0_i32_0 = arith.constant 0 : i32
    %c0_i32_1 = arith.constant 0 : i32
    %c0_i32_2 = arith.constant 0 : i32
    return %c0_i32, %c0_i32_0, %c0_i32_1 : i32, i32, i32
  }
  func.func @transform_4(%arg0: i32) -> (i32, i32, i32) {
    %c0_i32 = arith.constant 0 : i32
    %c0_i32_0 = arith.constant 0 : i32
    %c0_i32_1 = arith.constant 0 : i32
    %c0_i32_2 = arith.constant 0 : i32
    return %c0_i32, %c0_i32_0, %c0_i32_1 : i32, i32, i32
  }
  func.func @transform_5(%arg0: i32) -> (i32, i32, i32) {
    %c0_i32 = arith.constant 0 : i32
    %c0_i32_0 = arith.constant 0 : i32
    %c0_i32_1 = arith.constant 0 : i32
    %c0_i32_2 = arith.constant 0 : i32
    return %c0_i32, %c0_i32_0, %c0_i32_1 : i32, i32, i32
  }
  func.func @transform_6(%arg0: i32) -> (i32, i32, i32) {
    %c0_i32 = arith.constant 0 : i32
    %c0_i32_0 = arith.constant 0 : i32
    %c0_i32_1 = arith.constant 0 : i32
    %c0_i32_2 = arith.constant 0 : i32
    return %c0_i32, %c0_i32_0, %c0_i32_1 : i32, i32, i32
  }
  func.func @transform_7(%arg0: i32) -> (i32, i32, i32) {
    %c0_i32 = arith.constant 0 : i32
    %c0_i32_0 = arith.constant 0 : i32
    %c0_i32_1 = arith.constant 0 : i32
    %c0_i32_2 = arith.constant 0 : i32
    return %c0_i32, %c0_i32_0, %c0_i32_1 : i32, i32, i32
  }
  func.func @transform_8(%arg0: i32) -> (i32, i32, i32) {
    %c0_i32 = arith.constant 0 : i32
    %c0_i32_0 = arith.constant 0 : i32
    %c0_i32_1 = arith.constant 0 : i32
    %c0_i32_2 = arith.constant 0 : i32
    return %c0_i32, %c0_i32_0, %c0_i32_1 : i32, i32, i32
  }
  func.func @transform_9(%arg0: i32) -> (i32, i32) {
    %c0_i32 = arith.constant 0 : i32
    %c0_i32_0 = arith.constant 0 : i32
    %c0_i32_1 = arith.constant 0 : i32
    return %c0_i32, %c0_i32_0 : i32, i32
  }
  func.func @transform_10(%arg0: i32) -> (i32, i32) {
    %c0_i32 = arith.constant 0 : i32
    %c0_i32_0 = arith.constant 0 : i32
    %c0_i32_1 = arith.constant 0 : i32
    return %c0_i32, %c0_i32_0 : i32, i32
  }
  func.func @transform_11(%arg0: i32) -> (i32, i32) {
    %c0_i32 = arith.constant 0 : i32
    %c0_i32_0 = arith.constant 0 : i32
    %c0_i32_1 = arith.constant 0 : i32
    return %c0_i32, %c0_i32_0 : i32, i32
  }
  func.func @transform_12(%arg0: i32) -> (i32, i32) {
    %c0_i32 = arith.constant 0 : i32
    %c0_i32_0 = arith.constant 0 : i32
    %c0_i32_1 = arith.constant 0 : i32
    return %c0_i32, %c0_i32_0 : i32, i32
  }
  func.func @transform_13(%arg0: i32) -> (i32, i32) {
    %c0_i32 = arith.constant 0 : i32
    %c0_i32_0 = arith.constant 0 : i32
    %c0_i32_1 = arith.constant 0 : i32
    return %c0_i32, %c0_i32_0 : i32, i32
  }
  func.func @transform_14(%arg0: i32) -> (i32, i32) {
    %c0_i32 = arith.constant 0 : i32
    %c0_i32_0 = arith.constant 0 : i32
    %c0_i32_1 = arith.constant 0 : i32
    return %c0_i32, %c0_i32_0 : i32, i32
  }
  func.func @transform_15(%arg0: i32) -> (i32, i32) {
    %c0_i32 = arith.constant 0 : i32
    %c0_i32_0 = arith.constant 0 : i32
    %c0_i32_1 = arith.constant 0 : i32
    return %c0_i32, %c0_i32_0 : i32, i32
  }
  func.func @transform_16(%arg0: i32) -> (i32, i32) {
    %c0_i32 = arith.constant 0 : i32
    %c0_i32_0 = arith.constant 0 : i32
    %c0_i32_1 = arith.constant 0 : i32
    return %c0_i32, %c0_i32_0 : i32, i32
  }
  func.func @transform_17(%arg0: i32) -> (i32, i32) {
    %c0_i32 = arith.constant 0 : i32
    %c0_i32_0 = arith.constant 0 : i32
    %c0_i32_1 = arith.constant 0 : i32
    return %c0_i32, %c0_i32_0 : i32, i32
  }
  func.func @transform_18(%arg0: i32) -> (i32, i32, i32) {
    %c0_i32 = arith.constant 0 : i32
    %c0_i32_0 = arith.constant 0 : i32
    %c0_i32_1 = arith.constant 0 : i32
    return %arg0, %c0_i32, %c0_i32_0 : i32, i32, i32
  }
}

module attributes {stable_mosaic.version = 11 : i64} {
  func.func @encoder_layer_kernel(%arg0: i32, %arg1: memref<1x8x32xf32, #tpu.memory_space<vmem>>, %arg2: memref<1x1x8xf32, #tpu.memory_space<vmem>>, %arg3: memref<4x32x8xbf16, #tpu.memory_space<vmem>>, %arg4: memref<4x1x8xf32, #tpu.memory_space<vmem>>, %arg5: memref<4x32x8xbf16, #tpu.memory_space<vmem>>, %arg6: memref<4x1x8xf32, #tpu.memory_space<vmem>>, %arg7: memref<4x32x8xbf16, #tpu.memory_space<vmem>>, %arg8: memref<4x1x8xf32, #tpu.memory_space<vmem>>, %arg9: memref<4x8x32xbf16, #tpu.memory_space<vmem>>, %arg10: memref<1x32xf32, #tpu.memory_space<vmem>>, %arg11: memref<1x32xf32, #tpu.memory_space<vmem>>, %arg12: memref<1x32xf32, #tpu.memory_space<vmem>>, %arg13: memref<32x64xbf16, #tpu.memory_space<vmem>>, %arg14: memref<1x64xf32, #tpu.memory_space<vmem>>, %arg15: memref<64x32xbf16, #tpu.memory_space<vmem>>, %arg16: memref<1x32xf32, #tpu.memory_space<vmem>>, %arg17: memref<1x32xf32, #tpu.memory_space<vmem>>, %arg18: memref<1x32xf32, #tpu.memory_space<vmem>>, %arg19: memref<1x8x32xf32, #tpu.memory_space<vmem>>) attributes {dimension_semantics = [#tpu.dimension_semantics<parallel>], iteration_bounds = array<i64: 2>, scalar_prefetch = 0 : i64, scratch_operands = 0 : i64, tpu.core_type = #tpu.core_type<tc>, window_params = [{transform_indices = @transform_0, window_bounds = array<i64: 1, 8, 32>}, {transform_indices = @transform_1, window_bounds = array<i64: 1, 1, 8>}, {pipeline_mode = #tpu.pipeline_mode<synchronous>, transform_indices = @transform_2, window_bounds = array<i64: 4, 32, 8>}, {pipeline_mode = #tpu.pipeline_mode<synchronous>, transform_indices = @transform_3, window_bounds = array<i64: 4, 1, 8>}, {pipeline_mode = #tpu.pipeline_mode<synchronous>, transform_indices = @transform_4, window_bounds = array<i64: 4, 32, 8>}, {pipeline_mode = #tpu.pipeline_mode<synchronous>, transform_indices = @transform_5, window_bounds = array<i64: 4, 1, 8>}, {pipeline_mode = #tpu.pipeline_mode<synchronous>, transform_indices = @transform_6, window_bounds = array<i64: 4, 32, 8>}, {pipeline_mode = #tpu.pipeline_mode<synchronous>, transform_indices = @transform_7, window_bounds = array<i64: 4, 1, 8>}, {pipeline_mode = #tpu.pipeline_mode<synchronous>, transform_indices = @transform_8, window_bounds = array<i64: 4, 8, 32>}, {pipeline_mode = #tpu.pipeline_mode<synchronous>, transform_indices = @transform_9, window_bounds = array<i64: 1, 32>}, {pipeline_mode = #tpu.pipeline_mode<synchronous>, transform_indices = @transform_10, window_bounds = array<i64: 1, 32>}, {pipeline_mode = #tpu.pipeline_mode<synchronous>, transform_indices = @transform_11, window_bounds = array<i64: 1, 32>}, {pipeline_mode = #tpu.pipeline_mode<synchronous>, transform_indices = @transform_12, window_bounds = array<i64: 32, 64>}, {pipeline_mode = #tpu.pipeline_mode<synchronous>, transform_indices = @transform_13, window_bounds = array<i64: 1, 64>}, {pipeline_mode = #tpu.pipeline_mode<synchronous>, transform_indices = @transform_14, window_bounds = array<i64: 64, 32>}, {pipeline_mode = #tpu.pipeline_mode<synchronous>, transform_indices = @transform_15, window_bounds = array<i64: 1, 32>}, {pipeline_mode = #tpu.pipeline_mode<synchronous>, transform_indices = @transform_16, window_bounds = array<i64: 1, 32>}, {pipeline_mode = #tpu.pipeline_mode<synchronous>, transform_indices = @transform_17, window_bounds = array<i64: 1, 32>}, {transform_indices = @transform_18, window_bounds = array<i64: 1, 8, 32>}]} {
    %c0 = arith.constant 0 : index
    %c0_0 = arith.constant 0 : index
    %c0_1 = arith.constant 0 : index
    %0 = vector.load %arg1[%c0, %c0_0, %c0_1] : memref<1x8x32xf32, #tpu.memory_space<vmem>>, vector<1x8x32xf32>
    %1 = vector.shape_cast %0 : vector<1x8x32xf32> to vector<8x32xf32>
    %c0_2 = arith.constant 0 : index
    %c0_3 = arith.constant 0 : index
    %c0_4 = arith.constant 0 : index
    %2 = vector.load %arg2[%c0_2, %c0_3, %c0_4] : memref<1x1x8xf32, #tpu.memory_space<vmem>>, vector<1x1x8xf32>
    %3 = arith.truncf %1 : vector<8x32xf32> to vector<8x32xbf16>
    %4 = vector.shape_cast %3 : vector<8x32xbf16> to vector<1x8x32xbf16>
    %5 = vector.shape_cast %4 : vector<1x8x32xbf16> to vector<1x8x32xbf16>
    %6 = vector.broadcast %5 : vector<1x8x32xbf16> to vector<4x8x32xbf16>
    %c0_5 = arith.constant 0 : index
    %c0_6 = arith.constant 0 : index
    %c0_7 = arith.constant 0 : index
    %7 = vector.load %arg3[%c0_5, %c0_6, %c0_7] : memref<4x32x8xbf16, #tpu.memory_space<vmem>>, vector<4x32x8xbf16>
    "tpu.trace_start"() <{level = 10 : i32, message = "hsd,hde->hse"}> : () -> ()
    %cst = arith.constant dense<0.000000e+00> : vector<4x8x8xf32>
    %8 = tpu.matmul %6, %7, %cst {dimension_numbers = #tpu.dot_dimension_numbers<[2], [1], [1], [2], [0, 0, 0, 1, 1, 2], [0], [0]>} : vector<4x8x32xbf16>, vector<4x32x8xbf16>, vector<4x8x8xf32> -> vector<4x8x8xf32>
    "tpu.trace_stop"() : () -> ()
    %c0_8 = arith.constant 0 : index
    %c0_9 = arith.constant 0 : index
    %c0_10 = arith.constant 0 : index
    %9 = vector.load %arg4[%c0_8, %c0_9, %c0_10] : memref<4x1x8xf32, #tpu.memory_space<vmem>>, vector<4x1x8xf32>
    %10 = vector.broadcast %9 : vector<4x1x8xf32> to vector<4x8x8xf32>
    %11 = arith.addf %8, %10 : vector<4x8x8xf32>
    %c0_11 = arith.constant 0 : index
    %c0_12 = arith.constant 0 : index
    %c0_13 = arith.constant 0 : index
    %12 = vector.load %arg5[%c0_11, %c0_12, %c0_13] : memref<4x32x8xbf16, #tpu.memory_space<vmem>>, vector<4x32x8xbf16>
    "tpu.trace_start"() <{level = 10 : i32, message = "hsd,hde->hse"}> : () -> ()
    %cst_14 = arith.constant dense<0.000000e+00> : vector<4x8x8xf32>
    %13 = tpu.matmul %6, %12, %cst_14 {dimension_numbers = #tpu.dot_dimension_numbers<[2], [1], [1], [2], [0, 0, 0, 1, 1, 2], [0], [0]>} : vector<4x8x32xbf16>, vector<4x32x8xbf16>, vector<4x8x8xf32> -> vector<4x8x8xf32>
    "tpu.trace_stop"() : () -> ()
    %c0_15 = arith.constant 0 : index
    %c0_16 = arith.constant 0 : index
    %c0_17 = arith.constant 0 : index
    %14 = vector.load %arg6[%c0_15, %c0_16, %c0_17] : memref<4x1x8xf32, #tpu.memory_space<vmem>>, vector<4x1x8xf32>
    %15 = vector.broadcast %14 : vector<4x1x8xf32> to vector<4x8x8xf32>
    %16 = arith.addf %13, %15 : vector<4x8x8xf32>
    %c0_18 = arith.constant 0 : index
    %c0_19 = arith.constant 0 : index
    %c0_20 = arith.constant 0 : index
    %17 = vector.load %arg7[%c0_18, %c0_19, %c0_20] : memref<4x32x8xbf16, #tpu.memory_space<vmem>>, vector<4x32x8xbf16>
    "tpu.trace_start"() <{level = 10 : i32, message = "hsd,hde->hse"}> : () -> ()
    %cst_21 = arith.constant dense<0.000000e+00> : vector<4x8x8xf32>
    %18 = tpu.matmul %6, %17, %cst_21 {dimension_numbers = #tpu.dot_dimension_numbers<[2], [1], [1], [2], [0, 0, 0, 1, 1, 2], [0], [0]>} : vector<4x8x32xbf16>, vector<4x32x8xbf16>, vector<4x8x8xf32> -> vector<4x8x8xf32>
    "tpu.trace_stop"() : () -> ()
    %c0_22 = arith.constant 0 : index
    %c0_23 = arith.constant 0 : index
    %c0_24 = arith.constant 0 : index
    %19 = vector.load %arg8[%c0_22, %c0_23, %c0_24] : memref<4x1x8xf32, #tpu.memory_space<vmem>>, vector<4x1x8xf32>
    %20 = vector.broadcast %19 : vector<4x1x8xf32> to vector<4x8x8xf32>
    %21 = arith.addf %18, %20 : vector<4x8x8xf32>
    %cst_25 = arith.constant 0.353553385 : f32
    %22 = vector.broadcast %cst_25 : f32 to vector<4x8x8xf32>
    %23 = arith.mulf %11, %22 : vector<4x8x8xf32>
    %24 = arith.truncf %23 : vector<4x8x8xf32> to vector<4x8x8xbf16>
    %25 = arith.truncf %16 : vector<4x8x8xf32> to vector<4x8x8xbf16>
    "tpu.trace_start"() <{level = 10 : i32, message = "hqe,hke->hqk"}> : () -> ()
    %cst_26 = arith.constant dense<0.000000e+00> : vector<4x8x8xf32>
    %26 = tpu.matmul %24, %25, %cst_26 {dimension_numbers = #tpu.dot_dimension_numbers<[2], [2], [1], [1], [0, 0, 0, 1, 1, 1], [0], [0]>} : vector<4x8x8xbf16>, vector<4x8x8xbf16>, vector<4x8x8xf32> -> vector<4x8x8xf32>
    "tpu.trace_stop"() : () -> ()
    %27 = vector.broadcast %2 : vector<1x1x8xf32> to vector<4x8x8xf32>
    %28 = arith.addf %26, %27 : vector<4x8x8xf32>
    %cst_27 = arith.constant dense<0xFF800000> : vector<4x8xf32>
    %29 = vector.multi_reduction <maximumf>, %28, %cst_27 [2] : vector<4x8x8xf32> to vector<4x8xf32>
    %30 = vector.shape_cast %29 : vector<4x8xf32> to vector<4x8x1xf32>
    %31 = vector.broadcast %30 : vector<4x8x1xf32> to vector<4x8x8xf32>
    %32 = arith.subf %28, %31 : vector<4x8x8xf32>
    %33 = math.exp %32 : vector<4x8x8xf32>
    %cst_28 = arith.constant dense<0.000000e+00> : vector<4x8xf32>
    %34 = vector.multi_reduction <add>, %33, %cst_28 [2] : vector<4x8x8xf32> to vector<4x8xf32>
    %35 = vector.shape_cast %34 : vector<4x8xf32> to vector<4x8x1xf32>
    %36 = tpu.reciprocal %35 {approx = true} : vector<4x8x1xf32> -> vector<4x8x1xf32>
    %37 = vector.broadcast %36 : vector<4x8x1xf32> to vector<4x8x8xf32>
    %38 = arith.mulf %33, %37 : vector<4x8x8xf32>
    %39 = arith.truncf %38 : vector<4x8x8xf32> to vector<4x8x8xbf16>
    %40 = arith.truncf %21 : vector<4x8x8xf32> to vector<4x8x8xbf16>
    "tpu.trace_start"() <{level = 10 : i32, message = "hqk,hke->hqe"}> : () -> ()
    %cst_29 = arith.constant dense<0.000000e+00> : vector<4x8x8xf32>
    %41 = tpu.matmul %39, %40, %cst_29 {dimension_numbers = #tpu.dot_dimension_numbers<[2], [1], [1], [2], [0, 0, 0, 1, 1, 2], [0], [0]>} : vector<4x8x8xbf16>, vector<4x8x8xbf16>, vector<4x8x8xf32> -> vector<4x8x8xf32>
    "tpu.trace_stop"() : () -> ()
    %42 = arith.truncf %41 : vector<4x8x8xf32> to vector<4x8x8xbf16>
    %c0_30 = arith.constant 0 : index
    %c0_31 = arith.constant 0 : index
    %c0_32 = arith.constant 0 : index
    %43 = vector.load %arg9[%c0_30, %c0_31, %c0_32] : memref<4x8x32xbf16, #tpu.memory_space<vmem>>, vector<4x8x32xbf16>
    "tpu.trace_start"() <{level = 10 : i32, message = "hqe,heo->hqo"}> : () -> ()
    %cst_33 = arith.constant dense<0.000000e+00> : vector<4x8x32xf32>
    %44 = tpu.matmul %42, %43, %cst_33 {dimension_numbers = #tpu.dot_dimension_numbers<[2], [1], [1], [2], [0, 0, 0, 1, 1, 2], [0], [0]>} : vector<4x8x8xbf16>, vector<4x8x32xbf16>, vector<4x8x32xf32> -> vector<4x8x32xf32>
    "tpu.trace_stop"() : () -> ()
    %cst_34 = arith.constant dense<0.000000e+00> : vector<8x32xf32>
    %45 = vector.multi_reduction <add>, %44, %cst_34 [0] : vector<4x8x32xf32> to vector<8x32xf32>
    %c0_35 = arith.constant 0 : index
    %c0_36 = arith.constant 0 : index
    %46 = vector.load %arg10[%c0_35, %c0_36] : memref<1x32xf32, #tpu.memory_space<vmem>>, vector<1x32xf32>
    %47 = vector.broadcast %46 : vector<1x32xf32> to vector<8x32xf32>
    %48 = arith.addf %45, %47 : vector<8x32xf32>
    %49 = arith.addf %1, %48 : vector<8x32xf32>
    %cst_37 = arith.constant dense<0.000000e+00> : vector<8xf32>
    %50 = vector.multi_reduction <add>, %49, %cst_37 [1] : vector<8x32xf32> to vector<8xf32>
    %51 = vector.shape_cast %50 : vector<8xf32> to vector<8x1xf32>
    %cst_38 = arith.constant 3.200000e+01 : f32
    %52 = vector.broadcast %cst_38 : f32 to vector<8x1xf32>
    %53 = arith.divf %51, %52 : vector<8x1xf32>
    %54 = vector.broadcast %53 : vector<8x1xf32> to vector<8x32xf32>
    %55 = arith.subf %49, %54 : vector<8x32xf32>
    %56 = arith.mulf %55, %55 : vector<8x32xf32>
    %cst_39 = arith.constant dense<0.000000e+00> : vector<8xf32>
    %57 = vector.multi_reduction <add>, %56, %cst_39 [1] : vector<8x32xf32> to vector<8xf32>
    %58 = vector.shape_cast %57 : vector<8xf32> to vector<8x1xf32>
    %cst_40 = arith.constant 3.200000e+01 : f32
    %59 = vector.broadcast %cst_40 : f32 to vector<8x1xf32>
    %60 = arith.divf %58, %59 : vector<8x1xf32>
    %cst_41 = arith.constant 9.99999974E-6 : f32
    %61 = vector.broadcast %cst_41 : f32 to vector<8x1xf32>
    %62 = arith.addf %60, %61 : vector<8x1xf32>
    %63 = math.rsqrt %62 : vector<8x1xf32>
    %64 = vector.broadcast %53 : vector<8x1xf32> to vector<8x32xf32>
    %65 = arith.subf %49, %64 : vector<8x32xf32>
    %66 = vector.broadcast %63 : vector<8x1xf32> to vector<8x32xf32>
    %67 = arith.mulf %65, %66 : vector<8x32xf32>
    %c0_42 = arith.constant 0 : index
    %c0_43 = arith.constant 0 : index
    %68 = vector.load %arg11[%c0_42, %c0_43] : memref<1x32xf32, #tpu.memory_space<vmem>>, vector<1x32xf32>
    %69 = vector.broadcast %68 : vector<1x32xf32> to vector<8x32xf32>
    %70 = arith.mulf %67, %69 : vector<8x32xf32>
    %c0_44 = arith.constant 0 : index
    %c0_45 = arith.constant 0 : index
    %71 = vector.load %arg12[%c0_44, %c0_45] : memref<1x32xf32, #tpu.memory_space<vmem>>, vector<1x32xf32>
    %72 = vector.broadcast %71 : vector<1x32xf32> to vector<8x32xf32>
    %73 = arith.addf %70, %72 : vector<8x32xf32>
    %74 = arith.truncf %73 : vector<8x32xf32> to vector<8x32xbf16>
    %c0_46 = arith.constant 0 : index
    %c0_47 = arith.constant 0 : index
    %75 = vector.load %arg13[%c0_46, %c0_47] : memref<32x64xbf16, #tpu.memory_space<vmem>>, vector<32x64xbf16>
    %cst_48 = arith.constant dense<0.000000e+00> : vector<8x64xf32>
    %76 = tpu.matmul %74, %75, %cst_48 {dimension_numbers = #tpu.dot_dimension_numbers<[1], [0], [0], [1], [0, 0, 1, 1], [], []>} : vector<8x32xbf16>, vector<32x64xbf16>, vector<8x64xf32> -> vector<8x64xf32>
    %c0_49 = arith.constant 0 : index
    %c0_50 = arith.constant 0 : index
    %77 = vector.load %arg14[%c0_49, %c0_50] : memref<1x64xf32, #tpu.memory_space<vmem>>, vector<1x64xf32>
    %78 = vector.broadcast %77 : vector<1x64xf32> to vector<8x64xf32>
    %79 = arith.addf %76, %78 : vector<8x64xf32>
    %cst_51 = arith.constant 5.000000e-01 : f32
    %80 = vector.broadcast %cst_51 : f32 to vector<8x64xf32>
    %81 = arith.mulf %80, %79 : vector<8x64xf32>
    %cst_52 = arith.constant 0.707106769 : f32
    %82 = vector.broadcast %cst_52 : f32 to vector<8x64xf32>
    %83 = arith.mulf %79, %82 : vector<8x64xf32>
    %84 = math.absf %83 : vector<8x64xf32>
    %cst_53 = arith.constant 0.327591091 : f32
    %85 = vector.broadcast %cst_53 : f32 to vector<8x64xf32>
    %86 = arith.mulf %85, %84 : vector<8x64xf32>
    %cst_54 = arith.constant 1.000000e+00 : f32
    %87 = vector.broadcast %cst_54 : f32 to vector<8x64xf32>
    %88 = arith.addf %87, %86 : vector<8x64xf32>
    %cst_55 = arith.constant 1.000000e+00 : f32
    %89 = vector.broadcast %cst_55 : f32 to vector<8x64xf32>
    %90 = arith.divf %89, %88 : vector<8x64xf32>
    %cst_56 = arith.constant 1.06140542 : f32
    %91 = vector.broadcast %cst_56 : f32 to vector<8x64xf32>
    %92 = arith.mulf %91, %90 : vector<8x64xf32>
    %cst_57 = arith.constant -1.45315206 : f32
    %93 = vector.broadcast %cst_57 : f32 to vector<8x64xf32>
    %94 = arith.addf %92, %93 : vector<8x64xf32>
    %95 = arith.mulf %94, %90 : vector<8x64xf32>
    %cst_58 = arith.constant 1.42141378 : f32
    %96 = vector.broadcast %cst_58 : f32 to vector<8x64xf32>
    %97 = arith.addf %95, %96 : vector<8x64xf32>
    %98 = arith.mulf %97, %90 : vector<8x64xf32>
    %cst_59 = arith.constant -0.284496725 : f32
    %99 = vector.broadcast %cst_59 : f32 to vector<8x64xf32>
    %100 = arith.addf %98, %99 : vector<8x64xf32>
    %101 = arith.mulf %100, %90 : vector<8x64xf32>
    %cst_60 = arith.constant 0.254829586 : f32
    %102 = vector.broadcast %cst_60 : f32 to vector<8x64xf32>
    %103 = arith.addf %101, %102 : vector<8x64xf32>
    %104 = arith.mulf %103, %90 : vector<8x64xf32>
    %cst_61 = arith.constant 0.000000e+00 : f32
    %105 = vector.broadcast %cst_61 : f32 to vector<8x64xf32>
    %106 = arith.subf %105, %84 : vector<8x64xf32>
    %107 = arith.mulf %106, %84 : vector<8x64xf32>
    %108 = math.exp %107 : vector<8x64xf32>
    %109 = arith.mulf %104, %108 : vector<8x64xf32>
    %cst_62 = arith.constant 1.000000e+00 : f32
    %110 = vector.broadcast %cst_62 : f32 to vector<8x64xf32>
    %111 = arith.subf %110, %109 : vector<8x64xf32>
    %cst_63 = arith.constant 0.000000e+00 : f32
    %112 = vector.broadcast %cst_63 : f32 to vector<8x64xf32>
    %113 = arith.cmpf oge, %83, %112 : vector<8x64xf32>
    %cst_64 = arith.constant 0.000000e+00 : f32
    %114 = vector.broadcast %cst_64 : f32 to vector<8x64xf32>
    %115 = arith.subf %114, %111 : vector<8x64xf32>
    %116 = arith.select %113, %111, %115 : vector<8x64xi1>, vector<8x64xf32>
    %cst_65 = arith.constant 1.000000e+00 : f32
    %117 = vector.broadcast %cst_65 : f32 to vector<8x64xf32>
    %118 = arith.addf %117, %116 : vector<8x64xf32>
    %119 = arith.mulf %81, %118 : vector<8x64xf32>
    %120 = arith.truncf %119 : vector<8x64xf32> to vector<8x64xbf16>
    %c0_66 = arith.constant 0 : index
    %c0_67 = arith.constant 0 : index
    %121 = vector.load %arg15[%c0_66, %c0_67] : memref<64x32xbf16, #tpu.memory_space<vmem>>, vector<64x32xbf16>
    %cst_68 = arith.constant dense<0.000000e+00> : vector<8x32xf32>
    %122 = tpu.matmul %120, %121, %cst_68 {dimension_numbers = #tpu.dot_dimension_numbers<[1], [0], [0], [1], [0, 0, 1, 1], [], []>} : vector<8x64xbf16>, vector<64x32xbf16>, vector<8x32xf32> -> vector<8x32xf32>
    %c0_69 = arith.constant 0 : index
    %c0_70 = arith.constant 0 : index
    %123 = vector.load %arg16[%c0_69, %c0_70] : memref<1x32xf32, #tpu.memory_space<vmem>>, vector<1x32xf32>
    %124 = vector.broadcast %123 : vector<1x32xf32> to vector<8x32xf32>
    %125 = arith.addf %122, %124 : vector<8x32xf32>
    %126 = arith.addf %73, %125 : vector<8x32xf32>
    %cst_71 = arith.constant dense<0.000000e+00> : vector<8xf32>
    %127 = vector.multi_reduction <add>, %126, %cst_71 [1] : vector<8x32xf32> to vector<8xf32>
    %128 = vector.shape_cast %127 : vector<8xf32> to vector<8x1xf32>
    %cst_72 = arith.constant 3.200000e+01 : f32
    %129 = vector.broadcast %cst_72 : f32 to vector<8x1xf32>
    %130 = arith.divf %128, %129 : vector<8x1xf32>
    %131 = vector.broadcast %130 : vector<8x1xf32> to vector<8x32xf32>
    %132 = arith.subf %126, %131 : vector<8x32xf32>
    %133 = arith.mulf %132, %132 : vector<8x32xf32>
    %cst_73 = arith.constant dense<0.000000e+00> : vector<8xf32>
    %134 = vector.multi_reduction <add>, %133, %cst_73 [1] : vector<8x32xf32> to vector<8xf32>
    %135 = vector.shape_cast %134 : vector<8xf32> to vector<8x1xf32>
    %cst_74 = arith.constant 3.200000e+01 : f32
    %136 = vector.broadcast %cst_74 : f32 to vector<8x1xf32>
    %137 = arith.divf %135, %136 : vector<8x1xf32>
    %cst_75 = arith.constant 9.99999974E-6 : f32
    %138 = vector.broadcast %cst_75 : f32 to vector<8x1xf32>
    %139 = arith.addf %137, %138 : vector<8x1xf32>
    %140 = math.rsqrt %139 : vector<8x1xf32>
    %141 = vector.broadcast %130 : vector<8x1xf32> to vector<8x32xf32>
    %142 = arith.subf %126, %141 : vector<8x32xf32>
    %143 = vector.broadcast %140 : vector<8x1xf32> to vector<8x32xf32>
    %144 = arith.mulf %142, %143 : vector<8x32xf32>
    %c0_76 = arith.constant 0 : index
    %c0_77 = arith.constant 0 : index
    %145 = vector.load %arg17[%c0_76, %c0_77] : memref<1x32xf32, #tpu.memory_space<vmem>>, vector<1x32xf32>
    %146 = vector.broadcast %145 : vector<1x32xf32> to vector<8x32xf32>
    %147 = arith.mulf %144, %146 : vector<8x32xf32>
    %c0_78 = arith.constant 0 : index
    %c0_79 = arith.constant 0 : index
    %148 = vector.load %arg18[%c0_78, %c0_79] : memref<1x32xf32, #tpu.memory_space<vmem>>, vector<1x32xf32>
    %149 = vector.broadcast %148 : vector<1x32xf32> to vector<8x32xf32>
    %150 = arith.addf %147, %149 : vector<8x32xf32>
    %c0_80 = arith.constant 0 : index
    %c0_81 = arith.constant 0 : index
    %c0_82 = arith.constant 0 : index
    %151 = vector.load %arg19[%c0_80, %c0_81, %c0_82] : memref<1x8x32xf32, #tpu.memory_space<vmem>>, vector<1x8x32xf32>
    %152 = vector.shape_cast %151 : vector<1x8x32xf32> to vector<8x32xf32>
    %153 = vector.shape_cast %150 : vector<8x32xf32> to vector<1x8x32xf32>
    tpu.vector_store %arg19[%c0_80, %c0_81, %c0_82], %153 {strides = array<i32>} : memref<1x8x32xf32, #tpu.memory_space<vmem>>, vector<1x8x32xf32>,
    return
  }
  func.func @transform_0(%arg0: i32) -> (i32, i32, i32) {
    %c0_i32 = arith.constant 0 : i32
    %c0_i32_0 = arith.constant 0 : i32
    %c0_i32_1 = arith.constant 0 : i32
    return %arg0, %c0_i32, %c0_i32_0 : i32, i32, i32
  }
  func.func @transform_1(%arg0: i32) -> (i32, i32, i32) {
    %c0_i32 = arith.constant 0 : i32
    %c0_i32_0 = arith.constant 0 : i32
    %c0_i32_1 = arith.constant 0 : i32
    return %arg0, %c0_i32, %c0_i32_0 : i32, i32, i32
  }
  func.func @transform_2(%arg0: i32) -> (i32, i32, i32) {
    %c0_i32 = arith.constant 0 : i32
    %c0_i32_0 = arith.constant 0 : i32
    %c0_i32_1 = arith.constant 0 : i32
    %c0_i32_2 = arith.constant 0 : i32
    return %c0_i32, %c0_i32_0, %c0_i32_1 : i32, i32, i32
  }
  func.func @transform_3(%arg0: i32) -> (i32, i32, i32) {
    %c0_i32 = arith.constant 0 : i32
    %c0_i32_0 = arith.constant 0 : i32
    %c0_i32_1 = arith.constant 0 : i32
    %c0_i32_2 = arith.constant 0 : i32
    return %c0_i32, %c0_i32_0, %c0_i32_1 : i32, i32, i32
  }
  func.func @transform_4(%arg0: i32) -> (i32, i32, i32) {
    %c0_i32 = arith.constant 0 : i32
    %c0_i32_0 = arith.constant 0 : i32
    %c0_i32_1 = arith.constant 0 : i32
    %c0_i32_2 = arith.constant 0 : i32
    return %c0_i32, %c0_i32_0, %c0_i32_1 : i32, i32, i32
  }
  func.func @transform_5(%arg0: i32) -> (i32, i32, i32) {
    %c0_i32 = arith.constant 0 : i32
    %c0_i32_0 = arith.constant 0 : i32
    %c0_i32_1 = arith.constant 0 : i32
    %c0_i32_2 = arith.constant 0 : i32
    return %c0_i32, %c0_i32_0, %c0_i32_1 : i32, i32, i32
  }
  func.func @transform_6(%arg0: i32) -> (i32, i32, i32) {
    %c0_i32 = arith.constant 0 : i32
    %c0_i32_0 = arith.constant 0 : i32
    %c0_i32_1 = arith.constant 0 : i32
    %c0_i32_2 = arith.constant 0 : i32
    return %c0_i32, %c0_i32_0, %c0_i32_1 : i32, i32, i32
  }
  func.func @transform_7(%arg0: i32) -> (i32, i32, i32) {
    %c0_i32 = arith.constant 0 : i32
    %c0_i32_0 = arith.constant 0 : i32
    %c0_i32_1 = arith.constant 0 : i32
    %c0_i32_2 = arith.constant 0 : i32
    return %c0_i32, %c0_i32_0, %c0_i32_1 : i32, i32, i32
  }
  func.func @transform_8(%arg0: i32) -> (i32, i32, i32) {
    %c0_i32 = arith.constant 0 : i32
    %c0_i32_0 = arith.constant 0 : i32
    %c0_i32_1 = arith.constant 0 : i32
    %c0_i32_2 = arith.constant 0 : i32
    return %c0_i32, %c0_i32_0, %c0_i32_1 : i32, i32, i32
  }
  func.func @transform_9(%arg0: i32) -> (i32, i32) {
    %c0_i32 = arith.constant 0 : i32
    %c0_i32_0 = arith.constant 0 : i32
    %c0_i32_1 = arith.constant 0 : i32
    return %c0_i32, %c0_i32_0 : i32, i32
  }
  func.func @transform_10(%arg0: i32) -> (i32, i32) {
    %c0_i32 = arith.constant 0 : i32
    %c0_i32_0 = arith.constant 0 : i32
    %c0_i32_1 = arith.constant 0 : i32
    return %c0_i32, %c0_i32_0 : i32, i32
  }
  func.func @transform_11(%arg0: i32) -> (i32, i32) {
    %c0_i32 = arith.constant 0 : i32
    %c0_i32_0 = arith.constant 0 : i32
    %c0_i32_1 = arith.constant 0 : i32
    return %c0_i32, %c0_i32_0 : i32, i32
  }
  func.func @transform_12(%arg0: i32) -> (i32, i32) {
    %c0_i32 = arith.constant 0 : i32
    %c0_i32_0 = arith.constant 0 : i32
    %c0_i32_1 = arith.constant 0 : i32
    return %c0_i32, %c0_i32_0 : i32, i32
  }
  func.func @transform_13(%arg0: i32) -> (i32, i32) {
    %c0_i32 = arith.constant 0 : i32
    %c0_i32_0 = arith.constant 0 : i32
    %c0_i32_1 = arith.constant 0 : i32
    return %c0_i32, %c0_i32_0 : i32, i32
  }
  func.func @transform_14(%arg0: i32) -> (i32, i32) {
    %c0_i32 = arith.constant 0 : i32
    %c0_i32_0 = arith.constant 0 : i32
    %c0_i32_1 = arith.constant 0 : i32
    return %c0_i32, %c0_i32_0 : i32, i32
  }
  func.func @transform_15(%arg0: i32) -> (i32, i32) {
    %c0_i32 = arith.constant 0 : i32
    %c0_i32_0 = arith.constant 0 : i32
    %c0_i32_1 = arith.constant 0 : i32
    return %c0_i32, %c0_i32_0 : i32, i32
  }
  func.func @transform_16(%arg0: i32) -> (i32, i32) {
    %c0_i32 = arith.constant 0 : i32
    %c0_i32_0 = arith.constant 0 : i32
    %c0_i32_1 = arith.constant 0 : i32
    return %c0_i32, %c0_i32_0 : i32, i32
  }
  func.func @transform_17(%arg0: i32) -> (i32, i32) {
    %c0_i32 = arith.constant 0 : i32
    %c0_i32_0 = arith.constant 0 : i32
    %c0_i32_1 = arith.constant 0 : i32
    return %c0_i32, %c0_i32_0 : i32, i32
  }
  func.func @transform_18(%arg0: i32) -> (i32, i32, i32) {
    %c0_i32 = arith.constant 0 : i32
    %c0_i32_0 = arith.constant 0 : i32
    %c0_i32_1 = arith.constant 0 : i32
    return %arg0, %c0_i32, %c0_i32_0 : i32, i32, i32
  }
}

</mosaic_0001>

<llo_original>
// kernel: _lambda_.2
$region0: #{_lambda_.2}
  #allocation0 [shape = 'u32[]', space=smem, size = 0x4, offset = 0x4, fixed_abs, tag = 'smem constant byte address 0x4 - core index']
  #allocation1 [shape = 'u32[144,128]{1,0:T(1,128)}', space=vmem, size = 0x12000, scoped, tag = 'internal scratch']
  %s0 = inlined_call_operand.vmem [shape: f32[2,8,32], index: 0, kind: input, shape index: {}, may-alias: {0,18}]
  %s1 = inlined_call_operand.vmem [shape: f32[2,1,8], index: 1, kind: input, shape index: {}]
  %s2 = inlined_call_operand.vmem [shape: bf16[4,32,8], index: 2, kind: input, shape index: {}]
  %s3 = inlined_call_operand.vmem [shape: f32[4,1,8], index: 3, kind: input, shape index: {}]
  %s4 = inlined_call_operand.vmem [shape: bf16[4,32,8], index: 4, kind: input, shape index: {}]
  %s5 = inlined_call_operand.vmem [shape: f32[4,1,8], index: 5, kind: input, shape index: {}]
  %s6 = inlined_call_operand.vmem [shape: bf16[4,32,8], index: 6, kind: input, shape index: {}]
  %s7 = inlined_call_operand.vmem [shape: f32[4,1,8], index: 7, kind: input, shape index: {}]
  %s8 = inlined_call_operand.vmem [shape: bf16[4,8,32], index: 8, kind: input, shape index: {}]
  %s9 = inlined_call_operand.vmem [shape: f32[1,32], index: 9, kind: input, shape index: {}]
  %s10 = inlined_call_operand.vmem [shape: f32[1,32], index: 10, kind: input, shape index: {}]
  %s11 = inlined_call_operand.vmem [shape: f32[1,32], index: 11, kind: input, shape index: {}]
  %s12 = inlined_call_operand.vmem [shape: bf16[32,64], index: 12, kind: input, shape index: {}]
  %s13 = inlined_call_operand.vmem [shape: f32[1,64], index: 13, kind: input, shape index: {}]
  %s14 = inlined_call_operand.vmem [shape: bf16[64,32], index: 14, kind: input, shape index: {}]
  %s15 = inlined_call_operand.vmem [shape: f32[1,32], index: 15, kind: input, shape index: {}]
  %s16 = inlined_call_operand.vmem [shape: f32[1,32], index: 16, kind: input, shape index: {}]
  %s17 = inlined_call_operand.vmem [shape: f32[1,32], index: 17, kind: input, shape index: {}]
  %s18 = inlined_call_operand.vmem [shape: f32[2,8,32], index: 18, kind: output, shape index: {}, may-alias: {0,18}]
  %s19 = sld [smem:[#allocation0]]
  $region105: #{_lambda_.2} parent=0
    _
  %s21 = ssub.s32 1, %s19
  %s22 = scalar_select 0, %s21, %s19
  loop: start=0, step=1, limit=4
  $region2: #{_lambda_.2} parent=0 // loop_pre_header
    _
  $region3: #{_lambda_.2} parent=0 // loop_header
    %s24 = sphi 0, %s28
    %p25 = scmp.ge.s32.totalorder %s24, 4
    %s34 = sphi 0, %s36
    %s37 = sphi 0, %s34
    %s38 = sphi 0, %s37
    %s54 = sphi 0, %s38
    %s60 = sphi 0, %s62
    %s63 = sphi 0, %s60
    %s64 = sphi 0, %s63
    %s80 = sphi 0, %s64
    %s84 = sphi 0, %s84
    %s86 = sphi 0, %s84
    %s87 = sphi 0, %s86
    %s101 = sphi 0, %s87
    %s105 = sphi 0, %s105
    %s107 = sphi 0, %s105
    %s108 = sphi 0, %s107
    %s122 = sphi 0, %s108
    %s126 = sphi 0, %s126
    %s128 = sphi 0, %s126
    %s129 = sphi 0, %s128
    %s143 = sphi 0, %s129
    %s147 = sphi 0, %s147
    %s149 = sphi 0, %s147
    %s150 = sphi 0, %s149
    %s164 = sphi 0, %s150
    %s168 = sphi 0, %s168
    %s170 = sphi 0, %s168
    %s171 = sphi 0, %s170
    %s185 = sphi 0, %s171
    %s189 = sphi 0, %s189
    %s191 = sphi 0, %s189
    %s192 = sphi 0, %s191
    %s206 = sphi 0, %s192
    %s210 = sphi 0, %s210
    %s212 = sphi 0, %s210
    %s213 = sphi 0, %s212
    %s227 = sphi 0, %s213
    %s231 = sphi 0, %s231
    %s233 = sphi 0, %s231
    %s234 = sphi 0, %s233
    %s248 = sphi 0, %s234
    %s252 = sphi 0, %s252
    %s254 = sphi 0, %s252
    %s255 = sphi 0, %s254
    %s269 = sphi 0, %s255
    %s273 = sphi 0, %s273
    %s275 = sphi 0, %s273
    %s276 = sphi 0, %s275
    %s290 = sphi 0, %s276
    %s294 = sphi 0, %s294
    %s296 = sphi 0, %s294
    %s297 = sphi 0, %s296
    %s311 = sphi 0, %s297
    %s315 = sphi 0, %s315
    %s317 = sphi 0, %s315
    %s318 = sphi 0, %s317
    %s332 = sphi 0, %s318
    %s336 = sphi 0, %s336
    %s338 = sphi 0, %s336
    %s339 = sphi 0, %s338
    %s353 = sphi 0, %s339
    %s357 = sphi 0, %s357
    %s359 = sphi 0, %s357
    %s360 = sphi 0, %s359
    %s374 = sphi 0, %s360
    %s378 = sphi 0, %s378
    %s380 = sphi 0, %s378
    %s381 = sphi 0, %s380
    %s395 = sphi 0, %s381
    %s399 = sphi 0, %s399
    %s401 = sphi 0, %s399
    %s402 = sphi 0, %s401
    %s416 = sphi 0, %s402
    %s422 = sphi 0, %s424
    %s425 = sphi 0, %s422
    %s426 = sphi 0, %s425
    %s442 = sphi 0, %s426
  $region4: #{_lambda_.2} parent=0 // loop_header_branch
    %27 = sbr.rel (%p25) target = $region8
  $region5: #{_lambda_.2} parent=0 // loop_body
    %s29 = ssub.s32 %s24, 1
    %s30 = ssub.s32 %s24, 2
    %s31 = sadd.s32 %s24, 1
    %s32 = ssub.s32 %s24, %s31
    %p33 = scmp.eq.s32.totalorder %s32, 0
    %s35 = sadd.s32 %s34, 1
    %s36 = scalar_select %p33, %s34, %s35
    %p39 = pneg %p33
    %p40 = scmp.eq.s32.totalorder %s24, 1
    %p41 = por %p39, %p40
    %p42 = scmp.ne.s32.totalorder %s34, %s37
    %p43 = scmp.eq.s32.totalorder %s24, 0
    %p44 = por %p42, %p43
    %p45 = scmp.ne.s32.totalorder %s34, %s37
    %p46 = scmp.eq.s32.totalorder %s29, 1
    %p47 = por %p45, %p46
    %p48 = scmp.ne.s32.totalorder %s37, %s38
    %p49 = scmp.eq.s32.totalorder %s29, 0
    %p50 = por %p48, %p49
    %p51 = scmp.ne.s32.totalorder %s37, %s38
    %p52 = scmp.eq.s32.totalorder %s30, 1
    %p53 = por %p51, %p52
    %p55 = scmp.ne.s32.totalorder %s38, %s54
    %p56 = scmp.eq.s32.totalorder %s30, 0
    %p57 = por %p55, %p56
    %s58 = ssub.s32 %s24, %s31
    %p59 = scmp.eq.s32.totalorder %s58, 0
    %s61 = sadd.s32 %s60, 1
    %s62 = scalar_select %p59, %s60, %s61
    %p65 = pneg %p59
    %p66 = scmp.eq.s32.totalorder %s24, 1
    %p67 = por %p65, %p66
    %p68 = scmp.ne.s32.totalorder %s60, %s63
    %p69 = scmp.eq.s32.totalorder %s24, 0
    %p70 = por %p68, %p69
    %p71 = scmp.ne.s32.totalorder %s60, %s63
    %p72 = scmp.eq.s32.totalorder %s29, 1
    %p73 = por %p71, %p72
    %p74 = scmp.ne.s32.totalorder %s63, %s64
    %p75 = scmp.eq.s32.totalorder %s29, 0
    %p76 = por %p74, %p75
    %p77 = scmp.ne.s32.totalorder %s63, %s64
    %p78 = scmp.eq.s32.totalorder %s30, 1
    %p79 = por %p77, %p78
    %p81 = scmp.ne.s32.totalorder %s64, %s80
    %p82 = scmp.eq.s32.totalorder %s30, 0
    %p83 = por %p81, %p82
    %s85 = sadd.s32 %s84, 1
    %p88 = scmp.eq.s32.totalorder %s24, 1
    %p89 = scmp.ne.s32.totalorder %s84, %s86
    %p90 = scmp.eq.s32.totalorder %s24, 0
    %p91 = por %p89, %p90
    %p92 = scmp.ne.s32.totalorder %s84, %s86
    %p93 = scmp.eq.s32.totalorder %s29, 1
    %p94 = por %p92, %p93
    %p95 = scmp.ne.s32.totalorder %s86, %s87
    %p96 = scmp.eq.s32.totalorder %s29, 0
    %p97 = por %p95, %p96
    %p98 = scmp.ne.s32.totalorder %s86, %s87
    %p99 = scmp.eq.s32.totalorder %s30, 1
    %p100 = por %p98, %p99
    %p102 = scmp.ne.s32.totalorder %s87, %s101
    %p103 = scmp.eq.s32.totalorder %s30, 0
    %p104 = por %p102, %p103
    %s106 = sadd.s32 %s105, 1
    %p109 = scmp.eq.s32.totalorder %s24, 1
    %p110 = scmp.ne.s32.totalorder %s105, %s107
    %p111 = scmp.eq.s32.totalorder %s24, 0
    %p112 = por %p110, %p111
    %p113 = scmp.ne.s32.totalorder %s105, %s107
    %p114 = scmp.eq.s32.totalorder %s29, 1
    %p115 = por %p113, %p114
    %p116 = scmp.ne.s32.totalorder %s107, %s108
    %p117 = scmp.eq.s32.totalorder %s29, 0
    %p118 = por %p116, %p117
    %p119 = scmp.ne.s32.totalorder %s107, %s108
    %p120 = scmp.eq.s32.totalorder %s30, 1
    %p121 = por %p119, %p120
    %p123 = scmp.ne.s32.totalorder %s108, %s122
    %p124 = scmp.eq.s32.totalorder %s30, 0
    %p125 = por %p123, %p124
    %s127 = sadd.s32 %s126, 1
    %p130 = scmp.eq.s32.totalorder %s24, 1
    %p131 = scmp.ne.s32.totalorder %s126, %s128
    %p132 = scmp.eq.s32.totalorder %s24, 0
    %p133 = por %p131, %p132
    %p134 = scmp.ne.s32.totalorder %s126, %s128
    %p135 = scmp.eq.s32.totalorder %s29, 1
    %p136 = por %p134, %p135
    %p137 = scmp.ne.s32.totalorder %s128, %s129
    %p138 = scmp.eq.s32.totalorder %s29, 0
    %p139 = por %p137, %p138
    %p140 = scmp.ne.s32.totalorder %s128, %s129
    %p141 = scmp.eq.s32.totalorder %s30, 1
    %p142 = por %p140, %p141
    %p144 = scmp.ne.s32.totalorder %s129, %s143
    %p145 = scmp.eq.s32.totalorder %s30, 0
    %p146 = por %p144, %p145
    %s148 = sadd.s32 %s147, 1
    %p151 = scmp.eq.s32.totalorder %s24, 1
    %p152 = scmp.ne.s32.totalorder %s147, %s149
    %p153 = scmp.eq.s32.totalorder %s24, 0
    %p154 = por %p152, %p153
    %p155 = scmp.ne.s32.totalorder %s147, %s149
    %p156 = scmp.eq.s32.totalorder %s29, 1
    %p157 = por %p155, %p156
    %p158 = scmp.ne.s32.totalorder %s149, %s150
    %p159 = scmp.eq.s32.totalorder %s29, 0
    %p160 = por %p158, %p159
    %p161 = scmp.ne.s32.totalorder %s149, %s150
    %p162 = scmp.eq.s32.totalorder %s30, 1
    %p163 = por %p161, %p162
    %p165 = scmp.ne.s32.totalorder %s150, %s164
    %p166 = scmp.eq.s32.totalorder %s30, 0
    %p167 = por %p165, %p166
    %s169 = sadd.s32 %s168, 1
    %p172 = scmp.eq.s32.totalorder %s24, 1
    %p173 = scmp.ne.s32.totalorder %s168, %s170
    %p174 = scmp.eq.s32.totalorder %s24, 0
    %p175 = por %p173, %p174
    %p176 = scmp.ne.s32.totalorder %s168, %s170
    %p177 = scmp.eq.s32.totalorder %s29, 1
    %p178 = por %p176, %p177
    %p179 = scmp.ne.s32.totalorder %s170, %s171
    %p180 = scmp.eq.s32.totalorder %s29, 0
    %p181 = por %p179, %p180
    %p182 = scmp.ne.s32.totalorder %s170, %s171
    %p183 = scmp.eq.s32.totalorder %s30, 1
    %p184 = por %p182, %p183
    %p186 = scmp.ne.s32.totalorder %s171, %s185
    %p187 = scmp.eq.s32.totalorder %s30, 0
    %p188 = por %p186, %p187
    %s190 = sadd.s32 %s189, 1
    %p193 = scmp.eq.s32.totalorder %s24, 1
    %p194 = scmp.ne.s32.totalorder %s189, %s191
    %p195 = scmp.eq.s32.totalorder %s24, 0
    %p196 = por %p194, %p195
    %p197 = scmp.ne.s32.totalorder %s189, %s191
    %p198 = scmp.eq.s32.totalorder %s29, 1
    %p199 = por %p197, %p198
    %p200 = scmp.ne.s32.totalorder %s191, %s192
    %p201 = scmp.eq.s32.totalorder %s29, 0
    %p202 = por %p200, %p201
    %p203 = scmp.ne.s32.totalorder %s191, %s192
    %p204 = scmp.eq.s32.totalorder %s30, 1
    %p205 = por %p203, %p204
    %p207 = scmp.ne.s32.totalorder %s192, %s206
    %p208 = scmp.eq.s32.totalorder %s30, 0
    %p209 = por %p207, %p208
    %s211 = sadd.s32 %s210, 1
    %p214 = scmp.eq.s32.totalorder %s24, 1
    %p215 = scmp.ne.s32.totalorder %s210, %s212
    %p216 = scmp.eq.s32.totalorder %s24, 0
    %p217 = por %p215, %p216
    %p218 = scmp.ne.s32.totalorder %s210, %s212
    %p219 = scmp.eq.s32.totalorder %s29, 1
    %p220 = por %p218, %p219
    %p221 = scmp.ne.s32.totalorder %s212, %s213
    %p222 = scmp.eq.s32.totalorder %s29, 0
    %p223 = por %p221, %p222
    %p224 = scmp.ne.s32.totalorder %s212, %s213
    %p225 = scmp.eq.s32.totalorder %s30, 1
    %p226 = por %p224, %p225
    %p228 = scmp.ne.s32.totalorder %s213, %s227
    %p229 = scmp.eq.s32.totalorder %s30, 0
    %p230 = por %p228, %p229
    %s232 = sadd.s32 %s231, 1
    %p235 = scmp.eq.s32.totalorder %s24, 1
    %p236 = scmp.ne.s32.totalorder %s231, %s233
    %p237 = scmp.eq.s32.totalorder %s24, 0
    %p238 = por %p236, %p237
    %p239 = scmp.ne.s32.totalorder %s231, %s233
    %p240 = scmp.eq.s32.totalorder %s29, 1
    %p241 = por %p239, %p240
    %p242 = scmp.ne.s32.totalorder %s233, %s234
    %p243 = scmp.eq.s32.totalorder %s29, 0
    %p244 = por %p242, %p243
    %p245 = scmp.ne.s32.totalorder %s233, %s234
    %p246 = scmp.eq.s32.totalorder %s30, 1
    %p247 = por %p245, %p246
    %p249 = scmp.ne.s32.totalorder %s234, %s248
    %p250 = scmp.eq.s32.totalorder %s30, 0
    %p251 = por %p249, %p250
    %s253 = sadd.s32 %s252, 1
    %p256 = scmp.eq.s32.totalorder %s24, 1
    %p257 = scmp.ne.s32.totalorder %s252, %s254
    %p258 = scmp.eq.s32.totalorder %s24, 0
    %p259 = por %p257, %p258
    %p260 = scmp.ne.s32.totalorder %s252, %s254
    %p261 = scmp.eq.s32.totalorder %s29, 1
    %p262 = por %p260, %p261
    %p263 = scmp.ne.s32.totalorder %s254, %s255
    %p264 = scmp.eq.s32.totalorder %s29, 0
    %p265 = por %p263, %p264
    %p266 = scmp.ne.s32.totalorder %s254, %s255
    %p267 = scmp.eq.s32.totalorder %s30, 1
    %p268 = por %p266, %p267
    %p270 = scmp.ne.s32.totalorder %s255, %s269
    %p271 = scmp.eq.s32.totalorder %s30, 0
    %p272 = por %p270, %p271
    %s274 = sadd.s32 %s273, 1
    %p277 = scmp.eq.s32.totalorder %s24, 1
    %p278 = scmp.ne.s32.totalorder %s273, %s275
    %p279 = scmp.eq.s32.totalorder %s24, 0
    %p280 = por %p278, %p279
    %p281 = scmp.ne.s32.totalorder %s273, %s275
    %p282 = scmp.eq.s32.totalorder %s29, 1
    %p283 = por %p281, %p282
    %p284 = scmp.ne.s32.totalorder %s275, %s276
    %p285 = scmp.eq.s32.totalorder %s29, 0
    %p286 = por %p284, %p285
    %p287 = scmp.ne.s32.totalorder %s275, %s276
    %p288 = scmp.eq.s32.totalorder %s30, 1
    %p289 = por %p287, %p288
    %p291 = scmp.ne.s32.totalorder %s276, %s290
    %p292 = scmp.eq.s32.totalorder %s30, 0
    %p293 = por %p291, %p292
    %s295 = sadd.s32 %s294, 1
    %p298 = scmp.eq.s32.totalorder %s24, 1
    %p299 = scmp.ne.s32.totalorder %s294, %s296
    %p300 = scmp.eq.s32.totalorder %s24, 0
    %p301 = por %p299, %p300
    %p302 = scmp.ne.s32.totalorder %s294, %s296
    %p303 = scmp.eq.s32.totalorder %s29, 1
    %p304 = por %p302, %p303
    %p305 = scmp.ne.s32.totalorder %s296, %s297
    %p306 = scmp.eq.s32.totalorder %s29, 0
    %p307 = por %p305, %p306
    %p308 = scmp.ne.s32.totalorder %s296, %s297
    %p309 = scmp.eq.s32.totalorder %s30, 1
    %p310 = por %p308, %p309
    %p312 = scmp.ne.s32.totalorder %s297, %s311
    %p313 = scmp.eq.s32.totalorder %s30, 0
    %p314 = por %p312, %p313
    %s316 = sadd.s32 %s315, 1
    %p319 = scmp.eq.s32.totalorder %s24, 1
    %p320 = scmp.ne.s32.totalorder %s315, %s317
    %p321 = scmp.eq.s32.totalorder %s24, 0
    %p322 = por %p320, %p321
    %p323 = scmp.ne.s32.totalorder %s315, %s317
    %p324 = scmp.eq.s32.totalorder %s29, 1
    %p325 = por %p323, %p324
    %p326 = scmp.ne.s32.totalorder %s317, %s318
    %p327 = scmp.eq.s32.totalorder %s29, 0
    %p328 = por %p326, %p327
    %p329 = scmp.ne.s32.totalorder %s317, %s318
    %p330 = scmp.eq.s32.totalorder %s30, 1
    %p331 = por %p329, %p330
    %p333 = scmp.ne.s32.totalorder %s318, %s332
    %p334 = scmp.eq.s32.totalorder %s30, 0
    %p335 = por %p333, %p334
    %s337 = sadd.s32 %s336, 1
    %p340 = scmp.eq.s32.totalorder %s24, 1
    %p341 = scmp.ne.s32.totalorder %s336, %s338
    %p342 = scmp.eq.s32.totalorder %s24, 0
    %p343 = por %p341, %p342
    %p344 = scmp.ne.s32.totalorder %s336, %s338
    %p345 = scmp.eq.s32.totalorder %s29, 1
    %p346 = por %p344, %p345
    %p347 = scmp.ne.s32.totalorder %s338, %s339
    %p348 = scmp.eq.s32.totalorder %s29, 0
    %p349 = por %p347, %p348
    %p350 = scmp.ne.s32.totalorder %s338, %s339
    %p351 = scmp.eq.s32.totalorder %s30, 1
    %p352 = por %p350, %p351
    %p354 = scmp.ne.s32.totalorder %s339, %s353
    %p355 = scmp.eq.s32.totalorder %s30, 0
    %p356 = por %p354, %p355
    %s358 = sadd.s32 %s357, 1
    %p361 = scmp.eq.s32.totalorder %s24, 1
    %p362 = scmp.ne.s32.totalorder %s357, %s359
    %p363 = scmp.eq.s32.totalorder %s24, 0
    %p364 = por %p362, %p363
    %p365 = scmp.ne.s32.totalorder %s357, %s359
    %p366 = scmp.eq.s32.totalorder %s29, 1
    %p367 = por %p365, %p366
    %p368 = scmp.ne.s32.totalorder %s359, %s360
    %p369 = scmp.eq.s32.totalorder %s29, 0
    %p370 = por %p368, %p369
    %p371 = scmp.ne.s32.totalorder %s359, %s360
    %p372 = scmp.eq.s32.totalorder %s30, 1
    %p373 = por %p371, %p372
    %p375 = scmp.ne.s32.totalorder %s360, %s374
    %p376 = scmp.eq.s32.totalorder %s30, 0
    %p377 = por %p375, %p376
    %s379 = sadd.s32 %s378, 1
    %p382 = scmp.eq.s32.totalorder %s24, 1
    %p383 = scmp.ne.s32.totalorder %s378, %s380
    %p384 = scmp.eq.s32.totalorder %s24, 0
    %p385 = por %p383, %p384
    %p386 = scmp.ne.s32.totalorder %s378, %s380
    %p387 = scmp.eq.s32.totalorder %s29, 1
    %p388 = por %p386, %p387
    %p389 = scmp.ne.s32.totalorder %s380, %s381
    %p390 = scmp.eq.s32.totalorder %s29, 0
    %p391 = por %p389, %p390
    %p392 = scmp.ne.s32.totalorder %s380, %s381
    %p393 = scmp.eq.s32.totalorder %s30, 1
    %p394 = por %p392, %p393
    %p396 = scmp.ne.s32.totalorder %s381, %s395
    %p397 = scmp.eq.s32.totalorder %s30, 0
    %p398 = por %p396, %p397
    %s400 = sadd.s32 %s399, 1
    %p403 = scmp.eq.s32.totalorder %s24, 1
    %p404 = scmp.ne.s32.totalorder %s399, %s401
    %p405 = scmp.eq.s32.totalorder %s24, 0
    %p406 = por %p404, %p405
    %p407 = scmp.ne.s32.totalorder %s399, %s401
    %p408 = scmp.eq.s32.totalorder %s29, 1
    %p409 = por %p407, %p408
    %p410 = scmp.ne.s32.totalorder %s401, %s402
    %p411 = scmp.eq.s32.totalorder %s29, 0
    %p412 = por %p410, %p411
    %p413 = scmp.ne.s32.totalorder %s401, %s402
    %p414 = scmp.eq.s32.totalorder %s30, 1
    %p415 = por %p413, %p414
    %p417 = scmp.ne.s32.totalorder %s402, %s416
    %p418 = scmp.eq.s32.totalorder %s30, 0
    %p419 = por %p417, %p418
    %s420 = ssub.s32 %s24, %s31
    %p421 = scmp.eq.s32.totalorder %s420, 0
    %s423 = sadd.s32 %s422, 1
    %s424 = scalar_select %p421, %s422, %s423
    %p427 = pneg %p421
    %p428 = scmp.eq.s32.totalorder %s24, 1
    %p429 = por %p427, %p428
    %p430 = scmp.ne.s32.totalorder %s422, %s425
    %p431 = scmp.eq.s32.totalorder %s24, 0
    %p432 = por %p430, %p431
    %p433 = scmp.ne.s32.totalorder %s422, %s425
    %p434 = scmp.eq.s32.totalorder %s29, 1
    %p435 = por %p433, %p434
    %p436 = scmp.ne.s32.totalorder %s425, %s426
    %p437 = scmp.eq.s32.totalorder %s29, 0
    %p438 = por %p436, %p437
    %p439 = scmp.ne.s32.totalorder %s425, %s426
    %p440 = scmp.eq.s32.totalorder %s30, 1
    %p441 = por %p439, %p440
    %p443 = scmp.ne.s32.totalorder %s426, %s442
    %p444 = scmp.eq.s32.totalorder %s30, 0
    %p445 = por %p443, %p444
    %p446 = scmp.le.s32.totalorder 1, %s24
    %p447 = scmp.lt.s32.totalorder %s24, 3
    %p448 = pnand %p446, %p447
    %p449 = pneg %p448
    // Predicated region
    $region9: #{_lambda_.2} parent=5 // pred_check
      _
    $region10: #{_lambda_.2} parent=5 // pred_check_branch
      %451 = sbr.rel (%p448) target = $region12
    $region11: #{_lambda_.2} parent=5 // pred_region
      %s452 = ssub.s32 %s24, 1
      // Predicated region
      $region13: #{_lambda_.2} parent=11 // pred_check
        %p453 = pneg %p97
      $region14: #{_lambda_.2} parent=11 // pred_check_branch
        %455 = sbr.rel (%p453) target = $region16
      $region15: #{_lambda_.2} parent=11 // pred_region
        _
      $region16: #{_lambda_.2} parent=11 // pred_fallthru
        _
      // Predicated region
      $region17: #{_lambda_.2} parent=11 // pred_check
        %p456 = pneg %p118
      $region18: #{_lambda_.2} parent=11 // pred_check_branch
        %458 = sbr.rel (%p456) target = $region20
      $region19: #{_lambda_.2} parent=11 // pred_region
        _
      $region20: #{_lambda_.2} parent=11 // pred_fallthru
        _
      // Predicated region
      $region21: #{_lambda_.2} parent=11 // pred_check
        %p459 = pneg %p139
      $region22: #{_lambda_.2} parent=11 // pred_check_branch
        %461 = sbr.rel (%p459) target = $region24
      $region23: #{_lambda_.2} parent=11 // pred_region
        _
      $region24: #{_lambda_.2} parent=11 // pred_fallthru
        _
      // Predicated region
      $region25: #{_lambda_.2} parent=11 // pred_check
        %p462 = pneg %p160
      $region26: #{_lambda_.2} parent=11 // pred_check_branch
        %464 = sbr.rel (%p462) target = $region28
      $region27: #{_lambda_.2} parent=11 // pred_region
        _
      $region28: #{_lambda_.2} parent=11 // pred_fallthru
        _
      // Predicated region
      $region29: #{_lambda_.2} parent=11 // pred_check
        %p465 = pneg %p181
      $region30: #{_lambda_.2} parent=11 // pred_check_branch
        %467 = sbr.rel (%p465) target = $region32
      $region31: #{_lambda_.2} parent=11 // pred_region
        _
      $region32: #{_lambda_.2} parent=11 // pred_fallthru
        _
      // Predicated region
      $region33: #{_lambda_.2} parent=11 // pred_check
        %p468 = pneg %p202
      $region34: #{_lambda_.2} parent=11 // pred_check_branch
        %470 = sbr.rel (%p468) target = $region36
      $region35: #{_lambda_.2} parent=11 // pred_region
        _
      $region36: #{_lambda_.2} parent=11 // pred_fallthru
        _
      // Predicated region
      $region37: #{_lambda_.2} parent=11 // pred_check
        %p471 = pneg %p223
      $region38: #{_lambda_.2} parent=11 // pred_check_branch
        %473 = sbr.rel (%p471) target = $region40
      $region39: #{_lambda_.2} parent=11 // pred_region
        _
      $region40: #{_lambda_.2} parent=11 // pred_fallthru
        _
      // Predicated region
      $region41: #{_lambda_.2} parent=11 // pred_check
        %p474 = pneg %p244
      $region42: #{_lambda_.2} parent=11 // pred_check_branch
        %476 = sbr.rel (%p474) target = $region44
      $region43: #{_lambda_.2} parent=11 // pred_region
        _
      $region44: #{_lambda_.2} parent=11 // pred_fallthru
        _
      // Predicated region
      $region45: #{_lambda_.2} parent=11 // pred_check
        %p477 = pneg %p265
      $region46: #{_lambda_.2} parent=11 // pred_check_branch
        %479 = sbr.rel (%p477) target = $region48
      $region47: #{_lambda_.2} parent=11 // pred_region
        _
      $region48: #{_lambda_.2} parent=11 // pred_fallthru
        _
      // Predicated region
      $region49: #{_lambda_.2} parent=11 // pred_check
        %p480 = pneg %p286
      $region50: #{_lambda_.2} parent=11 // pred_check_branch
        %482 = sbr.rel (%p480) target = $region52
      $region51: #{_lambda_.2} parent=11 // pred_region
        _
      $region52: #{_lambda_.2} parent=11 // pred_fallthru
        _
      // Predicated region
      $region53: #{_lambda_.2} parent=11 // pred_check
        %p483 = pneg %p307
      $region54: #{_lambda_.2} parent=11 // pred_check_branch
        %485 = sbr.rel (%p483) target = $region56
      $region55: #{_lambda_.2} parent=11 // pred_region
        _
      $region56: #{_lambda_.2} parent=11 // pred_fallthru
        _
      // Predicated region
      $region57: #{_lambda_.2} parent=11 // pred_check
        %p486 = pneg %p328
      $region58: #{_lambda_.2} parent=11 // pred_check_branch
        %488 = sbr.rel (%p486) target = $region60
      $region59: #{_lambda_.2} parent=11 // pred_region
        _
      $region60: #{_lambda_.2} parent=11 // pred_fallthru
        _
      // Predicated region
      $region61: #{_lambda_.2} parent=11 // pred_check
        %p489 = pneg %p349
      $region62: #{_lambda_.2} parent=11 // pred_check_branch
        %491 = sbr.rel (%p489) target = $region64
      $region63: #{_lambda_.2} parent=11 // pred_region
        _
      $region64: #{_lambda_.2} parent=11 // pred_fallthru
        _
      // Predicated region
      $region65: #{_lambda_.2} parent=11 // pred_check
        %p492 = pneg %p370
      $region66: #{_lambda_.2} parent=11 // pred_check_branch
        %494 = sbr.rel (%p492) target = $region68
      $region67: #{_lambda_.2} parent=11 // pred_region
        _
      $region68: #{_lambda_.2} parent=11 // pred_fallthru
        _
      // Predicated region
      $region69: #{_lambda_.2} parent=11 // pred_check
        %p495 = pneg %p391
      $region70: #{_lambda_.2} parent=11 // pred_check_branch
        %497 = sbr.rel (%p495) target = $region72
      $region71: #{_lambda_.2} parent=11 // pred_region
        _
      $region72: #{_lambda_.2} parent=11 // pred_fallthru
        _
      // Predicated region
      $region73: #{_lambda_.2} parent=11 // pred_check
        %p498 = pneg %p412
      $region74: #{_lambda_.2} parent=11 // pred_check_branch
        %500 = sbr.rel (%p498) target = $region76
      $region75: #{_lambda_.2} parent=11 // pred_region
        _
      $region76: #{_lambda_.2} parent=11 // pred_fallthru
        _
    $region12: #{_lambda_.2} parent=5 // pred_fallthru
      _
    %p501 = scmp.lt.s32.totalorder %s24, 2
    // Predicated region
    $region77: #{_lambda_.2} parent=5 // pred_check
      %p502 = pneg %p501
    $region78: #{_lambda_.2} parent=5 // pred_check_branch
      %504 = sbr.rel (%p502) target = $region80
    $region79: #{_lambda_.2} parent=5 // pred_region
      // Predicated region
      $region81: #{_lambda_.2} parent=79 // pred_check
        %p505 = pneg %p44
      $region82: #{_lambda_.2} parent=79 // pred_check_branch
        %507 = sbr.rel (%p505) target = $region84
      $region83: #{_lambda_.2} parent=79 // pred_region
        %p508 = scmp.lt.s32.totalorder %s24, 1
        %s509 = scalar_select %p508, %s24, 1
        %s510 = smul.addr %s509, 8
        %s511 = scalar_lea.vmem %s0, %s510
      $region84: #{_lambda_.2} parent=79 // pred_fallthru
        _
      // Predicated region
      $region85: #{_lambda_.2} parent=79 // pred_check
        %p512 = pneg %p70
      $region86: #{_lambda_.2} parent=79 // pred_check_branch
        %514 = sbr.rel (%p512) target = $region88
      $region87: #{_lambda_.2} parent=79 // pred_region
        %p515 = scmp.lt.s32.totalorder %s24, 1
        %s516 = scalar_select %p515, %s24, 1
        %s517 = scalar_lea.vmem %s1, %s516
      $region88: #{_lambda_.2} parent=79 // pred_fallthru
        _
    $region80: #{_lambda_.2} parent=5 // pred_fallthru
      _
    %p518 = scmp.le.s32.totalorder 1, %s24
    %p519 = scmp.lt.s32.totalorder %s24, 3
    %p520 = pnand %p518, %p519
    %p521 = pneg %p520
    // Predicated region
    $region89: #{_lambda_.2} parent=5 // pred_check
      _
    $region90: #{_lambda_.2} parent=5 // pred_check_branch
      %523 = sbr.rel (%p520) target = $region92
    $region91: #{_lambda_.2} parent=5 // pred_region
      %s524 = ssub.s32 %s24, 1
      %p525 = scmp.lt.s32.totalorder %s29, 1
      %s526 = scalar_select %p525, %s29, 1
      %s527 = smul.addr %s526, 8
      %s528 = scalar_lea.vmem %s0, %s527
      %p529 = pneg %p50
      %p530 = pneg %p47
      %p531 = scmp.lt.s32.totalorder %s29, 1
      %s532 = scalar_select %p531, %s29, 1
      %s533 = scalar_lea.vmem %s1, %s532
      %p534 = pneg %p76
      %p535 = pneg %p73
      %p536 = pneg %p97
      %p537 = pneg %p94
      %p538 = pneg %p118
      %p539 = pneg %p115
      %p540 = pneg %p139
      %p541 = pneg %p136
      %p542 = pneg %p160
      %p543 = pneg %p157
      %p544 = pneg %p181
      %p545 = pneg %p178
      %p546 = pneg %p202
      %p547 = pneg %p199
      %p548 = pneg %p223
      %p549 = pneg %p220
      %p550 = pneg %p244
      %p551 = pneg %p241
      %p552 = pneg %p265
      %p553 = pneg %p262
      %p554 = pneg %p286
      %p555 = pneg %p283
      %p556 = pneg %p307
      %p557 = pneg %p304
      %p558 = pneg %p328
      %p559 = pneg %p325
      %p560 = pneg %p349
      %p561 = pneg %p346
      %p562 = pneg %p370
      %p563 = pneg %p367
      %p564 = pneg %p391
      %p565 = pneg %p388
      %p566 = pneg %p412
      %p567 = pneg %p409
      %p568 = pneg %p438
      %p569 = pneg %p435
      %p570 = scmp.lt.s32.totalorder %s29, 1
      %s571 = scalar_select %p570, %s29, 1
      %s572 = smul.addr %s571, 8
      %s573 = scalar_lea.vmem %s18, %s572
      %p574 = scmp.lt.s32.totalorder %s29, 1
      %s575 = scalar_select %p574, %s29, 1
      %s576 = smul.addr %s575, 8
      %s577 = scalar_lea.vmem %s0, %s576
      %p578 = scmp.lt.s32.totalorder %s29, 1
      %s579 = scalar_select %p578, %s29, 1
      %s580 = scalar_lea.vmem %s1, %s579
      %p581 = scmp.lt.s32.totalorder %s29, 1
      %s582 = scalar_select %p581, %s29, 1
      %s583 = smul.addr %s582, 8
      %s584 = scalar_lea.vmem %s18, %s583
      %v586 = vld [vmem:[%s577] sm:$0xff]
      %v587 = vld [vmem:[%s580] sm:$0x1]
      %v588 = vpack.c.bf16 %v586, %v586
      %v589 = vld [vmem:[%s2] sm:$0xf]
      %v590 = vld [vmem:[%s2 + $0x4] sm:$0xf]
      %v591 = vld [vmem:[%s2 + $0x8] sm:$0xf]
      %v592 = vld [vmem:[%s2 + $0xc] sm:$0xf]
      %v593 = vld [vmem:[%s2 + $0x10] sm:$0xf]
      %v594 = vld [vmem:[%s2 + $0x14] sm:$0xf]
      %v595 = vld [vmem:[%s2 + $0x18] sm:$0xf]
      %v596 = vld [vmem:[%s2 + $0x1c] sm:$0xf]
      %v597 = vld [vmem:[%s2 + $0x20] sm:$0xf]
      %v598 = vld [vmem:[%s2 + $0x24] sm:$0xf]
      %v599 = vld [vmem:[%s2 + $0x28] sm:$0xf]
      %v600 = vld [vmem:[%s2 + $0x2c] sm:$0xf]
      %v601 = vld [vmem:[%s2 + $0x30] sm:$0xf]
      %v602 = vld [vmem:[%s2 + $0x34] sm:$0xf]
      %v603 = vld [vmem:[%s2 + $0x38] sm:$0xf]
      %v604 = vld [vmem:[%s2 + $0x3c] sm:$0xf]
      %v605 = vld [vmem:[%s3] sm:$0x1]
      %v606 = vld [vmem:[%s3 + $0x1] sm:$0x1]
      %v607 = vld [vmem:[%s3 + $0x2] sm:$0x1]
      %v608 = vld [vmem:[%s3 + $0x3] sm:$0x1]
      %v613 = vlaneseq
      %v614 = vshrl.u32 %v613, 7
      %v615 = vsub.s32 0, %v614
      %v616 = vrot.slane %v605, %v615
      %v617 = vlaneseq
      %v618 = vshrl.u32 %v617, 7
      %v619 = vsub.s32 0, %v618
      %v620 = vrot.slane %v606, %v619
      %v621 = vlaneseq
      %v622 = vshrl.u32 %v621, 7
      %v623 = vsub.s32 0, %v622
      %v624 = vrot.slane %v607, %v623
      %v625 = vlaneseq
      %v626 = vshrl.u32 %v625, 7
      %v627 = vsub.s32 0, %v626
      %v628 = vrot.slane %v608, %v627
      %v637 = vunpack.c.l.b16 %v589
      %v638 = vunpack.c.l.b16 %v590
      %v639 = vunpack.c.l.b16 %v591
      %v640 = vunpack.c.l.b16 %v592
      %v641 = vpack.c.b16 %v638, %v637
      %v642 = vpack.c.b16 %v640, %v639
      %vm645 = vcmask 261120
      %v647 = vsel %vm645, %v588, 0
      %649 = vmatprep.subr.bf16.mxu0 0
      %650 = vmatpush1.bf16.msra.mxu0 %v641
      %651 = vmatprep.subr.bf16.mxu0 0
      %652 = vmatpush1.bf16.msra.mxu0 %v642
      %653 = vmatprep.subr.bf16.mxu0 0
      %654 = vmatpush1.bf16.msra.mxu0 0
      %655 = vmatprep.subr.bf16.mxu0 0
      %656 = vmatpush1.bf16.msra.mxu0 0
      %657 = vmatprep.subr.bf16.mxu0 0
      %658 = vmatpush1.bf16.msra.mxu0 0
      %659 = vmatprep.subr.bf16.mxu0 0
      %660 = vmatpush1.bf16.msra.mxu0 0
      %661 = vmatprep.subr.bf16.mxu0 0
      %662 = vmatpush1.bf16.msra.mxu0 0
      %663 = vmatprep.subr.bf16.mxu0 0
      %664 = vmatpush1.bf16.msra.mxu0 0
      %665 = vmatprep.subr.bf16.mxu0 0
      %666 = vmatpush1.bf16.msra.mxu0 0
      %667 = vmatprep.subr.bf16.mxu0 0
      %668 = vmatpush1.bf16.msra.mxu0 0
      %669 = vmatprep.subr.bf16.mxu0 0
      %670 = vmatpush1.bf16.msra.mxu0 0
      %671 = vmatprep.subr.bf16.mxu0 0
      %672 = vmatpush1.bf16.msra.mxu0 0
      %673 = vmatprep.subr.bf16.mxu0 0
      %674 = vmatpush1.bf16.msra.mxu0 0
      %675 = vmatprep.subr.bf16.mxu0 0
      %676 = vmatpush1.bf16.msra.mxu0 0
      %677 = vmatprep.subr.bf16.mxu0 0
      %678 = vmatpush1.bf16.msra.mxu0 0
      %679 = vmatprep.subr.bf16.mxu0 0
      %680 = vmatpush1.bf16.msra.mxu0 0
      %681 = vmatprep.mubr.bf16.mxu0 0
      %682 = vmatmul.mubr.bf16.gmra.mrb[0].mxu0 %v647
      %v683 = vpop.f32.mrb[0].mxu0
      %v684 = vadd.f32 %v616, %v683
      %v685 = vpop.f32.mrb[0].mxu0
      %v686 = vpop.f32.mrb[0].mxu0
      %v687 = vpop.f32.mrb[0].mxu0
      %688 = vdwg.mxu0
      %v693 = vunpack.c.l.b16 %v593
      %v694 = vunpack.c.l.b16 %v594
      %v695 = vunpack.c.l.b16 %v595
      %v696 = vunpack.c.l.b16 %v596
      %v697 = vpack.c.b16 %v694, %v693
      %v698 = vpack.c.b16 %v696, %v695
      %701 = vmatprep.subr.bf16.mxu0 0
      %702 = vmatpush1.bf16.msra.mxu0 %v697
      %703 = vmatprep.subr.bf16.mxu0 0
      %704 = vmatpush1.bf16.msra.mxu0 %v698
      %705 = vmatprep.subr.bf16.mxu0 0
      %706 = vmatpush1.bf16.msra.mxu0 0
      %707 = vmatprep.subr.bf16.mxu0 0
      %708 = vmatpush1.bf16.msra.mxu0 0
      %709 = vmatprep.subr.bf16.mxu0 0
      %710 = vmatpush1.bf16.msra.mxu0 0
      %711 = vmatprep.subr.bf16.mxu0 0
      %712 = vmatpush1.bf16.msra.mxu0 0
      %713 = vmatprep.subr.bf16.mxu0 0
      %714 = vmatpush1.bf16.msra.mxu0 0
      %715 = vmatprep.subr.bf16.mxu0 0
      %716 = vmatpush1.bf16.msra.mxu0 0
      %717 = vmatprep.subr.bf16.mxu0 0
      %718 = vmatpush1.bf16.msra.mxu0 0
      %719 = vmatprep.subr.bf16.mxu0 0
      %720 = vmatpush1.bf16.msra.mxu0 0
      %721 = vmatprep.subr.bf16.mxu0 0
      %722 = vmatpush1.bf16.msra.mxu0 0
      %723 = vmatprep.subr.bf16.mxu0 0
      %724 = vmatpush1.bf16.msra.mxu0 0
      %725 = vmatprep.subr.bf16.mxu0 0
      %726 = vmatpush1.bf16.msra.mxu0 0
      %727 = vmatprep.subr.bf16.mxu0 0
      %728 = vmatpush1.bf16.msra.mxu0 0
      %729 = vmatprep.subr.bf16.mxu0 0
      %730 = vmatpush1.bf16.msra.mxu0 0
      %731 = vmatprep.subr.bf16.mxu0 0
      %732 = vmatpush1.bf16.msra.mxu0 0
      %733 = vmatprep.mubr.bf16.mxu0 0
      %734 = vmatmul.mubr.bf16.gmra.mrb[0].mxu0 %v647
      %v735 = vpop.f32.mrb[0].mxu0
      %v736 = vadd.f32 %v620, %v735
      %v737 = vpop.f32.mrb[0].mxu0
      %v738 = vpop.f32.mrb[0].mxu0
      %v739 = vpop.f32.mrb[0].mxu0
      %740 = vdwg.mxu0
      %v745 = vunpack.c.l.b16 %v597
      %v746 = vunpack.c.l.b16 %v598
      %v747 = vunpack.c.l.b16 %v599
      %v748 = vunpack.c.l.b16 %v600
      %v749 = vpack.c.b16 %v746, %v745
      %v750 = vpack.c.b16 %v748, %v747
      %753 = vmatprep.subr.bf16.mxu0 0
      %754 = vmatpush1.bf16.msra.mxu0 %v749
      %755 = vmatprep.subr.bf16.mxu0 0
      %756 = vmatpush1.bf16.msra.mxu0 %v750
      %757 = vmatprep.subr.bf16.mxu0 0
      %758 = vmatpush1.bf16.msra.mxu0 0
      %759 = vmatprep.subr.bf16.mxu0 0
      %760 = vmatpush1.bf16.msra.mxu0 0
      %761 = vmatprep.subr.bf16.mxu0 0
      %762 = vmatpush1.bf16.msra.mxu0 0
      %763 = vmatprep.subr.bf16.mxu0 0
      %764 = vmatpush1.bf16.msra.mxu0 0
      %765 = vmatprep.subr.bf16.mxu0 0
      %766 = vmatpush1.bf16.msra.mxu0 0
      %767 = vmatprep.subr.bf16.mxu0 0
      %768 = vmatpush1.bf16.msra.mxu0 0
      %769 = vmatprep.subr.bf16.mxu0 0
      %770 = vmatpush1.bf16.msra.mxu0 0
      %771 = vmatprep.subr.bf16.mxu0 0
      %772 = vmatpush1.bf16.msra.mxu0 0
      %773 = vmatprep.subr.bf16.mxu0 0
      %774 = vmatpush1.bf16.msra.mxu0 0
      %775 = vmatprep.subr.bf16.mxu0 0
      %776 = vmatpush1.bf16.msra.mxu0 0
      %777 = vmatprep.subr.bf16.mxu0 0
      %778 = vmatpush1.bf16.msra.mxu0 0
      %779 = vmatprep.subr.bf16.mxu0 0
      %780 = vmatpush1.bf16.msra.mxu0 0
      %781 = vmatprep.subr.bf16.mxu0 0
      %782 = vmatpush1.bf16.msra.mxu0 0
      %783 = vmatprep.subr.bf16.mxu0 0
      %784 = vmatpush1.bf16.msra.mxu0 0
      %785 = vmatprep.mubr.bf16.mxu0 0
      %786 = vmatmul.mubr.bf16.gmra.mrb[0].mxu0 %v647
      %v787 = vpop.f32.mrb[0].mxu0
      %v788 = vadd.f32 %v624, %v787
      %v789 = vpop.f32.mrb[0].mxu0
      %v790 = vpop.f32.mrb[0].mxu0
      %v791 = vpop.f32.mrb[0].mxu0
      %792 = vdwg.mxu0
      %v797 = vunpack.c.l.b16 %v601
      %v798 = vunpack.c.l.b16 %v602
      %v799 = vunpack.c.l.b16 %v603
      %v800 = vunpack.c.l.b16 %v604
      %v801 = vpack.c.b16 %v798, %v797
      %v802 = vpack.c.b16 %v800, %v799
      %805 = vmatprep.subr.bf16.mxu0 0
      %806 = vmatpush1.bf16.msra.mxu0 %v801
      %807 = vmatprep.subr.bf16.mxu0 0
      %808 = vmatpush1.bf16.msra.mxu0 %v802
      %809 = vmatprep.subr.bf16.mxu0 0
      %810 = vmatpush1.bf16.msra.mxu0 0
      %811 = vmatprep.subr.bf16.mxu0 0
      %812 = vmatpush1.bf16.msra.mxu0 0
      %813 = vmatprep.subr.bf16.mxu0 0
      %814 = vmatpush1.bf16.msra.mxu0 0
      %815 = vmatprep.subr.bf16.mxu0 0
      %816 = vmatpush1.bf16.msra.mxu0 0
      %817 = vmatprep.subr.bf16.mxu0 0
      %818 = vmatpush1.bf16.msra.mxu0 0
      %819 = vmatprep.subr.bf16.mxu0 0
      %820 = vmatpush1.bf16.msra.mxu0 0
      %821 = vmatprep.subr.bf16.mxu0 0
      %822 = vmatpush1.bf16.msra.mxu0 0
      %823 = vmatprep.subr.bf16.mxu0 0
      %824 = vmatpush1.bf16.msra.mxu0 0
      %825 = vmatprep.subr.bf16.mxu0 0
      %826 = vmatpush1.bf16.msra.mxu0 0
      %827 = vmatprep.subr.bf16.mxu0 0
      %828 = vmatpush1.bf16.msra.mxu0 0
      %829 = vmatprep.subr.bf16.mxu0 0
      %830 = vmatpush1.bf16.msra.mxu0 0
      %831 = vmatprep.subr.bf16.mxu0 0
      %832 = vmatpush1.bf16.msra.mxu0 0
      %833 = vmatprep.subr.bf16.mxu0 0
      %834 = vmatpush1.bf16.msra.mxu0 0
      %835 = vmatprep.subr.bf16.mxu0 0
      %836 = vmatpush1.bf16.msra.mxu0 0
      %837 = vmatprep.mubr.bf16.mxu0 0
      %838 = vmatmul.mubr.bf16.gmra.mrb[0].mxu0 %v647
      %v839 = vpop.f32.mrb[0].mxu0
      %v840 = vadd.f32 %v628, %v839
      %v841 = vpop.f32.mrb[0].mxu0
      %v842 = vpop.f32.mrb[0].mxu0
      %v843 = vpop.f32.mrb[0].mxu0
      %844 = vdwg.mxu0
      %v845 = vld [vmem:[%s4] sm:$0xf]
      %v846 = vld [vmem:[%s4 + $0x4] sm:$0xf]
      %v847 = vld [vmem:[%s4 + $0x8] sm:$0xf]
      %v848 = vld [vmem:[%s4 + $0xc] sm:$0xf]
      %v849 = vld [vmem:[%s4 + $0x10] sm:$0xf]
      %v850 = vld [vmem:[%s4 + $0x14] sm:$0xf]
      %v851 = vld [vmem:[%s4 + $0x18] sm:$0xf]
      %v852 = vld [vmem:[%s4 + $0x1c] sm:$0xf]
      %v853 = vld [vmem:[%s4 + $0x20] sm:$0xf]
      %v854 = vld [vmem:[%s4 + $0x24] sm:$0xf]
      %v855 = vld [vmem:[%s4 + $0x28] sm:$0xf]
      %v856 = vld [vmem:[%s4 + $0x2c] sm:$0xf]
      %v857 = vld [vmem:[%s4 + $0x30] sm:$0xf]
      %v858 = vld [vmem:[%s4 + $0x34] sm:$0xf]
      %v859 = vld [vmem:[%s4 + $0x38] sm:$0xf]
      %v860 = vld [vmem:[%s4 + $0x3c] sm:$0xf]
      %v861 = vld [vmem:[%s5] sm:$0x1]
      %v862 = vld [vmem:[%s5 + $0x1] sm:$0x1]
      %v863 = vld [vmem:[%s5 + $0x2] sm:$0x1]
      %v864 = vld [vmem:[%s5 + $0x3] sm:$0x1]
      %v869 = vlaneseq
      %v870 = vshrl.u32 %v869, 7
      %v871 = vsub.s32 0, %v870
      %v872 = vrot.slane %v861, %v871
      %v873 = vlaneseq
      %v874 = vshrl.u32 %v873, 7
      %v875 = vsub.s32 0, %v874
      %v876 = vrot.slane %v862, %v875
      %v877 = vlaneseq
      %v878 = vshrl.u32 %v877, 7
      %v879 = vsub.s32 0, %v878
      %v880 = vrot.slane %v863, %v879
      %v881 = vlaneseq
      %v882 = vshrl.u32 %v881, 7
      %v883 = vsub.s32 0, %v882
      %v884 = vrot.slane %v864, %v883
      %v893 = vunpack.c.l.b16 %v845
      %v894 = vunpack.c.l.b16 %v846
      %v895 = vunpack.c.l.b16 %v847
      %v896 = vunpack.c.l.b16 %v848
      %v897 = vpack.c.b16 %v894, %v893
      %v898 = vpack.c.b16 %v896, %v895
      %901 = vmatprep.subr.bf16.mxu0 0
      %902 = vmatpush1.bf16.msra.mxu0 %v897
      %903 = vmatprep.subr.bf16.mxu0 0
      %904 = vmatpush1.bf16.msra.mxu0 %v898
      %905 = vmatprep.subr.bf16.mxu0 0
      %906 = vmatpush1.bf16.msra.mxu0 0
      %907 = vmatprep.subr.bf16.mxu0 0
      %908 = vmatpush1.bf16.msra.mxu0 0
      %909 = vmatprep.subr.bf16.mxu0 0
      %910 = vmatpush1.bf16.msra.mxu0 0
      %911 = vmatprep.subr.bf16.mxu0 0
      %912 = vmatpush1.bf16.msra.mxu0 0
      %913 = vmatprep.subr.bf16.mxu0 0
      %914 = vmatpush1.bf16.msra.mxu0 0
      %915 = vmatprep.subr.bf16.mxu0 0
      %916 = vmatpush1.bf16.msra.mxu0 0
      %917 = vmatprep.subr.bf16.mxu0 0
      %918 = vmatpush1.bf16.msra.mxu0 0
      %919 = vmatprep.subr.bf16.mxu0 0
      %920 = vmatpush1.bf16.msra.mxu0 0
      %921 = vmatprep.subr.bf16.mxu0 0
      %922 = vmatpush1.bf16.msra.mxu0 0
      %923 = vmatprep.subr.bf16.mxu0 0
      %924 = vmatpush1.bf16.msra.mxu0 0
      %925 = vmatprep.subr.bf16.mxu0 0
      %926 = vmatpush1.bf16.msra.mxu0 0
      %927 = vmatprep.subr.bf16.mxu0 0
      %928 = vmatpush1.bf16.msra.mxu0 0
      %929 = vmatprep.subr.bf16.mxu0 0
      %930 = vmatpush1.bf16.msra.mxu0 0
      %931 = vmatprep.subr.bf16.mxu0 0
      %932 = vmatpush1.bf16.msra.mxu0 0
      %933 = vmatprep.mubr.bf16.mxu0 0
      %934 = vmatmul.mubr.bf16.gmra.mrb[0].mxu0 %v647
      %v935 = vpop.f32.mrb[0].mxu0
      %v936 = vadd.f32 %v872, %v935
      %v937 = vpop.f32.mrb[0].mxu0
      %v938 = vpop.f32.mrb[0].mxu0
      %v939 = vpop.f32.mrb[0].mxu0
      %940 = vdwg.mxu0
      %v945 = vunpack.c.l.b16 %v849
      %v946 = vunpack.c.l.b16 %v850
      %v947 = vunpack.c.l.b16 %v851
      %v948 = vunpack.c.l.b16 %v852
      %v949 = vpack.c.b16 %v946, %v945
      %v950 = vpack.c.b16 %v948, %v947
      %953 = vmatprep.subr.bf16.mxu0 0
      %954 = vmatpush1.bf16.msra.mxu0 %v949
      %955 = vmatprep.subr.bf16.mxu0 0
      %956 = vmatpush1.bf16.msra.mxu0 %v950
      %957 = vmatprep.subr.bf16.mxu0 0
      %958 = vmatpush1.bf16.msra.mxu0 0
      %959 = vmatprep.subr.bf16.mxu0 0
      %960 = vmatpush1.bf16.msra.mxu0 0
      %961 = vmatprep.subr.bf16.mxu0 0
      %962 = vmatpush1.bf16.msra.mxu0 0
      %963 = vmatprep.subr.bf16.mxu0 0
      %964 = vmatpush1.bf16.msra.mxu0 0
      %965 = vmatprep.subr.bf16.mxu0 0
      %966 = vmatpush1.bf16.msra.mxu0 0
      %967 = vmatprep.subr.bf16.mxu0 0
      %968 = vmatpush1.bf16.msra.mxu0 0
      %969 = vmatprep.subr.bf16.mxu0 0
      %970 = vmatpush1.bf16.msra.mxu0 0
      %971 = vmatprep.subr.bf16.mxu0 0
      %972 = vmatpush1.bf16.msra.mxu0 0
      %973 = vmatprep.subr.bf16.mxu0 0
      %974 = vmatpush1.bf16.msra.mxu0 0
      %975 = vmatprep.subr.bf16.mxu0 0
      %976 = vmatpush1.bf16.msra.mxu0 0
      %977 = vmatprep.subr.bf16.mxu0 0
      %978 = vmatpush1.bf16.msra.mxu0 0
      %979 = vmatprep.subr.bf16.mxu0 0
      %980 = vmatpush1.bf16.msra.mxu0 0
      %981 = vmatprep.subr.bf16.mxu0 0
      %982 = vmatpush1.bf16.msra.mxu0 0
      %983 = vmatprep.subr.bf16.mxu0 0
      %984 = vmatpush1.bf16.msra.mxu0 0
      %985 = vmatprep.mubr.bf16.mxu0 0
      %986 = vmatmul.mubr.bf16.gmra.mrb[0].mxu0 %v647
      %v987 = vpop.f32.mrb[0].mxu0
      %v988 = vadd.f32 %v876, %v987
      %v989 = vpop.f32.mrb[0].mxu0
      %v990 = vpop.f32.mrb[0].mxu0
      %v991 = vpop.f32.mrb[0].mxu0
      %992 = vdwg.mxu0
      %v997 = vunpack.c.l.b16 %v853
      %v998 = vunpack.c.l.b16 %v854
      %v999 = vunpack.c.l.b16 %v855
      %v1000 = vunpack.c.l.b16 %v856
      %v1001 = vpack.c.b16 %v998, %v997
      %v1002 = vpack.c.b16 %v1000, %v999
      %1005 = vmatprep.subr.bf16.mxu0 0
      %1006 = vmatpush1.bf16.msra.mxu0 %v1001
      %1007 = vmatprep.subr.bf16.mxu0 0
      %1008 = vmatpush1.bf16.msra.mxu0 %v1002
      %1009 = vmatprep.subr.bf16.mxu0 0
      %1010 = vmatpush1.bf16.msra.mxu0 0
      %1011 = vmatprep.subr.bf16.mxu0 0
      %1012 = vmatpush1.bf16.msra.mxu0 0
      %1013 = vmatprep.subr.bf16.mxu0 0
      %1014 = vmatpush1.bf16.msra.mxu0 0
      %1015 = vmatprep.subr.bf16.mxu0 0
      %1016 = vmatpush1.bf16.msra.mxu0 0
      %1017 = vmatprep.subr.bf16.mxu0 0
      %1018 = vmatpush1.bf16.msra.mxu0 0
      %1019 = vmatprep.subr.bf16.mxu0 0
      %1020 = vmatpush1.bf16.msra.mxu0 0
      %1021 = vmatprep.subr.bf16.mxu0 0
      %1022 = vmatpush1.bf16.msra.mxu0 0
      %1023 = vmatprep.subr.bf16.mxu0 0
      %1024 = vmatpush1.bf16.msra.mxu0 0
      %1025 = vmatprep.subr.bf16.mxu0 0
      %1026 = vmatpush1.bf16.msra.mxu0 0
      %1027 = vmatprep.subr.bf16.mxu0 0
      %1028 = vmatpush1.bf16.msra.mxu0 0
      %1029 = vmatprep.subr.bf16.mxu0 0
      %1030 = vmatpush1.bf16.msra.mxu0 0
      %1031 = vmatprep.subr.bf16.mxu0 0
      %1032 = vmatpush1.bf16.msra.mxu0 0
      %1033 = vmatprep.subr.bf16.mxu0 0
      %1034 = vmatpush1.bf16.msra.mxu0 0
      %1035 = vmatprep.subr.bf16.mxu0 0
      %1036 = vmatpush1.bf16.msra.mxu0 0
      %1037 = vmatprep.mubr.bf16.mxu0 0
      %1038 = vmatmul.mubr.bf16.gmra.mrb[0].mxu0 %v647
      %v1039 = vpop.f32.mrb[0].mxu0
      %v1040 = vadd.f32 %v880, %v1039
      %v1041 = vpop.f32.mrb[0].mxu0
      %v1042 = vpop.f32.mrb[0].mxu0
      %v1043 = vpop.f32.mrb[0].mxu0
      %1044 = vdwg.mxu0
      %v1049 = vunpack.c.l.b16 %v857
      %v1050 = vunpack.c.l.b16 %v858
      %v1051 = vunpack.c.l.b16 %v859
      %v1052 = vunpack.c.l.b16 %v860
      %v1053 = vpack.c.b16 %v1050, %v1049
      %v1054 = vpack.c.b16 %v1052, %v1051
      %1057 = vmatprep.subr.bf16.mxu0 0
      %1058 = vmatpush1.bf16.msra.mxu0 %v1053
      %1059 = vmatprep.subr.bf16.mxu0 0
      %1060 = vmatpush1.bf16.msra.mxu0 %v1054
      %1061 = vmatprep.subr.bf16.mxu0 0
      %1062 = vmatpush1.bf16.msra.mxu0 0
      %1063 = vmatprep.subr.bf16.mxu0 0
      %1064 = vmatpush1.bf16.msra.mxu0 0
      %1065 = vmatprep.subr.bf16.mxu0 0
      %1066 = vmatpush1.bf16.msra.mxu0 0
      %1067 = vmatprep.subr.bf16.mxu0 0
      %1068 = vmatpush1.bf16.msra.mxu0 0
      %1069 = vmatprep.subr.bf16.mxu0 0
      %1070 = vmatpush1.bf16.msra.mxu0 0
      %1071 = vmatprep.subr.bf16.mxu0 0
      %1072 = vmatpush1.bf16.msra.mxu0 0
      %1073 = vmatprep.subr.bf16.mxu0 0
      %1074 = vmatpush1.bf16.msra.mxu0 0
      %1075 = vmatprep.subr.bf16.mxu0 0
      %1076 = vmatpush1.bf16.msra.mxu0 0
      %1077 = vmatprep.subr.bf16.mxu0 0
      %1078 = vmatpush1.bf16.msra.mxu0 0
      %1079 = vmatprep.subr.bf16.mxu0 0
      %1080 = vmatpush1.bf16.msra.mxu0 0
      %1081 = vmatprep.subr.bf16.mxu0 0
      %1082 = vmatpush1.bf16.msra.mxu0 0
      %1083 = vmatprep.subr.bf16.mxu0 0
      %1084 = vmatpush1.bf16.msra.mxu0 0
      %1085 = vmatprep.subr.bf16.mxu0 0
      %1086 = vmatpush1.bf16.msra.mxu0 0
      %1087 = vmatprep.subr.bf16.mxu0 0
      %1088 = vmatpush1.bf16.msra.mxu0 0
      %1089 = vmatprep.mubr.bf16.mxu0 0
      %1090 = vmatmul.mubr.bf16.gmra.mrb[0].mxu0 %v647
      %v1091 = vpop.f32.mrb[0].mxu0
      %v1092 = vadd.f32 %v884, %v1091
      %v1093 = vpop.f32.mrb[0].mxu0
      %v1094 = vpop.f32.mrb[0].mxu0
      %v1095 = vpop.f32.mrb[0].mxu0
      %1096 = vdwg.mxu0
      %v1097 = vld [vmem:[%s6] sm:$0xf]
      %v1098 = vld [vmem:[%s6 + $0x4] sm:$0xf]
      %v1099 = vld [vmem:[%s6 + $0x8] sm:$0xf]
      %v1100 = vld [vmem:[%s6 + $0xc] sm:$0xf]
      %v1101 = vld [vmem:[%s6 + $0x10] sm:$0xf]
      %v1102 = vld [vmem:[%s6 + $0x14] sm:$0xf]
      %v1103 = vld [vmem:[%s6 + $0x18] sm:$0xf]
      %v1104 = vld [vmem:[%s6 + $0x1c] sm:$0xf]
      %v1105 = vld [vmem:[%s6 + $0x20] sm:$0xf]
      %v1106 = vld [vmem:[%s6 + $0x24] sm:$0xf]
      %v1107 = vld [vmem:[%s6 + $0x28] sm:$0xf]
      %v1108 = vld [vmem:[%s6 + $0x2c] sm:$0xf]
      %v1109 = vld [vmem:[%s6 + $0x30] sm:$0xf]
      %v1110 = vld [vmem:[%s6 + $0x34] sm:$0xf]
      %v1111 = vld [vmem:[%s6 + $0x38] sm:$0xf]
      %v1112 = vld [vmem:[%s6 + $0x3c] sm:$0xf]
      %v1113 = vld [vmem:[%s7] sm:$0x1]
      %v1114 = vld [vmem:[%s7 + $0x1] sm:$0x1]
      %v1115 = vld [vmem:[%s7 + $0x2] sm:$0x1]
      %v1116 = vld [vmem:[%s7 + $0x3] sm:$0x1]
      %v1121 = vlaneseq
      %v1122 = vshrl.u32 %v1121, 7
      %v1123 = vsub.s32 0, %v1122
      %v1124 = vrot.slane %v1113, %v1123
      %v1125 = vlaneseq
      %v1126 = vshrl.u32 %v1125, 7
      %v1127 = vsub.s32 0, %v1126
      %v1128 = vrot.slane %v1114, %v1127
      %v1129 = vlaneseq
      %v1130 = vshrl.u32 %v1129, 7
      %v1131 = vsub.s32 0, %v1130
      %v1132 = vrot.slane %v1115, %v1131
      %v1133 = vlaneseq
      %v1134 = vshrl.u32 %v1133, 7
      %v1135 = vsub.s32 0, %v1134
      %v1136 = vrot.slane %v1116, %v1135
      %v1145 = vunpack.c.l.b16 %v1097
      %v1146 = vunpack.c.l.b16 %v1098
      %v1147 = vunpack.c.l.b16 %v1099
      %v1148 = vunpack.c.l.b16 %v1100
      %v1149 = vpack.c.b16 %v1146, %v1145
      %v1150 = vpack.c.b16 %v1148, %v1147
      %1153 = vmatprep.subr.bf16.mxu0 0
      %1154 = vmatpush1.bf16.msra.mxu0 %v1149
      %1155 = vmatprep.subr.bf16.mxu0 0
      %1156 = vmatpush1.bf16.msra.mxu0 %v1150
      %1157 = vmatprep.subr.bf16.mxu0 0
      %1158 = vmatpush1.bf16.msra.mxu0 0
      %1159 = vmatprep.subr.bf16.mxu0 0
      %1160 = vmatpush1.bf16.msra.mxu0 0
      %1161 = vmatprep.subr.bf16.mxu0 0
      %1162 = vmatpush1.bf16.msra.mxu0 0
      %1163 = vmatprep.subr.bf16.mxu0 0
      %1164 = vmatpush1.bf16.msra.mxu0 0
      %1165 = vmatprep.subr.bf16.mxu0 0
      %1166 = vmatpush1.bf16.msra.mxu0 0
      %1167 = vmatprep.subr.bf16.mxu0 0
      %1168 = vmatpush1.bf16.msra.mxu0 0
      %1169 = vmatprep.subr.bf16.mxu0 0
      %1170 = vmatpush1.bf16.msra.mxu0 0
      %1171 = vmatprep.subr.bf16.mxu0 0
      %1172 = vmatpush1.bf16.msra.mxu0 0
      %1173 = vmatprep.subr.bf16.mxu0 0
      %1174 = vmatpush1.bf16.msra.mxu0 0
      %1175 = vmatprep.subr.bf16.mxu0 0
      %1176 = vmatpush1.bf16.msra.mxu0 0
      %1177 = vmatprep.subr.bf16.mxu0 0
      %1178 = vmatpush1.bf16.msra.mxu0 0
      %1179 = vmatprep.subr.bf16.mxu0 0
      %1180 = vmatpush1.bf16.msra.mxu0 0
      %1181 = vmatprep.subr.bf16.mxu0 0
      %1182 = vmatpush1.bf16.msra.mxu0 0
      %1183 = vmatprep.subr.bf16.mxu0 0
      %1184 = vmatpush1.bf16.msra.mxu0 0
      %1185 = vmatprep.mubr.bf16.mxu0 0
      %1186 = vmatmul.mubr.bf16.gmra.mrb[0].mxu0 %v647
      %v1187 = vpop.f32.mrb[0].mxu0
      %v1188 = vadd.f32 %v1124, %v1187
      %v1189 = vpop.f32.mrb[0].mxu0
      %v1190 = vpop.f32.mrb[0].mxu0
      %v1191 = vpop.f32.mrb[0].mxu0
      %1192 = vdwg.mxu0
      %v1197 = vunpack.c.l.b16 %v1101
      %v1198 = vunpack.c.l.b16 %v1102
      %v1199 = vunpack.c.l.b16 %v1103
      %v1200 = vunpack.c.l.b16 %v1104
      %v1201 = vpack.c.b16 %v1198, %v1197
      %v1202 = vpack.c.b16 %v1200, %v1199
      %1205 = vmatprep.subr.bf16.mxu0 0
      %1206 = vmatpush1.bf16.msra.mxu0 %v1201
      %1207 = vmatprep.subr.bf16.mxu0 0
      %1208 = vmatpush1.bf16.msra.mxu0 %v1202
      %1209 = vmatprep.subr.bf16.mxu0 0
      %1210 = vmatpush1.bf16.msra.mxu0 0
      %1211 = vmatprep.subr.bf16.mxu0 0
      %1212 = vmatpush1.bf16.msra.mxu0 0
      %1213 = vmatprep.subr.bf16.mxu0 0
      %1214 = vmatpush1.bf16.msra.mxu0 0
      %1215 = vmatprep.subr.bf16.mxu0 0
      %1216 = vmatpush1.bf16.msra.mxu0 0
      %1217 = vmatprep.subr.bf16.mxu0 0
      %1218 = vmatpush1.bf16.msra.mxu0 0
      %1219 = vmatprep.subr.bf16.mxu0 0
      %1220 = vmatpush1.bf16.msra.mxu0 0
      %1221 = vmatprep.subr.bf16.mxu0 0
      %1222 = vmatpush1.bf16.msra.mxu0 0
      %1223 = vmatprep.subr.bf16.mxu0 0
      %1224 = vmatpush1.bf16.msra.mxu0 0
      %1225 = vmatprep.subr.bf16.mxu0 0
      %1226 = vmatpush1.bf16.msra.mxu0 0
      %1227 = vmatprep.subr.bf16.mxu0 0
      %1228 = vmatpush1.bf16.msra.mxu0 0
      %1229 = vmatprep.subr.bf16.mxu0 0
      %1230 = vmatpush1.bf16.msra.mxu0 0
      %1231 = vmatprep.subr.bf16.mxu0 0
      %1232 = vmatpush1.bf16.msra.mxu0 0
      %1233 = vmatprep.subr.bf16.mxu0 0
      %1234 = vmatpush1.bf16.msra.mxu0 0
      %1235 = vmatprep.subr.bf16.mxu0 0
      %1236 = vmatpush1.bf16.msra.mxu0 0
      %1237 = vmatprep.mubr.bf16.mxu0 0
      %1238 = vmatmul.mubr.bf16.gmra.mrb[0].mxu0 %v647
      %v1239 = vpop.f32.mrb[0].mxu0
      %v1240 = vadd.f32 %v1128, %v1239
      %v1241 = vpop.f32.mrb[0].mxu0
      %v1242 = vpop.f32.mrb[0].mxu0
      %v1243 = vpop.f32.mrb[0].mxu0
      %1244 = vdwg.mxu0
      %v1249 = vunpack.c.l.b16 %v1105
      %v1250 = vunpack.c.l.b16 %v1106
      %v1251 = vunpack.c.l.b16 %v1107
      %v1252 = vunpack.c.l.b16 %v1108
      %v1253 = vpack.c.b16 %v1250, %v1249
      %v1254 = vpack.c.b16 %v1252, %v1251
      %1257 = vmatprep.subr.bf16.mxu0 0
      %1258 = vmatpush1.bf16.msra.mxu0 %v1253
      %1259 = vmatprep.subr.bf16.mxu0 0
      %1260 = vmatpush1.bf16.msra.mxu0 %v1254
      %1261 = vmatprep.subr.bf16.mxu0 0
      %1262 = vmatpush1.bf16.msra.mxu0 0
      %1263 = vmatprep.subr.bf16.mxu0 0
      %1264 = vmatpush1.bf16.msra.mxu0 0
      %1265 = vmatprep.subr.bf16.mxu0 0
      %1266 = vmatpush1.bf16.msra.mxu0 0
      %1267 = vmatprep.subr.bf16.mxu0 0
      %1268 = vmatpush1.bf16.msra.mxu0 0
      %1269 = vmatprep.subr.bf16.mxu0 0
      %1270 = vmatpush1.bf16.msra.mxu0 0
      %1271 = vmatprep.subr.bf16.mxu0 0
      %1272 = vmatpush1.bf16.msra.mxu0 0
      %1273 = vmatprep.subr.bf16.mxu0 0
      %1274 = vmatpush1.bf16.msra.mxu0 0
      %1275 = vmatprep.subr.bf16.mxu0 0
      %1276 = vmatpush1.bf16.msra.mxu0 0
      %1277 = vmatprep.subr.bf16.mxu0 0
      %1278 = vmatpush1.bf16.msra.mxu0 0
      %1279 = vmatprep.subr.bf16.mxu0 0
      %1280 = vmatpush1.bf16.msra.mxu0 0
      %1281 = vmatprep.subr.bf16.mxu0 0
      %1282 = vmatpush1.bf16.msra.mxu0 0
      %1283 = vmatprep.subr.bf16.mxu0 0
      %1284 = vmatpush1.bf16.msra.mxu0 0
      %1285 = vmatprep.subr.bf16.mxu0 0
      %1286 = vmatpush1.bf16.msra.mxu0 0
      %1287 = vmatprep.subr.bf16.mxu0 0
      %1288 = vmatpush1.bf16.msra.mxu0 0
      %1289 = vmatprep.mubr.bf16.mxu0 0
      %1290 = vmatmul.mubr.bf16.gmra.mrb[0].mxu0 %v647
      %v1291 = vpop.f32.mrb[0].mxu0
      %v1292 = vadd.f32 %v1132, %v1291
      %v1293 = vpop.f32.mrb[0].mxu0
      %v1294 = vpop.f32.mrb[0].mxu0
      %v1295 = vpop.f32.mrb[0].mxu0
      %1296 = vdwg.mxu0
      %v1301 = vunpack.c.l.b16 %v1109
      %v1302 = vunpack.c.l.b16 %v1110
      %v1303 = vunpack.c.l.b16 %v1111
      %v1304 = vunpack.c.l.b16 %v1112
      %v1305 = vpack.c.b16 %v1302, %v1301
      %v1306 = vpack.c.b16 %v1304, %v1303
      %1309 = vmatprep.subr.bf16.mxu0 0
      %1310 = vmatpush1.bf16.msra.mxu0 %v1305
      %1311 = vmatprep.subr.bf16.mxu0 0
      %1312 = vmatpush1.bf16.msra.mxu0 %v1306
      %1313 = vmatprep.subr.bf16.mxu0 0
      %1314 = vmatpush1.bf16.msra.mxu0 0
      %1315 = vmatprep.subr.bf16.mxu0 0
      %1316 = vmatpush1.bf16.msra.mxu0 0
      %1317 = vmatprep.subr.bf16.mxu0 0
      %1318 = vmatpush1.bf16.msra.mxu0 0
      %1319 = vmatprep.subr.bf16.mxu0 0
      %1320 = vmatpush1.bf16.msra.mxu0 0
      %1321 = vmatprep.subr.bf16.mxu0 0
      %1322 = vmatpush1.bf16.msra.mxu0 0
      %1323 = vmatprep.subr.bf16.mxu0 0
      %1324 = vmatpush1.bf16.msra.mxu0 0
      %1325 = vmatprep.subr.bf16.mxu0 0
      %1326 = vmatpush1.bf16.msra.mxu0 0
      %1327 = vmatprep.subr.bf16.mxu0 0
      %1328 = vmatpush1.bf16.msra.mxu0 0
      %1329 = vmatprep.subr.bf16.mxu0 0
      %1330 = vmatpush1.bf16.msra.mxu0 0
      %1331 = vmatprep.subr.bf16.mxu0 0
      %1332 = vmatpush1.bf16.msra.mxu0 0
      %1333 = vmatprep.subr.bf16.mxu0 0
      %1334 = vmatpush1.bf16.msra.mxu0 0
      %1335 = vmatprep.subr.bf16.mxu0 0
      %1336 = vmatpush1.bf16.msra.mxu0 0
      %1337 = vmatprep.subr.bf16.mxu0 0
      %1338 = vmatpush1.bf16.msra.mxu0 0
      %1339 = vmatprep.subr.bf16.mxu0 0
      %1340 = vmatpush1.bf16.msra.mxu0 0
      %1341 = vmatprep.mubr.bf16.mxu0 0
      %1342 = vmatmul.mubr.bf16.gmra.mrb[0].mxu0 %v647
      %v1343 = vpop.f32.mrb[0].mxu0
      %v1344 = vadd.f32 %v1136, %v1343
      %v1345 = vpop.f32.mrb[0].mxu0
      %v1346 = vpop.f32.mrb[0].mxu0
      %v1347 = vpop.f32.mrb[0].mxu0
      %1348 = vdwg.mxu0
      %v1349 = vmul.f32 %v684, 0.35355338
      %v1350 = vmul.f32 %v736, 0.35355338
      %v1351 = vmul.f32 %v788, 0.35355338
      %v1352 = vmul.f32 %v840, 0.35355338
      %v1353 = vpack.c.bf16 %v1349, %v1349
      %v1354 = vpack.c.bf16 %v1350, %v1350
      %v1355 = vpack.c.bf16 %v1351, %v1351
      %v1356 = vpack.c.bf16 %v1352, %v1352
      %v1357 = vpack.c.bf16 %v936, %v936
      %v1358 = vpack.c.bf16 %v988, %v988
      %v1359 = vpack.c.bf16 %v1040, %v1040
      %v1360 = vpack.c.bf16 %v1092, %v1092
      %v1362 = vlaneseq
      %v1363 = vshrl.u32 %v1362, 7
      %v1364 = vsub.s32 0, %v1363
      %v1365 = vrot.slane %v587, %v1364
      %vm1367 = vcmask 64512
      %v1369 = vsel %vm1367, %v1353, 0
      %v1372 = vsel %vm1367, %v1357, 0
      %1374 = vmatprep.subr.bf16.mxu0 0
      %1375 = vmatpush1.bf16.xpose.msra.mxu0 %v1372
      %1376 = vmatprep.subr.bf16.mxu0 0
      %1377 = vmatpush1.bf16.xpose.msra.mxu0 0
      %1378 = vmatprep.subr.bf16.mxu0 0
      %1379 = vmatpush1.bf16.xpose.msra.mxu0 0
      %1380 = vmatprep.subr.bf16.mxu0 0
      %1381 = vmatpush1.bf16.xpose.msra.mxu0 0
      %1382 = vmatprep.subr.bf16.mxu0 0
      %1383 = vmatpush1.bf16.xpose.msra.mxu0 0
      %1384 = vmatprep.subr.bf16.mxu0 0
      %1385 = vmatpush1.bf16.xpose.msra.mxu0 0
      %1386 = vmatprep.subr.bf16.mxu0 0
      %1387 = vmatpush1.bf16.xpose.msra.mxu0 0
      %1388 = vmatprep.subr.bf16.mxu0 0
      %1389 = vmatpush1.bf16.xpose.msra.mxu0 0
      %1390 = vmatprep.subr.bf16.mxu0 0
      %1391 = vmatpush1.bf16.xpose.msra.mxu0 0
      %1392 = vmatprep.subr.bf16.mxu0 0
      %1393 = vmatpush1.bf16.xpose.msra.mxu0 0
      %1394 = vmatprep.subr.bf16.mxu0 0
      %1395 = vmatpush1.bf16.xpose.msra.mxu0 0
      %1396 = vmatprep.subr.bf16.mxu0 0
      %1397 = vmatpush1.bf16.xpose.msra.mxu0 0
      %1398 = vmatprep.subr.bf16.mxu0 0
      %1399 = vmatpush1.bf16.xpose.msra.mxu0 0
      %1400 = vmatprep.subr.bf16.mxu0 0
      %1401 = vmatpush1.bf16.xpose.msra.mxu0 0
      %1402 = vmatprep.subr.bf16.mxu0 0
      %1403 = vmatpush1.bf16.xpose.msra.mxu0 0
      %1404 = vmatprep.subr.bf16.mxu0 0
      %1405 = vmatpush1.bf16.xpose.msra.mxu0 0
      %1406 = vmatprep.mubr.bf16.mxu0 0
      %1407 = vmatmul.mubr.bf16.gmra.mrb[0].mxu0 %v1369
      %v1408 = vpop.f32.mrb[0].mxu0
      %v1409 = vadd.f32 %v1365, %v1408
      %v1410 = vpop.f32.mrb[0].mxu0
      %v1411 = vpop.f32.mrb[0].mxu0
      %v1412 = vpop.f32.mrb[0].mxu0
      %1413 = vdwg.mxu0
      %v1415 = vsel %vm1367, %v1354, 0
      %v1418 = vsel %vm1367, %v1358, 0
      %1420 = vmatprep.subr.bf16.mxu0 0
      %1421 = vmatpush1.bf16.xpose.msra.mxu0 %v1418
      %1422 = vmatprep.subr.bf16.mxu0 0
      %1423 = vmatpush1.bf16.xpose.msra.mxu0 0
      %1424 = vmatprep.subr.bf16.mxu0 0
      %1425 = vmatpush1.bf16.xpose.msra.mxu0 0
      %1426 = vmatprep.subr.bf16.mxu0 0
      %1427 = vmatpush1.bf16.xpose.msra.mxu0 0
      %1428 = vmatprep.subr.bf16.mxu0 0
      %1429 = vmatpush1.bf16.xpose.msra.mxu0 0
      %1430 = vmatprep.subr.bf16.mxu0 0
      %1431 = vmatpush1.bf16.xpose.msra.mxu0 0
      %1432 = vmatprep.subr.bf16.mxu0 0
      %1433 = vmatpush1.bf16.xpose.msra.mxu0 0
      %1434 = vmatprep.subr.bf16.mxu0 0
      %1435 = vmatpush1.bf16.xpose.msra.mxu0 0
      %1436 = vmatprep.subr.bf16.mxu0 0
      %1437 = vmatpush1.bf16.xpose.msra.mxu0 0
      %1438 = vmatprep.subr.bf16.mxu0 0
      %1439 = vmatpush1.bf16.xpose.msra.mxu0 0
      %1440 = vmatprep.subr.bf16.mxu0 0
      %1441 = vmatpush1.bf16.xpose.msra.mxu0 0
      %1442 = vmatprep.subr.bf16.mxu0 0
      %1443 = vmatpush1.bf16.xpose.msra.mxu0 0
      %1444 = vmatprep.subr.bf16.mxu0 0
      %1445 = vmatpush1.bf16.xpose.msra.mxu0 0
      %1446 = vmatprep.subr.bf16.mxu0 0
      %1447 = vmatpush1.bf16.xpose.msra.mxu0 0
      %1448 = vmatprep.subr.bf16.mxu0 0
      %1449 = vmatpush1.bf16.xpose.msra.mxu0 0
      %1450 = vmatprep.subr.bf16.mxu0 0
      %1451 = vmatpush1.bf16.xpose.msra.mxu0 0
      %1452 = vmatprep.mubr.bf16.mxu0 0
      %1453 = vmatmul.mubr.bf16.gmra.mrb[0].mxu0 %v1415
      %v1454 = vpop.f32.mrb[0].mxu0
      %v1455 = vadd.f32 %v1365, %v1454
      %v1456 = vpop.f32.mrb[0].mxu0
      %v1457 = vpop.f32.mrb[0].mxu0
      %v1458 = vpop.f32.mrb[0].mxu0
      %1459 = vdwg.mxu0
      %v1461 = vsel %vm1367, %v1355, 0
      %v1464 = vsel %vm1367, %v1359, 0
      %1466 = vmatprep.subr.bf16.mxu0 0
      %1467 = vmatpush1.bf16.xpose.msra.mxu0 %v1464
      %1468 = vmatprep.subr.bf16.mxu0 0
      %1469 = vmatpush1.bf16.xpose.msra.mxu0 0
      %1470 = vmatprep.subr.bf16.mxu0 0
      %1471 = vmatpush1.bf16.xpose.msra.mxu0 0
      %1472 = vmatprep.subr.bf16.mxu0 0
      %1473 = vmatpush1.bf16.xpose.msra.mxu0 0
      %1474 = vmatprep.subr.bf16.mxu0 0
      %1475 = vmatpush1.bf16.xpose.msra.mxu0 0
      %1476 = vmatprep.subr.bf16.mxu0 0
      %1477 = vmatpush1.bf16.xpose.msra.mxu0 0
      %1478 = vmatprep.subr.bf16.mxu0 0
      %1479 = vmatpush1.bf16.xpose.msra.mxu0 0
      %1480 = vmatprep.subr.bf16.mxu0 0
      %1481 = vmatpush1.bf16.xpose.msra.mxu0 0
      %1482 = vmatprep.subr.bf16.mxu0 0
      %1483 = vmatpush1.bf16.xpose.msra.mxu0 0
      %1484 = vmatprep.subr.bf16.mxu0 0
      %1485 = vmatpush1.bf16.xpose.msra.mxu0 0
      %1486 = vmatprep.subr.bf16.mxu0 0
      %1487 = vmatpush1.bf16.xpose.msra.mxu0 0
      %1488 = vmatprep.subr.bf16.mxu0 0
      %1489 = vmatpush1.bf16.xpose.msra.mxu0 0
      %1490 = vmatprep.subr.bf16.mxu0 0
      %1491 = vmatpush1.bf16.xpose.msra.mxu0 0
      %1492 = vmatprep.subr.bf16.mxu0 0
      %1493 = vmatpush1.bf16.xpose.msra.mxu0 0
      %1494 = vmatprep.subr.bf16.mxu0 0
      %1495 = vmatpush1.bf16.xpose.msra.mxu0 0
      %1496 = vmatprep.subr.bf16.mxu0 0
      %1497 = vmatpush1.bf16.xpose.msra.mxu0 0
      %1498 = vmatprep.mubr.bf16.mxu0 0
      %1499 = vmatmul.mubr.bf16.gmra.mrb[0].mxu0 %v1461
      %v1500 = vpop.f32.mrb[0].mxu0
      %v1501 = vadd.f32 %v1365, %v1500
      %v1502 = vpop.f32.mrb[0].mxu0
      %v1503 = vpop.f32.mrb[0].mxu0
      %v1504 = vpop.f32.mrb[0].mxu0
      %1505 = vdwg.mxu0
      %v1507 = vsel %vm1367, %v1356, 0
      %v1510 = vsel %vm1367, %v1360, 0
      %1512 = vmatprep.subr.bf16.mxu0 0
      %1513 = vmatpush1.bf16.xpose.msra.mxu0 %v1510
      %1514 = vmatprep.subr.bf16.mxu0 0
      %1515 = vmatpush1.bf16.xpose.msra.mxu0 0
      %1516 = vmatprep.subr.bf16.mxu0 0
      %1517 = vmatpush1.bf16.xpose.msra.mxu0 0
      %1518 = vmatprep.subr.bf16.mxu0 0
      %1519 = vmatpush1.bf16.xpose.msra.mxu0 0
      %1520 = vmatprep.subr.bf16.mxu0 0
      %1521 = vmatpush1.bf16.xpose.msra.mxu0 0
      %1522 = vmatprep.subr.bf16.mxu0 0
      %1523 = vmatpush1.bf16.xpose.msra.mxu0 0
      %1524 = vmatprep.subr.bf16.mxu0 0
      %1525 = vmatpush1.bf16.xpose.msra.mxu0 0
      %1526 = vmatprep.subr.bf16.mxu0 0
      %1527 = vmatpush1.bf16.xpose.msra.mxu0 0
      %1528 = vmatprep.subr.bf16.mxu0 0
      %1529 = vmatpush1.bf16.xpose.msra.mxu0 0
      %1530 = vmatprep.subr.bf16.mxu0 0
      %1531 = vmatpush1.bf16.xpose.msra.mxu0 0
      %1532 = vmatprep.subr.bf16.mxu0 0
      %1533 = vmatpush1.bf16.xpose.msra.mxu0 0
      %1534 = vmatprep.subr.bf16.mxu0 0
      %1535 = vmatpush1.bf16.xpose.msra.mxu0 0
      %1536 = vmatprep.subr.bf16.mxu0 0
      %1537 = vmatpush1.bf16.xpose.msra.mxu0 0
      %1538 = vmatprep.subr.bf16.mxu0 0
      %1539 = vmatpush1.bf16.xpose.msra.mxu0 0
      %1540 = vmatprep.subr.bf16.mxu0 0
      %1541 = vmatpush1.bf16.xpose.msra.mxu0 0
      %1542 = vmatprep.subr.bf16.mxu0 0
      %1543 = vmatpush1.bf16.xpose.msra.mxu0 0
      %1544 = vmatprep.mubr.bf16.mxu0 0
      %1545 = vmatmul.mubr.bf16.gmra.mrb[0].mxu0 %v1507
      %v1546 = vpop.f32.mrb[0].mxu0
      %v1547 = vadd.f32 %v1365, %v1546
      %v1548 = vpop.f32.mrb[0].mxu0
      %v1549 = vpop.f32.mrb[0].mxu0
      %v1550 = vpop.f32.mrb[0].mxu0
      %1551 = vdwg.mxu0
      %v1552 = vsel %vm1367, %v1409, -inf
      %1553 = vmax.xlane.f32.xlu0 %v1552
      %v1554 = vpop.xlane.xlu0 %1553
      %v1555 = vsel %vm1367, %v1455, -inf
      %1556 = vmax.xlane.f32.xlu0 %v1555
      %v1557 = vpop.xlane.xlu0 %1556
      %v1558 = vsel %vm1367, %v1501, -inf
      %1559 = vmax.xlane.f32.xlu0 %v1558
      %v1560 = vpop.xlane.xlu0 %1559
      %v1561 = vsel %vm1367, %v1547, -inf
      %1562 = vmax.xlane.f32.xlu0 %v1561
      %v1563 = vpop.xlane.xlu0 %1562
      %v1564 = vsub.f32 %v1409, %v1554
      %v1565 = vsub.f32 %v1455, %v1557
      %v1566 = vsub.f32 %v1501, %v1560
      %v1567 = vsub.f32 %v1547, %v1563
      %v1568 = vmul.f32 %v1564, 1.442695
      %v1569 = vpow.pop %v1568
      %v1570 = vmul.f32 %v1565, 1.442695
      %v1571 = vpow.pop %v1570
      %v1572 = vmul.f32 %v1566, 1.442695
      %v1573 = vpow.pop %v1572
      %v1574 = vmul.f32 %v1567, 1.442695
      %v1575 = vpow.pop %v1574
      %v1576 = vsel %vm1367, %v1569, 0.0
      %1577 = vadd.xlane.f32.xlu0 %v1576
      %v1578 = vpop.xlane.xlu0 %1577
      %v1579 = vsel %vm1367, %v1571, 0.0
      %1580 = vadd.xlane.f32.xlu0 %v1579
      %v1581 = vpop.xlane.xlu0 %1580
      %v1582 = vsel %vm1367, %v1573, 0.0
      %1583 = vadd.xlane.f32.xlu0 %v1582
      %v1584 = vpop.xlane.xlu0 %1583
      %v1585 = vsel %vm1367, %v1575, 0.0
      %1586 = vadd.xlane.f32.xlu0 %v1585
      %v1587 = vpop.xlane.xlu0 %1586
      %v1588 = vrcp.pop %v1578
      %v1589 = vrcp.pop %v1581
      %v1590 = vrcp.pop %v1584
      %v1591 = vrcp.pop %v1587
      %v1592 = vmul.f32 %v1569, %v1588
      %v1593 = vmul.f32 %v1571, %v1589
      %v1594 = vmul.f32 %v1573, %v1590
      %v1595 = vmul.f32 %v1575, %v1591
      %v1596 = vpack.c.bf16 %v1592, %v1592
      %v1597 = vpack.c.bf16 %v1593, %v1593
      %v1598 = vpack.c.bf16 %v1594, %v1594
      %v1599 = vpack.c.bf16 %v1595, %v1595
      %v1600 = vpack.c.bf16 %v1188, %v1188
      %v1601 = vpack.c.bf16 %v1240, %v1240
      %v1602 = vpack.c.bf16 %v1292, %v1292
      %v1603 = vpack.c.bf16 %v1344, %v1344
      %v1605 = vsel %vm1367, %v1596, 0
      %vm1607 = vcmask 1043456
      %v1609 = vsel %vm1607, %v1600, 0
      %1611 = vmatprep.subr.bf16.mxu0 0
      %1612 = vmatpush1.bf16.msra.mxu0 %v1609
      %1613 = vmatprep.subr.bf16.mxu0 0
      %1614 = vmatpush1.bf16.msra.mxu0 0
      %1615 = vmatprep.subr.bf16.mxu0 0
      %1616 = vmatpush1.bf16.msra.mxu0 0
      %1617 = vmatprep.subr.bf16.mxu0 0
      %1618 = vmatpush1.bf16.msra.mxu0 0
      %1619 = vmatprep.subr.bf16.mxu0 0
      %1620 = vmatpush1.bf16.msra.mxu0 0
      %1621 = vmatprep.subr.bf16.mxu0 0
      %1622 = vmatpush1.bf16.msra.mxu0 0
      %1623 = vmatprep.subr.bf16.mxu0 0
      %1624 = vmatpush1.bf16.msra.mxu0 0
      %1625 = vmatprep.subr.bf16.mxu0 0
      %1626 = vmatpush1.bf16.msra.mxu0 0
      %1627 = vmatprep.subr.bf16.mxu0 0
      %1628 = vmatpush1.bf16.msra.mxu0 0
      %1629 = vmatprep.subr.bf16.mxu0 0
      %1630 = vmatpush1.bf16.msra.mxu0 0
      %1631 = vmatprep.subr.bf16.mxu0 0
      %1632 = vmatpush1.bf16.msra.mxu0 0
      %1633 = vmatprep.subr.bf16.mxu0 0
      %1634 = vmatpush1.bf16.msra.mxu0 0
      %1635 = vmatprep.subr.bf16.mxu0 0
      %1636 = vmatpush1.bf16.msra.mxu0 0
      %1637 = vmatprep.subr.bf16.mxu0 0
      %1638 = vmatpush1.bf16.msra.mxu0 0
      %1639 = vmatprep.subr.bf16.mxu0 0
      %1640 = vmatpush1.bf16.msra.mxu0 0
      %1641 = vmatprep.subr.bf16.mxu0 0
      %1642 = vmatpush1.bf16.msra.mxu0 0
      %1643 = vmatprep.mubr.bf16.mxu0 0
      %1644 = vmatmul.mubr.bf16.gmra.mrb[0].mxu0 %v1605
      %v1645 = vpop.f32.mrb[0].mxu0
      %v1646 = vadd.f32 0.0, %v1645
      %v1647 = vpop.f32.mrb[0].mxu0
      %v1648 = vpop.f32.mrb[0].mxu0
      %v1649 = vpop.f32.mrb[0].mxu0
      %1650 = vdwg.mxu0
      %v1652 = vsel %vm1367, %v1597, 0
      %v1655 = vsel %vm1607, %v1601, 0
      %1657 = vmatprep.subr.bf16.mxu0 0
      %1658 = vmatpush1.bf16.msra.mxu0 %v1655
      %1659 = vmatprep.subr.bf16.mxu0 0
      %1660 = vmatpush1.bf16.msra.mxu0 0
      %1661 = vmatprep.subr.bf16.mxu0 0
      %1662 = vmatpush1.bf16.msra.mxu0 0
      %1663 = vmatprep.subr.bf16.mxu0 0
      %1664 = vmatpush1.bf16.msra.mxu0 0
      %1665 = vmatprep.subr.bf16.mxu0 0
      %1666 = vmatpush1.bf16.msra.mxu0 0
      %1667 = vmatprep.subr.bf16.mxu0 0
      %1668 = vmatpush1.bf16.msra.mxu0 0
      %1669 = vmatprep.subr.bf16.mxu0 0
      %1670 = vmatpush1.bf16.msra.mxu0 0
      %1671 = vmatprep.subr.bf16.mxu0 0
      %1672 = vmatpush1.bf16.msra.mxu0 0
      %1673 = vmatprep.subr.bf16.mxu0 0
      %1674 = vmatpush1.bf16.msra.mxu0 0
      %1675 = vmatprep.subr.bf16.mxu0 0
      %1676 = vmatpush1.bf16.msra.mxu0 0
      %1677 = vmatprep.subr.bf16.mxu0 0
      %1678 = vmatpush1.bf16.msra.mxu0 0
      %1679 = vmatprep.subr.bf16.mxu0 0
      %1680 = vmatpush1.bf16.msra.mxu0 0
      %1681 = vmatprep.subr.bf16.mxu0 0
      %1682 = vmatpush1.bf16.msra.mxu0 0
      %1683 = vmatprep.subr.bf16.mxu0 0
      %1684 = vmatpush1.bf16.msra.mxu0 0
      %1685 = vmatprep.subr.bf16.mxu0 0
      %1686 = vmatpush1.bf16.msra.mxu0 0
      %1687 = vmatprep.subr.bf16.mxu0 0
      %1688 = vmatpush1.bf16.msra.mxu0 0
      %1689 = vmatprep.mubr.bf16.mxu0 0
      %1690 = vmatmul.mubr.bf16.gmra.mrb[0].mxu0 %v1652
      %v1691 = vpop.f32.mrb[0].mxu0
      %v1692 = vadd.f32 0.0, %v1691
      %v1693 = vpop.f32.mrb[0].mxu0
      %v1694 = vpop.f32.mrb[0].mxu0
      %v1695 = vpop.f32.mrb[0].mxu0
      %1696 = vdwg.mxu0
      %v1698 = vsel %vm1367, %v1598, 0
      %v1701 = vsel %vm1607, %v1602, 0
      %1703 = vmatprep.subr.bf16.mxu0 0
      %1704 = vmatpush1.bf16.msra.mxu0 %v1701
      %1705 = vmatprep.subr.bf16.mxu0 0
      %1706 = vmatpush1.bf16.msra.mxu0 0
      %1707 = vmatprep.subr.bf16.mxu0 0
      %1708 = vmatpush1.bf16.msra.mxu0 0
      %1709 = vmatprep.subr.bf16.mxu0 0
      %1710 = vmatpush1.bf16.msra.mxu0 0
      %1711 = vmatprep.subr.bf16.mxu0 0
      %1712 = vmatpush1.bf16.msra.mxu0 0
      %1713 = vmatprep.subr.bf16.mxu0 0
      %1714 = vmatpush1.bf16.msra.mxu0 0
      %1715 = vmatprep.subr.bf16.mxu0 0
      %1716 = vmatpush1.bf16.msra.mxu0 0
      %1717 = vmatprep.subr.bf16.mxu0 0
      %1718 = vmatpush1.bf16.msra.mxu0 0
      %1719 = vmatprep.subr.bf16.mxu0 0
      %1720 = vmatpush1.bf16.msra.mxu0 0
      %1721 = vmatprep.subr.bf16.mxu0 0
      %1722 = vmatpush1.bf16.msra.mxu0 0
      %1723 = vmatprep.subr.bf16.mxu0 0
      %1724 = vmatpush1.bf16.msra.mxu0 0
      %1725 = vmatprep.subr.bf16.mxu0 0
      %1726 = vmatpush1.bf16.msra.mxu0 0
      %1727 = vmatprep.subr.bf16.mxu0 0
      %1728 = vmatpush1.bf16.msra.mxu0 0
      %1729 = vmatprep.subr.bf16.mxu0 0
      %1730 = vmatpush1.bf16.msra.mxu0 0
      %1731 = vmatprep.subr.bf16.mxu0 0
      %1732 = vmatpush1.bf16.msra.mxu0 0
      %1733 = vmatprep.subr.bf16.mxu0 0
      %1734 = vmatpush1.bf16.msra.mxu0 0
      %1735 = vmatprep.mubr.bf16.mxu0 0
      %1736 = vmatmul.mubr.bf16.gmra.mrb[0].mxu0 %v1698
      %v1737 = vpop.f32.mrb[0].mxu0
      %v1738 = vadd.f32 0.0, %v1737
      %v1739 = vpop.f32.mrb[0].mxu0
      %v1740 = vpop.f32.mrb[0].mxu0
      %v1741 = vpop.f32.mrb[0].mxu0
      %1742 = vdwg.mxu0
      %v1744 = vsel %vm1367, %v1599, 0
      %v1747 = vsel %vm1607, %v1603, 0
      %1749 = vmatprep.subr.bf16.mxu0 0
      %1750 = vmatpush1.bf16.msra.mxu0 %v1747
      %1751 = vmatprep.subr.bf16.mxu0 0
      %1752 = vmatpush1.bf16.msra.mxu0 0
      %1753 = vmatprep.subr.bf16.mxu0 0
      %1754 = vmatpush1.bf16.msra.mxu0 0
      %1755 = vmatprep.subr.bf16.mxu0 0
      %1756 = vmatpush1.bf16.msra.mxu0 0
      %1757 = vmatprep.subr.bf16.mxu0 0
      %1758 = vmatpush1.bf16.msra.mxu0 0
      %1759 = vmatprep.subr.bf16.mxu0 0
      %1760 = vmatpush1.bf16.msra.mxu0 0
      %1761 = vmatprep.subr.bf16.mxu0 0
      %1762 = vmatpush1.bf16.msra.mxu0 0
      %1763 = vmatprep.subr.bf16.mxu0 0
      %1764 = vmatpush1.bf16.msra.mxu0 0
      %1765 = vmatprep.subr.bf16.mxu0 0
      %1766 = vmatpush1.bf16.msra.mxu0 0
      %1767 = vmatprep.subr.bf16.mxu0 0
      %1768 = vmatpush1.bf16.msra.mxu0 0
      %1769 = vmatprep.subr.bf16.mxu0 0
      %1770 = vmatpush1.bf16.msra.mxu0 0
      %1771 = vmatprep.subr.bf16.mxu0 0
      %1772 = vmatpush1.bf16.msra.mxu0 0
      %1773 = vmatprep.subr.bf16.mxu0 0
      %1774 = vmatpush1.bf16.msra.mxu0 0
      %1775 = vmatprep.subr.bf16.mxu0 0
      %1776 = vmatpush1.bf16.msra.mxu0 0
      %1777 = vmatprep.subr.bf16.mxu0 0
      %1778 = vmatpush1.bf16.msra.mxu0 0
      %1779 = vmatprep.subr.bf16.mxu0 0
      %1780 = vmatpush1.bf16.msra.mxu0 0
      %1781 = vmatprep.mubr.bf16.mxu0 0
      %1782 = vmatmul.mubr.bf16.gmra.mrb[0].mxu0 %v1744
      %v1783 = vpop.f32.mrb[0].mxu0
      %v1784 = vadd.f32 0.0, %v1783
      %v1785 = vpop.f32.mrb[0].mxu0
      %v1786 = vpop.f32.mrb[0].mxu0
      %v1787 = vpop.f32.mrb[0].mxu0
      %1788 = vdwg.mxu0
      %v1789 = vpack.c.bf16 %v1646, %v1646
      %v1790 = vpack.c.bf16 %v1692, %v1692
      %v1791 = vpack.c.bf16 %v1738, %v1738
      %v1792 = vpack.c.bf16 %v1784, %v1784
      %v1793 = vld [vmem:[%s8] sm:$0xf]
      %v1794 = vld [vmem:[%s8 + $0x4] sm:$0xf]
      %v1795 = vld [vmem:[%s8 + $0x8] sm:$0xf]
      %v1796 = vld [vmem:[%s8 + $0xc] sm:$0xf]
      %v1798 = vsel %vm1367, %v1789, 0
      %v1801 = vsel %vm1607, %v1793, 0
      %1803 = vmatprep.subr.bf16.mxu0 0
      %1804 = vmatpush1.bf16.msra.mxu0 %v1801
      %1805 = vmatprep.subr.bf16.mxu0 0
      %1806 = vmatpush1.bf16.msra.mxu0 0
      %1807 = vmatprep.subr.bf16.mxu0 0
      %1808 = vmatpush1.bf16.msra.mxu0 0
      %1809 = vmatprep.subr.bf16.mxu0 0
      %1810 = vmatpush1.bf16.msra.mxu0 0
      %1811 = vmatprep.subr.bf16.mxu0 0
      %1812 = vmatpush1.bf16.msra.mxu0 0
      %1813 = vmatprep.subr.bf16.mxu0 0
      %1814 = vmatpush1.bf16.msra.mxu0 0
      %1815 = vmatprep.subr.bf16.mxu0 0
      %1816 = vmatpush1.bf16.msra.mxu0 0
      %1817 = vmatprep.subr.bf16.mxu0 0
      %1818 = vmatpush1.bf16.msra.mxu0 0
      %1819 = vmatprep.subr.bf16.mxu0 0
      %1820 = vmatpush1.bf16.msra.mxu0 0
      %1821 = vmatprep.subr.bf16.mxu0 0
      %1822 = vmatpush1.bf16.msra.mxu0 0
      %1823 = vmatprep.subr.bf16.mxu0 0
      %1824 = vmatpush1.bf16.msra.mxu0 0
      %1825 = vmatprep.subr.bf16.mxu0 0
      %1826 = vmatpush1.bf16.msra.mxu0 0
      %1827 = vmatprep.subr.bf16.mxu0 0
      %1828 = vmatpush1.bf16.msra.mxu0 0
      %1829 = vmatprep.subr.bf16.mxu0 0
      %1830 = vmatpush1.bf16.msra.mxu0 0
      %1831 = vmatprep.subr.bf16.mxu0 0
      %1832 = vmatpush1.bf16.msra.mxu0 0
      %1833 = vmatprep.subr.bf16.mxu0 0
      %1834 = vmatpush1.bf16.msra.mxu0 0
      %1835 = vmatprep.mubr.bf16.mxu0 0
      %1836 = vmatmul.mubr.bf16.gmra.mrb[0].mxu0 %v1798
      %v1837 = vpop.f32.mrb[0].mxu0
      %v1838 = vadd.f32 0.0, %v1837
      %v1839 = vpop.f32.mrb[0].mxu0
      %v1840 = vpop.f32.mrb[0].mxu0
      %v1841 = vpop.f32.mrb[0].mxu0
      %1842 = vdwg.mxu0
      %v1844 = vsel %vm1367, %v1790, 0
      %v1847 = vsel %vm1607, %v1794, 0
      %1849 = vmatprep.subr.bf16.mxu0 0
      %1850 = vmatpush1.bf16.msra.mxu0 %v1847
      %1851 = vmatprep.subr.bf16.mxu0 0
      %1852 = vmatpush1.bf16.msra.mxu0 0
      %1853 = vmatprep.subr.bf16.mxu0 0
      %1854 = vmatpush1.bf16.msra.mxu0 0
      %1855 = vmatprep.subr.bf16.mxu0 0
      %1856 = vmatpush1.bf16.msra.mxu0 0
      %1857 = vmatprep.subr.bf16.mxu0 0
      %1858 = vmatpush1.bf16.msra.mxu0 0
      %1859 = vmatprep.subr.bf16.mxu0 0
      %1860 = vmatpush1.bf16.msra.mxu0 0
      %1861 = vmatprep.subr.bf16.mxu0 0
      %1862 = vmatpush1.bf16.msra.mxu0 0
      %1863 = vmatprep.subr.bf16.mxu0 0
      %1864 = vmatpush1.bf16.msra.mxu0 0
      %1865 = vmatprep.subr.bf16.mxu0 0
      %1866 = vmatpush1.bf16.msra.mxu0 0
      %1867 = vmatprep.subr.bf16.mxu0 0
      %1868 = vmatpush1.bf16.msra.mxu0 0
      %1869 = vmatprep.subr.bf16.mxu0 0
      %1870 = vmatpush1.bf16.msra.mxu0 0
      %1871 = vmatprep.subr.bf16.mxu0 0
      %1872 = vmatpush1.bf16.msra.mxu0 0
      %1873 = vmatprep.subr.bf16.mxu0 0
      %1874 = vmatpush1.bf16.msra.mxu0 0
      %1875 = vmatprep.subr.bf16.mxu0 0
      %1876 = vmatpush1.bf16.msra.mxu0 0
      %1877 = vmatprep.subr.bf16.mxu0 0
      %1878 = vmatpush1.bf16.msra.mxu0 0
      %1879 = vmatprep.subr.bf16.mxu0 0
      %1880 = vmatpush1.bf16.msra.mxu0 0
      %1881 = vmatprep.mubr.bf16.mxu0 0
      %1882 = vmatmul.mubr.bf16.gmra.mrb[0].mxu0 %v1844
      %v1883 = vpop.f32.mrb[0].mxu0
      %v1884 = vadd.f32 0.0, %v1883
      %v1885 = vpop.f32.mrb[0].mxu0
      %v1886 = vpop.f32.mrb[0].mxu0
      %v1887 = vpop.f32.mrb[0].mxu0
      %1888 = vdwg.mxu0
      %v1890 = vsel %vm1367, %v1791, 0
      %v1893 = vsel %vm1607, %v1795, 0
      %1895 = vmatprep.subr.bf16.mxu0 0
      %1896 = vmatpush1.bf16.msra.mxu0 %v1893
      %1897 = vmatprep.subr.bf16.mxu0 0
      %1898 = vmatpush1.bf16.msra.mxu0 0
      %1899 = vmatprep.subr.bf16.mxu0 0
      %1900 = vmatpush1.bf16.msra.mxu0 0
      %1901 = vmatprep.subr.bf16.mxu0 0
      %1902 = vmatpush1.bf16.msra.mxu0 0
      %1903 = vmatprep.subr.bf16.mxu0 0
      %1904 = vmatpush1.bf16.msra.mxu0 0
      %1905 = vmatprep.subr.bf16.mxu0 0
      %1906 = vmatpush1.bf16.msra.mxu0 0
      %1907 = vmatprep.subr.bf16.mxu0 0
      %1908 = vmatpush1.bf16.msra.mxu0 0
      %1909 = vmatprep.subr.bf16.mxu0 0
      %1910 = vmatpush1.bf16.msra.mxu0 0
      %1911 = vmatprep.subr.bf16.mxu0 0
      %1912 = vmatpush1.bf16.msra.mxu0 0
      %1913 = vmatprep.subr.bf16.mxu0 0
      %1914 = vmatpush1.bf16.msra.mxu0 0
      %1915 = vmatprep.subr.bf16.mxu0 0
      %1916 = vmatpush1.bf16.msra.mxu0 0
      %1917 = vmatprep.subr.bf16.mxu0 0
      %1918 = vmatpush1.bf16.msra.mxu0 0
      %1919 = vmatprep.subr.bf16.mxu0 0
      %1920 = vmatpush1.bf16.msra.mxu0 0
      %1921 = vmatprep.subr.bf16.mxu0 0
      %1922 = vmatpush1.bf16.msra.mxu0 0
      %1923 = vmatprep.subr.bf16.mxu0 0
      %1924 = vmatpush1.bf16.msra.mxu0 0
      %1925 = vmatprep.subr.bf16.mxu0 0
      %1926 = vmatpush1.bf16.msra.mxu0 0
      %1927 = vmatprep.mubr.bf16.mxu0 0
      %1928 = vmatmul.mubr.bf16.gmra.mrb[0].mxu0 %v1890
      %v1929 = vpop.f32.mrb[0].mxu0
      %v1930 = vadd.f32 0.0, %v1929
      %v1931 = vpop.f32.mrb[0].mxu0
      %v1932 = vpop.f32.mrb[0].mxu0
      %v1933 = vpop.f32.mrb[0].mxu0
      %1934 = vdwg.mxu0
      %v1936 = vsel %vm1367, %v1792, 0
      %v1939 = vsel %vm1607, %v1796, 0
      %1941 = vmatprep.subr.bf16.mxu0 0
      %1942 = vmatpush1.bf16.msra.mxu0 %v1939
      %1943 = vmatprep.subr.bf16.mxu0 0
      %1944 = vmatpush1.bf16.msra.mxu0 0
      %1945 = vmatprep.subr.bf16.mxu0 0
      %1946 = vmatpush1.bf16.msra.mxu0 0
      %1947 = vmatprep.subr.bf16.mxu0 0
      %1948 = vmatpush1.bf16.msra.mxu0 0
      %1949 = vmatprep.subr.bf16.mxu0 0
      %1950 = vmatpush1.bf16.msra.mxu0 0
      %1951 = vmatprep.subr.bf16.mxu0 0
      %1952 = vmatpush1.bf16.msra.mxu0 0
      %1953 = vmatprep.subr.bf16.mxu0 0
      %1954 = vmatpush1.bf16.msra.mxu0 0
      %1955 = vmatprep.subr.bf16.mxu0 0
      %1956 = vmatpush1.bf16.msra.mxu0 0
      %1957 = vmatprep.subr.bf16.mxu0 0
      %1958 = vmatpush1.bf16.msra.mxu0 0
      %1959 = vmatprep.subr.bf16.mxu0 0
      %1960 = vmatpush1.bf16.msra.mxu0 0
      %1961 = vmatprep.subr.bf16.mxu0 0
      %1962 = vmatpush1.bf16.msra.mxu0 0
      %1963 = vmatprep.subr.bf16.mxu0 0
      %1964 = vmatpush1.bf16.msra.mxu0 0
      %1965 = vmatprep.subr.bf16.mxu0 0
      %1966 = vmatpush1.bf16.msra.mxu0 0
      %1967 = vmatprep.subr.bf16.mxu0 0
      %1968 = vmatpush1.bf16.msra.mxu0 0
      %1969 = vmatprep.subr.bf16.mxu0 0
      %1970 = vmatpush1.bf16.msra.mxu0 0
      %1971 = vmatprep.subr.bf16.mxu0 0
      %1972 = vmatpush1.bf16.msra.mxu0 0
      %1973 = vmatprep.mubr.bf16.mxu0 0
      %1974 = vmatmul.mubr.bf16.gmra.mrb[0].mxu0 %v1936
      %v1975 = vpop.f32.mrb[0].mxu0
      %v1976 = vadd.f32 0.0, %v1975
      %v1977 = vpop.f32.mrb[0].mxu0
      %v1978 = vpop.f32.mrb[0].mxu0
      %v1979 = vpop.f32.mrb[0].mxu0
      %1980 = vdwg.mxu0
      %v1981 = vsel %vm645, %v1838, 0.0
      %v1982 = vsel %vm645, %v1884, 0.0
      %v1983 = vadd.f32 %v1981, %v1982
      %v1984 = vsel %vm645, %v1930, 0.0
      %v1985 = vadd.f32 %v1983, %v1984
      %v1986 = vsel %vm645, %v1976, 0.0
      %v1987 = vadd.f32 %v1985, %v1986
      %v1988 = vld [vmem:[%s9] sm:$0x1]
      %v1990 = vlaneseq
      %v1991 = vshrl.u32 %v1990, 7
      %v1992 = vsub.s32 0, %v1991
      %v1993 = vrot.slane %v1988, %v1992
      %v1995 = vadd.f32 %v1987, %v1993
      %v1996 = vadd.f32 %v586, %v1995
      %v1997 = vsel %vm645, %v1996, 0.0
      %1998 = vadd.xlane.f32.xlu0 %v1997
      %v1999 = vpop.xlane.xlu0 %1998
      %v2000 = vrcp.pop 32.0
      %v2001 = vmul.f32 %v1999, %v2000
      %v2002 = vsub.f32 %v1996, %v2001
      %v2003 = vmul.f32 %v2002, %v2002
      %v2004 = vsel %vm645, %v2003, 0.0
      %2005 = vadd.xlane.f32.xlu0 %v2004
      %v2006 = vpop.xlane.xlu0 %2005
      %v2007 = vmul.f32 %v2006, %v2000
      %v2008 = vadd.f32 %v2007, 1e-05
      %v2009 = vrsqrt.pop %v2008
      %v2010 = vmul.f32 %v2002, %v2009
      %v2011 = vld [vmem:[%s10] sm:$0x1]
      %v2013 = vlaneseq
      %v2014 = vshrl.u32 %v2013, 7
      %v2015 = vsub.s32 0, %v2014
      %v2016 = vrot.slane %v2011, %v2015
      %v2018 = vmul.f32 %v2010, %v2016
      %v2019 = vld [vmem:[%s11] sm:$0x1]
      %v2021 = vlaneseq
      %v2022 = vshrl.u32 %v2021, 7
      %v2023 = vsub.s32 0, %v2022
      %v2024 = vrot.slane %v2019, %v2023
      %v2026 = vadd.f32 %v2018, %v2024
      %v2027 = vpack.c.bf16 %v2026, %v2026
      %v2028 = vld [vmem:[%s12] sm:$0xf]
      %v2029 = vld [vmem:[%s12 + $0x4] sm:$0xf]
      %v2030 = vld [vmem:[%s12 + $0x8] sm:$0xf]
      %v2031 = vld [vmem:[%s12 + $0xc] sm:$0xf]
      %v2032 = vld [vmem:[%s13] sm:$0x1]
      %v2034 = vlaneseq
      %v2035 = vshrl.u32 %v2034, 7
      %v2036 = vsub.s32 0, %v2035
      %v2037 = vrot.slane %v2032, %v2036
      %v2043 = vunpack.c.l.b16 %v2028
      %v2044 = vunpack.c.l.b16 %v2029
      %v2045 = vunpack.c.l.b16 %v2030
      %v2046 = vunpack.c.l.b16 %v2031
      %v2047 = vpack.c.b16 %v2044, %v2043
      %v2048 = vpack.c.b16 %v2046, %v2045
      %v2052 = vsel %vm645, %v2027, 0
      %2054 = vmatprep.subr.bf16.mxu0 0
      %2055 = vmatpush1.bf16.msra.mxu0 %v2047
      %2056 = vmatprep.subr.bf16.mxu0 0
      %2057 = vmatpush1.bf16.msra.mxu0 %v2048
      %2058 = vmatprep.subr.bf16.mxu0 0
      %2059 = vmatpush1.bf16.msra.mxu0 0
      %2060 = vmatprep.subr.bf16.mxu0 0
      %2061 = vmatpush1.bf16.msra.mxu0 0
      %2062 = vmatprep.subr.bf16.mxu0 0
      %2063 = vmatpush1.bf16.msra.mxu0 0
      %2064 = vmatprep.subr.bf16.mxu0 0
      %2065 = vmatpush1.bf16.msra.mxu0 0
      %2066 = vmatprep.subr.bf16.mxu0 0
      %2067 = vmatpush1.bf16.msra.mxu0 0
      %2068 = vmatprep.subr.bf16.mxu0 0
      %2069 = vmatpush1.bf16.msra.mxu0 0
      %2070 = vmatprep.subr.bf16.mxu0 0
      %2071 = vmatpush1.bf16.msra.mxu0 0
      %2072 = vmatprep.subr.bf16.mxu0 0
      %2073 = vmatpush1.bf16.msra.mxu0 0
      %2074 = vmatprep.subr.bf16.mxu0 0
      %2075 = vmatpush1.bf16.msra.mxu0 0
      %2076 = vmatprep.subr.bf16.mxu0 0
      %2077 = vmatpush1.bf16.msra.mxu0 0
      %2078 = vmatprep.subr.bf16.mxu0 0
      %2079 = vmatpush1.bf16.msra.mxu0 0
      %2080 = vmatprep.subr.bf16.mxu0 0
      %2081 = vmatpush1.bf16.msra.mxu0 0
      %2082 = vmatprep.subr.bf16.mxu0 0
      %2083 = vmatpush1.bf16.msra.mxu0 0
      %2084 = vmatprep.subr.bf16.mxu0 0
      %2085 = vmatpush1.bf16.msra.mxu0 0
      %2086 = vmatprep.mubr.bf16.mxu0 0
      %2087 = vmatmul.mubr.bf16.gmra.mrb[0].mxu0 %v2052
      %v2088 = vpop.f32.mrb[0].mxu0
      %v2089 = vadd.f32 %v2037, %v2088
      %v2090 = vpop.f32.mrb[0].mxu0
      %v2091 = vpop.f32.mrb[0].mxu0
      %v2092 = vpop.f32.mrb[0].mxu0
      %2093 = vdwg.mxu0
      %v2094 = vmul.f32 %v2089, 0.5
      %v2095 = vmul.f32 %v2089, 0.70710677
      %v2096 = vand.u32 2147483647, %v2095
      %v2097 = vmul.f32 %v2096, 0.3275911
      %v2098 = vadd.f32 %v2097, 1.0
      %v2099 = vrcp.pop %v2098
      %v2100 = vmul.f32 1.0, %v2099
      %v2101 = vmul.f32 %v2100, 1.0614054
      %v2102 = vadd.f32 %v2101, -1.4531521
      %v2103 = vmul.f32 %v2102, %v2100
      %v2104 = vadd.f32 %v2103, 1.4214138
      %v2105 = vmul.f32 %v2104, %v2100
      %v2106 = vadd.f32 %v2105, -0.28449672
      %v2107 = vmul.f32 %v2106, %v2100
      %v2108 = vadd.f32 %v2107, 0.2548296
      %v2109 = vmul.f32 %v2108, %v2100
      %v2110 = vsub.f32 0.0, %v2096
      %v2111 = vmul.f32 %v2110, %v2096
      %v2112 = vmul.f32 %v2111, 1.442695
      %v2113 = vpow.pop %v2112
      %v2114 = vmul.f32 %v2109, %v2113
      %v2115 = vsub.f32 1.0, %v2114
      %vm2116 = vcmp.ge.f32.partialorder %v2095, 0.0
      %v2117 = vsub.f32 0.0, %v2115
      %v2118 = vsel %vm2116, %v2115, %v2117
      %v2119 = vadd.f32 %v2118, 1.0
      %v2120 = vmul.f32 %v2094, %v2119
      %v2121 = vpack.c.bf16 %v2120, %v2120
      %v2122 = vld [vmem:[%s14] sm:$0xf]
      %v2123 = vld [vmem:[%s14 + $0x4] sm:$0xf]
      %v2124 = vld [vmem:[%s14 + $0x8] sm:$0xf]
      %v2125 = vld [vmem:[%s14 + $0xc] sm:$0xf]
      %v2126 = vld [vmem:[%s14 + $0x10] sm:$0xf]
      %v2127 = vld [vmem:[%s14 + $0x14] sm:$0xf]
      %v2128 = vld [vmem:[%s14 + $0x18] sm:$0xf]
      %v2129 = vld [vmem:[%s14 + $0x1c] sm:$0xf]
      %v2130 = vld [vmem:[%s15] sm:$0x1]
      %v2132 = vlaneseq
      %v2133 = vshrl.u32 %v2132, 7
      %v2134 = vsub.s32 0, %v2133
      %v2135 = vrot.slane %v2130, %v2134
      %v2145 = vunpack.c.l.b16 %v2122
      %v2146 = vunpack.c.l.b16 %v2123
      %v2147 = vunpack.c.l.b16 %v2124
      %v2148 = vunpack.c.l.b16 %v2125
      %v2149 = vunpack.c.l.b16 %v2126
      %v2150 = vunpack.c.l.b16 %v2127
      %v2151 = vunpack.c.l.b16 %v2128
      %v2152 = vunpack.c.l.b16 %v2129
      %v2153 = vpack.c.b16 %v2146, %v2145
      %v2154 = vpack.c.b16 %v2148, %v2147
      %v2155 = vpack.c.b16 %v2150, %v2149
      %v2156 = vpack.c.b16 %v2152, %v2151
      %vm2161 = vcmask 523264
      %v2163 = vsel %vm2161, %v2121, 0
      %2165 = vmatprep.subr.bf16.mxu0 0
      %2166 = vmatpush1.bf16.msra.mxu0 %v2153
      %2167 = vmatprep.subr.bf16.mxu0 0
      %2168 = vmatpush1.bf16.msra.mxu0 %v2154
      %2169 = vmatprep.subr.bf16.mxu0 0
      %2170 = vmatpush1.bf16.msra.mxu0 %v2155
      %2171 = vmatprep.subr.bf16.mxu0 0
      %2172 = vmatpush1.bf16.msra.mxu0 %v2156
      %2173 = vmatprep.subr.bf16.mxu0 0
      %2174 = vmatpush1.bf16.msra.mxu0 0
      %2175 = vmatprep.subr.bf16.mxu0 0
      %2176 = vmatpush1.bf16.msra.mxu0 0
      %2177 = vmatprep.subr.bf16.mxu0 0
      %2178 = vmatpush1.bf16.msra.mxu0 0
      %2179 = vmatprep.subr.bf16.mxu0 0
      %2180 = vmatpush1.bf16.msra.mxu0 0
      %2181 = vmatprep.subr.bf16.mxu0 0
      %2182 = vmatpush1.bf16.msra.mxu0 0
      %2183 = vmatprep.subr.bf16.mxu0 0
      %2184 = vmatpush1.bf16.msra.mxu0 0
      %2185 = vmatprep.subr.bf16.mxu0 0
      %2186 = vmatpush1.bf16.msra.mxu0 0
      %2187 = vmatprep.subr.bf16.mxu0 0
      %2188 = vmatpush1.bf16.msra.mxu0 0
      %2189 = vmatprep.subr.bf16.mxu0 0
      %2190 = vmatpush1.bf16.msra.mxu0 0
      %2191 = vmatprep.subr.bf16.mxu0 0
      %2192 = vmatpush1.bf16.msra.mxu0 0
      %2193 = vmatprep.subr.bf16.mxu0 0
      %2194 = vmatpush1.bf16.msra.mxu0 0
      %2195 = vmatprep.subr.bf16.mxu0 0
      %2196 = vmatpush1.bf16.msra.mxu0 0
      %2197 = vmatprep.mubr.bf16.mxu0 0
      %2198 = vmatmul.mubr.bf16.gmra.mrb[0].mxu0 %v2163
      %v2199 = vpop.f32.mrb[0].mxu0
      %v2200 = vadd.f32 %v2135, %v2199
      %v2201 = vpop.f32.mrb[0].mxu0
      %v2202 = vpop.f32.mrb[0].mxu0
      %v2203 = vpop.f32.mrb[0].mxu0
      %2204 = vdwg.mxu0
      %v2205 = vadd.f32 %v2026, %v2200
      %v2206 = vsel %vm645, %v2205, 0.0
      %2207 = vadd.xlane.f32.xlu0 %v2206
      %v2208 = vpop.xlane.xlu0 %2207
      %v2209 = vmul.f32 %v2208, %v2000
      %v2210 = vsub.f32 %v2205, %v2209
      %v2211 = vmul.f32 %v2210, %v2210
      %v2212 = vsel %vm645, %v2211, 0.0
      %2213 = vadd.xlane.f32.xlu0 %v2212
      %v2214 = vpop.xlane.xlu0 %2213
      %v2215 = vmul.f32 %v2214, %v2000
      %v2216 = vadd.f32 %v2215, 1e-05
      %v2217 = vrsqrt.pop %v2216
      %v2218 = vmul.f32 %v2210, %v2217
      %v2219 = vld [vmem:[%s16] sm:$0x1]
      %v2221 = vlaneseq
      %v2222 = vshrl.u32 %v2221, 7
      %v2223 = vsub.s32 0, %v2222
      %v2224 = vrot.slane %v2219, %v2223
      %v2226 = vmul.f32 %v2218, %v2224
      %v2227 = vld [vmem:[%s17] sm:$0x1]
      %v2229 = vlaneseq
      %v2230 = vshrl.u32 %v2229, 7
      %v2231 = vsub.s32 0, %v2230
      %v2232 = vrot.slane %v2227, %v2231
      %v2234 = vadd.f32 %v2226, %v2232
      %2235 = vst.msk [vmem:[%s584] sm:$0xff] %vm645, %v2234
      %p2236 = scmp.lt.s32.totalorder %s29, 1
      %s2237 = scalar_select %p2236, %s29, 1
      %s2238 = smul.addr %s2237, 8
      %s2239 = scalar_lea.vmem %s18, %s2238
      // Predicated region
      $region93: #{_lambda_.2} parent=91 // pred_check
        %p2240 = pneg %p435
      $region94: #{_lambda_.2} parent=91 // pred_check_branch
        %2242 = sbr.rel (%p2240) target = $region96
      $region95: #{_lambda_.2} parent=91 // pred_region
        _
      $region96: #{_lambda_.2} parent=91 // pred_fallthru
        _
    $region92: #{_lambda_.2} parent=5 // pred_fallthru
      _
    %p2243 = scmp.le.s32.totalorder 2, %s24
    // Predicated region
    $region97: #{_lambda_.2} parent=5 // pred_check
      %p2244 = pneg %p2243
    $region98: #{_lambda_.2} parent=5 // pred_check_branch
      %2246 = sbr.rel (%p2244) target = $region100
    $region99: #{_lambda_.2} parent=5 // pred_region
      %s2247 = ssub.s32 %s24, 2
      // Predicated region
      $region101: #{_lambda_.2} parent=99 // pred_check
        %p2248 = pneg %p441
      $region102: #{_lambda_.2} parent=99 // pred_check_branch
        %2250 = sbr.rel (%p2248) target = $region104
      $region103: #{_lambda_.2} parent=99 // pred_region
        %p2251 = scmp.lt.s32.totalorder %s30, 1
        %s2252 = scalar_select %p2251, %s30, 1
        %s2253 = smul.addr %s2252, 8
        %s2254 = scalar_lea.vmem %s18, %s2253
      $region104: #{_lambda_.2} parent=99 // pred_fallthru
        _
    $region100: #{_lambda_.2} parent=5 // pred_fallthru
      _
  $region6: #{_lambda_.2} parent=0 // loop_footer
    %s28 = sadd.s32 1, %s24
  $region7: #{_lambda_.2} parent=0 // loop_footer_branch
    %23 = sbr.rel target = $region3
  $region8: #{_lambda_.2} parent=0 // loop_exit
    _

// kernel: _lambda_.3
$region0: #{_lambda_.3}
  #allocation0 [shape = 'u32[]', space=smem, size = 0x4, offset = 0x4, fixed_abs, tag = 'smem constant byte address 0x4 - core index']
  #allocation1 [shape = 'u32[144,128]{1,0:T(1,128)}', space=vmem, size = 0x12000, scoped, tag = 'internal scratch']
  %s0 = inlined_call_operand.hbm [shape: f32[2,8,32], index: 0, kind: input, shape index: {}, may-alias: {0,18}]
  %s1 = inlined_call_operand.vmem [shape: f32[2,1,8], index: 1, kind: input, shape index: {}]
  %s2 = inlined_call_operand.vmem [shape: bf16[4,32,8], index: 2, kind: input, shape index: {}]
  %s3 = inlined_call_operand.vmem [shape: f32[4,1,8], index: 3, kind: input, shape index: {}]
  %s4 = inlined_call_operand.vmem [shape: bf16[4,32,8], index: 4, kind: input, shape index: {}]
  %s5 = inlined_call_operand.vmem [shape: f32[4,1,8], index: 5, kind: input, shape index: {}]
  %s6 = inlined_call_operand.vmem [shape: bf16[4,32,8], index: 6, kind: input, shape index: {}]
  %s7 = inlined_call_operand.vmem [shape: f32[4,1,8], index: 7, kind: input, shape index: {}]
  %s8 = inlined_call_operand.vmem [shape: bf16[4,8,32], index: 8, kind: input, shape index: {}]
  %s9 = inlined_call_operand.vmem [shape: f32[1,32], index: 9, kind: input, shape index: {}]
  %s10 = inlined_call_operand.vmem [shape: f32[1,32], index: 10, kind: input, shape index: {}]
  %s11 = inlined_call_operand.vmem [shape: f32[1,32], index: 11, kind: input, shape index: {}]
  %s12 = inlined_call_operand.vmem [shape: bf16[32,64], index: 12, kind: input, shape index: {}]
  %s13 = inlined_call_operand.vmem [shape: f32[1,64], index: 13, kind: input, shape index: {}]
  %s14 = inlined_call_operand.vmem [shape: bf16[64,32], index: 14, kind: input, shape index: {}]
  %s15 = inlined_call_operand.vmem [shape: f32[1,32], index: 15, kind: input, shape index: {}]
  %s16 = inlined_call_operand.vmem [shape: f32[1,32], index: 16, kind: input, shape index: {}]
  %s17 = inlined_call_operand.vmem [shape: f32[1,32], index: 17, kind: input, shape index: {}]
  %s18 = inlined_call_operand.hbm [shape: f32[2,8,32], index: 18, kind: output, shape index: {}, may-alias: {0,18}]
  %s19 = sld [smem:[#allocation0]]
  $region109: #{_lambda_.3} parent=0
    _
  %s21 = ssub.s32 1, %s19
  %s22 = scalar_select 0, %s21, %s19
  $region1: #{_lambda_.3} parent=0
    #allocation2 [shape = 'u8[8192]{0}', space=vmem, size = 0x2000, scoped, tag = 'input window, operand 0']
    #allocation3 [shape = 's32[2]{0}', space=sflag, size = 0x8, scoped, tag = 'scoped memory for _lambda_.3']
    #allocation4 [shape = 's32[2]{0}', space=sflag, size = 0x8, scoped, tag = 'scoped memory for _lambda_.3']
    #allocation5 [shape = 'u8[8192]{0}', space=vmem, size = 0x2000, scoped, tag = 'output window, operand 0']
    %23 = vsyncpa [#allocation3], 0
    %s24 = scalar_lea.sflag [#allocation3], 1
    %25 = vsyncpa %s24, 0
    %26 = vsyncpa [#allocation4], 0
    %s27 = scalar_lea.sflag [#allocation4], 1
    %28 = vsyncpa %s27, 0
    loop: start=0, step=1, limit=4
    $region2: #{_lambda_.3} parent=1 // loop_pre_header
      _
    $region3: #{_lambda_.3} parent=1 // loop_header
      %s30 = sphi 0, %s34
      %p31 = scmp.ge.s32.totalorder %s30, 4
      %s40 = sphi 0, %s42
      %s43 = sphi 0, %s40
      %s44 = sphi 0, %s43
      %s60 = sphi 0, %s44
      %s66 = sphi 0, %s68
      %s69 = sphi 0, %s66
      %s70 = sphi 0, %s69
      %s86 = sphi 0, %s70
      %s90 = sphi 0, %s90
      %s92 = sphi 0, %s90
      %s93 = sphi 0, %s92
      %s107 = sphi 0, %s93
      %s111 = sphi 0, %s111
      %s113 = sphi 0, %s111
      %s114 = sphi 0, %s113
      %s128 = sphi 0, %s114
      %s132 = sphi 0, %s132
      %s134 = sphi 0, %s132
      %s135 = sphi 0, %s134
      %s149 = sphi 0, %s135
      %s153 = sphi 0, %s153
      %s155 = sphi 0, %s153
      %s156 = sphi 0, %s155
      %s170 = sphi 0, %s156
      %s174 = sphi 0, %s174
      %s176 = sphi 0, %s174
      %s177 = sphi 0, %s176
      %s191 = sphi 0, %s177
      %s195 = sphi 0, %s195
      %s197 = sphi 0, %s195
      %s198 = sphi 0, %s197
      %s212 = sphi 0, %s198
      %s216 = sphi 0, %s216
      %s218 = sphi 0, %s216
      %s219 = sphi 0, %s218
      %s233 = sphi 0, %s219
      %s237 = sphi 0, %s237
      %s239 = sphi 0, %s237
      %s240 = sphi 0, %s239
      %s254 = sphi 0, %s240
      %s258 = sphi 0, %s258
      %s260 = sphi 0, %s258
      %s261 = sphi 0, %s260
      %s275 = sphi 0, %s261
      %s279 = sphi 0, %s279
      %s281 = sphi 0, %s279
      %s282 = sphi 0, %s281
      %s296 = sphi 0, %s282
      %s300 = sphi 0, %s300
      %s302 = sphi 0, %s300
      %s303 = sphi 0, %s302
      %s317 = sphi 0, %s303
      %s321 = sphi 0, %s321
      %s323 = sphi 0, %s321
      %s324 = sphi 0, %s323
      %s338 = sphi 0, %s324
      %s342 = sphi 0, %s342
      %s344 = sphi 0, %s342
      %s345 = sphi 0, %s344
      %s359 = sphi 0, %s345
      %s363 = sphi 0, %s363
      %s365 = sphi 0, %s363
      %s366 = sphi 0, %s365
      %s380 = sphi 0, %s366
      %s384 = sphi 0, %s384
      %s386 = sphi 0, %s384
      %s387 = sphi 0, %s386
      %s401 = sphi 0, %s387
      %s405 = sphi 0, %s405
      %s407 = sphi 0, %s405
      %s408 = sphi 0, %s407
      %s422 = sphi 0, %s408
      %s428 = sphi 0, %s430
      %s431 = sphi 0, %s428
      %s432 = sphi 0, %s431
      %s448 = sphi 0, %s432
    $region4: #{_lambda_.3} parent=1 // loop_header_branch
      %33 = sbr.rel (%p31) target = $region8
    $region5: #{_lambda_.3} parent=1 // loop_body
      %s35 = ssub.s32 %s30, 1
      %s36 = ssub.s32 %s30, 2
      %s37 = sadd.s32 %s30, 1
      %s38 = ssub.s32 %s30, %s37
      %p39 = scmp.eq.s32.totalorder %s38, 0
      %s41 = sadd.s32 %s40, 1
      %s42 = scalar_select %p39, %s40, %s41
      %p45 = pneg %p39
      %p46 = scmp.eq.s32.totalorder %s30, 1
      %p47 = por %p45, %p46
      %p48 = scmp.ne.s32.totalorder %s40, %s43
      %p49 = scmp.eq.s32.totalorder %s30, 0
      %p50 = por %p48, %p49
      %p51 = scmp.ne.s32.totalorder %s40, %s43
      %p52 = scmp.eq.s32.totalorder %s35, 1
      %p53 = por %p51, %p52
      %p54 = scmp.ne.s32.totalorder %s43, %s44
      %p55 = scmp.eq.s32.totalorder %s35, 0
      %p56 = por %p54, %p55
      %p57 = scmp.ne.s32.totalorder %s43, %s44
      %p58 = scmp.eq.s32.totalorder %s36, 1
      %p59 = por %p57, %p58
      %p61 = scmp.ne.s32.totalorder %s44, %s60
      %p62 = scmp.eq.s32.totalorder %s36, 0
      %p63 = por %p61, %p62
      %s64 = ssub.s32 %s30, %s37
      %p65 = scmp.eq.s32.totalorder %s64, 0
      %s67 = sadd.s32 %s66, 1
      %s68 = scalar_select %p65, %s66, %s67
      %p71 = pneg %p65
      %p72 = scmp.eq.s32.totalorder %s30, 1
      %p73 = por %p71, %p72
      %p74 = scmp.ne.s32.totalorder %s66, %s69
      %p75 = scmp.eq.s32.totalorder %s30, 0
      %p76 = por %p74, %p75
      %p77 = scmp.ne.s32.totalorder %s66, %s69
      %p78 = scmp.eq.s32.totalorder %s35, 1
      %p79 = por %p77, %p78
      %p80 = scmp.ne.s32.totalorder %s69, %s70
      %p81 = scmp.eq.s32.totalorder %s35, 0
      %p82 = por %p80, %p81
      %p83 = scmp.ne.s32.totalorder %s69, %s70
      %p84 = scmp.eq.s32.totalorder %s36, 1
      %p85 = por %p83, %p84
      %p87 = scmp.ne.s32.totalorder %s70, %s86
      %p88 = scmp.eq.s32.totalorder %s36, 0
      %p89 = por %p87, %p88
      %s91 = sadd.s32 %s90, 1
      %p94 = scmp.eq.s32.totalorder %s30, 1
      %p95 = scmp.ne.s32.totalorder %s90, %s92
      %p96 = scmp.eq.s32.totalorder %s30, 0
      %p97 = por %p95, %p96
      %p98 = scmp.ne.s32.totalorder %s90, %s92
      %p99 = scmp.eq.s32.totalorder %s35, 1
      %p100 = por %p98, %p99
      %p101 = scmp.ne.s32.totalorder %s92, %s93
      %p102 = scmp.eq.s32.totalorder %s35, 0
      %p103 = por %p101, %p102
      %p104 = scmp.ne.s32.totalorder %s92, %s93
      %p105 = scmp.eq.s32.totalorder %s36, 1
      %p106 = por %p104, %p105
      %p108 = scmp.ne.s32.totalorder %s93, %s107
      %p109 = scmp.eq.s32.totalorder %s36, 0
      %p110 = por %p108, %p109
      %s112 = sadd.s32 %s111, 1
      %p115 = scmp.eq.s32.totalorder %s30, 1
      %p116 = scmp.ne.s32.totalorder %s111, %s113
      %p117 = scmp.eq.s32.totalorder %s30, 0
      %p118 = por %p116, %p117
      %p119 = scmp.ne.s32.totalorder %s111, %s113
      %p120 = scmp.eq.s32.totalorder %s35, 1
      %p121 = por %p119, %p120
      %p122 = scmp.ne.s32.totalorder %s113, %s114
      %p123 = scmp.eq.s32.totalorder %s35, 0
      %p124 = por %p122, %p123
      %p125 = scmp.ne.s32.totalorder %s113, %s114
      %p126 = scmp.eq.s32.totalorder %s36, 1
      %p127 = por %p125, %p126
      %p129 = scmp.ne.s32.totalorder %s114, %s128
      %p130 = scmp.eq.s32.totalorder %s36, 0
      %p131 = por %p129, %p130
      %s133 = sadd.s32 %s132, 1
      %p136 = scmp.eq.s32.totalorder %s30, 1
      %p137 = scmp.ne.s32.totalorder %s132, %s134
      %p138 = scmp.eq.s32.totalorder %s30, 0
      %p139 = por %p137, %p138
      %p140 = scmp.ne.s32.totalorder %s132, %s134
      %p141 = scmp.eq.s32.totalorder %s35, 1
      %p142 = por %p140, %p141
      %p143 = scmp.ne.s32.totalorder %s134, %s135
      %p144 = scmp.eq.s32.totalorder %s35, 0
      %p145 = por %p143, %p144
      %p146 = scmp.ne.s32.totalorder %s134, %s135
      %p147 = scmp.eq.s32.totalorder %s36, 1
      %p148 = por %p146, %p147
      %p150 = scmp.ne.s32.totalorder %s135, %s149
      %p151 = scmp.eq.s32.totalorder %s36, 0
      %p152 = por %p150, %p151
      %s154 = sadd.s32 %s153, 1
      %p157 = scmp.eq.s32.totalorder %s30, 1
      %p158 = scmp.ne.s32.totalorder %s153, %s155
      %p159 = scmp.eq.s32.totalorder %s30, 0
      %p160 = por %p158, %p159
      %p161 = scmp.ne.s32.totalorder %s153, %s155
      %p162 = scmp.eq.s32.totalorder %s35, 1
      %p163 = por %p161, %p162
      %p164 = scmp.ne.s32.totalorder %s155, %s156
      %p165 = scmp.eq.s32.totalorder %s35, 0
      %p166 = por %p164, %p165
      %p167 = scmp.ne.s32.totalorder %s155, %s156
      %p168 = scmp.eq.s32.totalorder %s36, 1
      %p169 = por %p167, %p168
      %p171 = scmp.ne.s32.totalorder %s156, %s170
      %p172 = scmp.eq.s32.totalorder %s36, 0
      %p173 = por %p171, %p172
      %s175 = sadd.s32 %s174, 1
      %p178 = scmp.eq.s32.totalorder %s30, 1
      %p179 = scmp.ne.s32.totalorder %s174, %s176
      %p180 = scmp.eq.s32.totalorder %s30, 0
      %p181 = por %p179, %p180
      %p182 = scmp.ne.s32.totalorder %s174, %s176
      %p183 = scmp.eq.s32.totalorder %s35, 1
      %p184 = por %p182, %p183
      %p185 = scmp.ne.s32.totalorder %s176, %s177
      %p186 = scmp.eq.s32.totalorder %s35, 0
      %p187 = por %p185, %p186
      %p188 = scmp.ne.s32.totalorder %s176, %s177
      %p189 = scmp.eq.s32.totalorder %s36, 1
      %p190 = por %p188, %p189
      %p192 = scmp.ne.s32.totalorder %s177, %s191
      %p193 = scmp.eq.s32.totalorder %s36, 0
      %p194 = por %p192, %p193
      %s196 = sadd.s32 %s195, 1
      %p199 = scmp.eq.s32.totalorder %s30, 1
      %p200 = scmp.ne.s32.totalorder %s195, %s197
      %p201 = scmp.eq.s32.totalorder %s30, 0
      %p202 = por %p200, %p201
      %p203 = scmp.ne.s32.totalorder %s195, %s197
      %p204 = scmp.eq.s32.totalorder %s35, 1
      %p205 = por %p203, %p204
      %p206 = scmp.ne.s32.totalorder %s197, %s198
      %p207 = scmp.eq.s32.totalorder %s35, 0
      %p208 = por %p206, %p207
      %p209 = scmp.ne.s32.totalorder %s197, %s198
      %p210 = scmp.eq.s32.totalorder %s36, 1
      %p211 = por %p209, %p210
      %p213 = scmp.ne.s32.totalorder %s198, %s212
      %p214 = scmp.eq.s32.totalorder %s36, 0
      %p215 = por %p213, %p214
      %s217 = sadd.s32 %s216, 1
      %p220 = scmp.eq.s32.totalorder %s30, 1
      %p221 = scmp.ne.s32.totalorder %s216, %s218
      %p222 = scmp.eq.s32.totalorder %s30, 0
      %p223 = por %p221, %p222
      %p224 = scmp.ne.s32.totalorder %s216, %s218
      %p225 = scmp.eq.s32.totalorder %s35, 1
      %p226 = por %p224, %p225
      %p227 = scmp.ne.s32.totalorder %s218, %s219
      %p228 = scmp.eq.s32.totalorder %s35, 0
      %p229 = por %p227, %p228
      %p230 = scmp.ne.s32.totalorder %s218, %s219
      %p231 = scmp.eq.s32.totalorder %s36, 1
      %p232 = por %p230, %p231
      %p234 = scmp.ne.s32.totalorder %s219, %s233
      %p235 = scmp.eq.s32.totalorder %s36, 0
      %p236 = por %p234, %p235
      %s238 = sadd.s32 %s237, 1
      %p241 = scmp.eq.s32.totalorder %s30, 1
      %p242 = scmp.ne.s32.totalorder %s237, %s239
      %p243 = scmp.eq.s32.totalorder %s30, 0
      %p244 = por %p242, %p243
      %p245 = scmp.ne.s32.totalorder %s237, %s239
      %p246 = scmp.eq.s32.totalorder %s35, 1
      %p247 = por %p245, %p246
      %p248 = scmp.ne.s32.totalorder %s239, %s240
      %p249 = scmp.eq.s32.totalorder %s35, 0
      %p250 = por %p248, %p249
      %p251 = scmp.ne.s32.totalorder %s239, %s240
      %p252 = scmp.eq.s32.totalorder %s36, 1
      %p253 = por %p251, %p252
      %p255 = scmp.ne.s32.totalorder %s240, %s254
      %p256 = scmp.eq.s32.totalorder %s36, 0
      %p257 = por %p255, %p256
      %s259 = sadd.s32 %s258, 1
      %p262 = scmp.eq.s32.totalorder %s30, 1
      %p263 = scmp.ne.s32.totalorder %s258, %s260
      %p264 = scmp.eq.s32.totalorder %s30, 0
      %p265 = por %p263, %p264
      %p266 = scmp.ne.s32.totalorder %s258, %s260
      %p267 = scmp.eq.s32.totalorder %s35, 1
      %p268 = por %p266, %p267
      %p269 = scmp.ne.s32.totalorder %s260, %s261
      %p270 = scmp.eq.s32.totalorder %s35, 0
      %p271 = por %p269, %p270
      %p272 = scmp.ne.s32.totalorder %s260, %s261
      %p273 = scmp.eq.s32.totalorder %s36, 1
      %p274 = por %p272, %p273
      %p276 = scmp.ne.s32.totalorder %s261, %s275
      %p277 = scmp.eq.s32.totalorder %s36, 0
      %p278 = por %p276, %p277
      %s280 = sadd.s32 %s279, 1
      %p283 = scmp.eq.s32.totalorder %s30, 1
      %p284 = scmp.ne.s32.totalorder %s279, %s281
      %p285 = scmp.eq.s32.totalorder %s30, 0
      %p286 = por %p284, %p285
      %p287 = scmp.ne.s32.totalorder %s279, %s281
      %p288 = scmp.eq.s32.totalorder %s35, 1
      %p289 = por %p287, %p288
      %p290 = scmp.ne.s32.totalorder %s281, %s282
      %p291 = scmp.eq.s32.totalorder %s35, 0
      %p292 = por %p290, %p291
      %p293 = scmp.ne.s32.totalorder %s281, %s282
      %p294 = scmp.eq.s32.totalorder %s36, 1
      %p295 = por %p293, %p294
      %p297 = scmp.ne.s32.totalorder %s282, %s296
      %p298 = scmp.eq.s32.totalorder %s36, 0
      %p299 = por %p297, %p298
      %s301 = sadd.s32 %s300, 1
      %p304 = scmp.eq.s32.totalorder %s30, 1
      %p305 = scmp.ne.s32.totalorder %s300, %s302
      %p306 = scmp.eq.s32.totalorder %s30, 0
      %p307 = por %p305, %p306
      %p308 = scmp.ne.s32.totalorder %s300, %s302
      %p309 = scmp.eq.s32.totalorder %s35, 1
      %p310 = por %p308, %p309
      %p311 = scmp.ne.s32.totalorder %s302, %s303
      %p312 = scmp.eq.s32.totalorder %s35, 0
      %p313 = por %p311, %p312
      %p314 = scmp.ne.s32.totalorder %s302, %s303
      %p315 = scmp.eq.s32.totalorder %s36, 1
      %p316 = por %p314, %p315
      %p318 = scmp.ne.s32.totalorder %s303, %s317
      %p319 = scmp.eq.s32.totalorder %s36, 0
      %p320 = por %p318, %p319
      %s322 = sadd.s32 %s321, 1
      %p325 = scmp.eq.s32.totalorder %s30, 1
      %p326 = scmp.ne.s32.totalorder %s321, %s323
      %p327 = scmp.eq.s32.totalorder %s30, 0
      %p328 = por %p326, %p327
      %p329 = scmp.ne.s32.totalorder %s321, %s323
      %p330 = scmp.eq.s32.totalorder %s35, 1
      %p331 = por %p329, %p330
      %p332 = scmp.ne.s32.totalorder %s323, %s324
      %p333 = scmp.eq.s32.totalorder %s35, 0
      %p334 = por %p332, %p333
      %p335 = scmp.ne.s32.totalorder %s323, %s324
      %p336 = scmp.eq.s32.totalorder %s36, 1
      %p337 = por %p335, %p336
      %p339 = scmp.ne.s32.totalorder %s324, %s338
      %p340 = scmp.eq.s32.totalorder %s36, 0
      %p341 = por %p339, %p340
      %s343 = sadd.s32 %s342, 1
      %p346 = scmp.eq.s32.totalorder %s30, 1
      %p347 = scmp.ne.s32.totalorder %s342, %s344
      %p348 = scmp.eq.s32.totalorder %s30, 0
      %p349 = por %p347, %p348
      %p350 = scmp.ne.s32.totalorder %s342, %s344
      %p351 = scmp.eq.s32.totalorder %s35, 1
      %p352 = por %p350, %p351
      %p353 = scmp.ne.s32.totalorder %s344, %s345
      %p354 = scmp.eq.s32.totalorder %s35, 0
      %p355 = por %p353, %p354
      %p356 = scmp.ne.s32.totalorder %s344, %s345
      %p357 = scmp.eq.s32.totalorder %s36, 1
      %p358 = por %p356, %p357
      %p360 = scmp.ne.s32.totalorder %s345, %s359
      %p361 = scmp.eq.s32.totalorder %s36, 0
      %p362 = por %p360, %p361
      %s364 = sadd.s32 %s363, 1
      %p367 = scmp.eq.s32.totalorder %s30, 1
      %p368 = scmp.ne.s32.totalorder %s363, %s365
      %p369 = scmp.eq.s32.totalorder %s30, 0
      %p370 = por %p368, %p369
      %p371 = scmp.ne.s32.totalorder %s363, %s365
      %p372 = scmp.eq.s32.totalorder %s35, 1
      %p373 = por %p371, %p372
      %p374 = scmp.ne.s32.totalorder %s365, %s366
      %p375 = scmp.eq.s32.totalorder %s35, 0
      %p376 = por %p374, %p375
      %p377 = scmp.ne.s32.totalorder %s365, %s366
      %p378 = scmp.eq.s32.totalorder %s36, 1
      %p379 = por %p377, %p378
      %p381 = scmp.ne.s32.totalorder %s366, %s380
      %p382 = scmp.eq.s32.totalorder %s36, 0
      %p383 = por %p381, %p382
      %s385 = sadd.s32 %s384, 1
      %p388 = scmp.eq.s32.totalorder %s30, 1
      %p389 = scmp.ne.s32.totalorder %s384, %s386
      %p390 = scmp.eq.s32.totalorder %s30, 0
      %p391 = por %p389, %p390
      %p392 = scmp.ne.s32.totalorder %s384, %s386
      %p393 = scmp.eq.s32.totalorder %s35, 1
      %p394 = por %p392, %p393
      %p395 = scmp.ne.s32.totalorder %s386, %s387
      %p396 = scmp.eq.s32.totalorder %s35, 0
      %p397 = por %p395, %p396
      %p398 = scmp.ne.s32.totalorder %s386, %s387
      %p399 = scmp.eq.s32.totalorder %s36, 1
      %p400 = por %p398, %p399
      %p402 = scmp.ne.s32.totalorder %s387, %s401
      %p403 = scmp.eq.s32.totalorder %s36, 0
      %p404 = por %p402, %p403
      %s406 = sadd.s32 %s405, 1
      %p409 = scmp.eq.s32.totalorder %s30, 1
      %p410 = scmp.ne.s32.totalorder %s405, %s407
      %p411 = scmp.eq.s32.totalorder %s30, 0
      %p412 = por %p410, %p411
      %p413 = scmp.ne.s32.totalorder %s405, %s407
      %p414 = scmp.eq.s32.totalorder %s35, 1
      %p415 = por %p413, %p414
      %p416 = scmp.ne.s32.totalorder %s407, %s408
      %p417 = scmp.eq.s32.totalorder %s35, 0
      %p418 = por %p416, %p417
      %p419 = scmp.ne.s32.totalorder %s407, %s408
      %p420 = scmp.eq.s32.totalorder %s36, 1
      %p421 = por %p419, %p420
      %p423 = scmp.ne.s32.totalorder %s408, %s422
      %p424 = scmp.eq.s32.totalorder %s36, 0
      %p425 = por %p423, %p424
      %s426 = ssub.s32 %s30, %s37
      %p427 = scmp.eq.s32.totalorder %s426, 0
      %s429 = sadd.s32 %s428, 1
      %s430 = scalar_select %p427, %s428, %s429
      %p433 = pneg %p427
      %p434 = scmp.eq.s32.totalorder %s30, 1
      %p435 = por %p433, %p434
      %p436 = scmp.ne.s32.totalorder %s428, %s431
      %p437 = scmp.eq.s32.totalorder %s30, 0
      %p438 = por %p436, %p437
      %p439 = scmp.ne.s32.totalorder %s428, %s431
      %p440 = scmp.eq.s32.totalorder %s35, 1
      %p441 = por %p439, %p440
      %p442 = scmp.ne.s32.totalorder %s431, %s432
      %p443 = scmp.eq.s32.totalorder %s35, 0
      %p444 = por %p442, %p443
      %p445 = scmp.ne.s32.totalorder %s431, %s432
      %p446 = scmp.eq.s32.totalorder %s36, 1
      %p447 = por %p445, %p446
      %p449 = scmp.ne.s32.totalorder %s432, %s448
      %p450 = scmp.eq.s32.totalorder %s36, 0
      %p451 = por %p449, %p450
      %p452 = scmp.le.s32.totalorder 1, %s30
      %p453 = scmp.lt.s32.totalorder %s30, 3
      %p454 = pnand %p452, %p453
      %p455 = pneg %p454
      // Predicated region
      $region9: #{_lambda_.3} parent=5 // pred_check
        _
      $region10: #{_lambda_.3} parent=5 // pred_check_branch
        %457 = sbr.rel (%p454) target = $region12
      $region11: #{_lambda_.3} parent=5 // pred_region
        %s458 = ssub.s32 %s30, 1
        // Predicated region
        $region13: #{_lambda_.3} parent=11 // pred_check
          %p459 = pneg %p103
        $region14: #{_lambda_.3} parent=11 // pred_check_branch
          %461 = sbr.rel (%p459) target = $region16
        $region15: #{_lambda_.3} parent=11 // pred_region
          _
        $region16: #{_lambda_.3} parent=11 // pred_fallthru
          _
        // Predicated region
        $region17: #{_lambda_.3} parent=11 // pred_check
          %p462 = pneg %p124
        $region18: #{_lambda_.3} parent=11 // pred_check_branch
          %464 = sbr.rel (%p462) target = $region20
        $region19: #{_lambda_.3} parent=11 // pred_region
          _
        $region20: #{_lambda_.3} parent=11 // pred_fallthru
          _
        // Predicated region
        $region21: #{_lambda_.3} parent=11 // pred_check
          %p465 = pneg %p145
        $region22: #{_lambda_.3} parent=11 // pred_check_branch
          %467 = sbr.rel (%p465) target = $region24
        $region23: #{_lambda_.3} parent=11 // pred_region
          _
        $region24: #{_lambda_.3} parent=11 // pred_fallthru
          _
        // Predicated region
        $region25: #{_lambda_.3} parent=11 // pred_check
          %p468 = pneg %p166
        $region26: #{_lambda_.3} parent=11 // pred_check_branch
          %470 = sbr.rel (%p468) target = $region28
        $region27: #{_lambda_.3} parent=11 // pred_region
          _
        $region28: #{_lambda_.3} parent=11 // pred_fallthru
          _
        // Predicated region
        $region29: #{_lambda_.3} parent=11 // pred_check
          %p471 = pneg %p187
        $region30: #{_lambda_.3} parent=11 // pred_check_branch
          %473 = sbr.rel (%p471) target = $region32
        $region31: #{_lambda_.3} parent=11 // pred_region
          _
        $region32: #{_lambda_.3} parent=11 // pred_fallthru
          _
        // Predicated region
        $region33: #{_lambda_.3} parent=11 // pred_check
          %p474 = pneg %p208
        $region34: #{_lambda_.3} parent=11 // pred_check_branch
          %476 = sbr.rel (%p474) target = $region36
        $region35: #{_lambda_.3} parent=11 // pred_region
          _
        $region36: #{_lambda_.3} parent=11 // pred_fallthru
          _
        // Predicated region
        $region37: #{_lambda_.3} parent=11 // pred_check
          %p477 = pneg %p229
        $region38: #{_lambda_.3} parent=11 // pred_check_branch
          %479 = sbr.rel (%p477) target = $region40
        $region39: #{_lambda_.3} parent=11 // pred_region
          _
        $region40: #{_lambda_.3} parent=11 // pred_fallthru
          _
        // Predicated region
        $region41: #{_lambda_.3} parent=11 // pred_check
          %p480 = pneg %p250
        $region42: #{_lambda_.3} parent=11 // pred_check_branch
          %482 = sbr.rel (%p480) target = $region44
        $region43: #{_lambda_.3} parent=11 // pred_region
          _
        $region44: #{_lambda_.3} parent=11 // pred_fallthru
          _
        // Predicated region
        $region45: #{_lambda_.3} parent=11 // pred_check
          %p483 = pneg %p271
        $region46: #{_lambda_.3} parent=11 // pred_check_branch
          %485 = sbr.rel (%p483) target = $region48
        $region47: #{_lambda_.3} parent=11 // pred_region
          _
        $region48: #{_lambda_.3} parent=11 // pred_fallthru
          _
        // Predicated region
        $region49: #{_lambda_.3} parent=11 // pred_check
          %p486 = pneg %p292
        $region50: #{_lambda_.3} parent=11 // pred_check_branch
          %488 = sbr.rel (%p486) target = $region52
        $region51: #{_lambda_.3} parent=11 // pred_region
          _
        $region52: #{_lambda_.3} parent=11 // pred_fallthru
          _
        // Predicated region
        $region53: #{_lambda_.3} parent=11 // pred_check
          %p489 = pneg %p313
        $region54: #{_lambda_.3} parent=11 // pred_check_branch
          %491 = sbr.rel (%p489) target = $region56
        $region55: #{_lambda_.3} parent=11 // pred_region
          _
        $region56: #{_lambda_.3} parent=11 // pred_fallthru
          _
        // Predicated region
        $region57: #{_lambda_.3} parent=11 // pred_check
          %p492 = pneg %p334
        $region58: #{_lambda_.3} parent=11 // pred_check_branch
          %494 = sbr.rel (%p492) target = $region60
        $region59: #{_lambda_.3} parent=11 // pred_region
          _
        $region60: #{_lambda_.3} parent=11 // pred_fallthru
          _
        // Predicated region
        $region61: #{_lambda_.3} parent=11 // pred_check
          %p495 = pneg %p355
        $region62: #{_lambda_.3} parent=11 // pred_check_branch
          %497 = sbr.rel (%p495) target = $region64
        $region63: #{_lambda_.3} parent=11 // pred_region
          _
        $region64: #{_lambda_.3} parent=11 // pred_fallthru
          _
        // Predicated region
        $region65: #{_lambda_.3} parent=11 // pred_check
          %p498 = pneg %p376
        $region66: #{_lambda_.3} parent=11 // pred_check_branch
          %500 = sbr.rel (%p498) target = $region68
        $region67: #{_lambda_.3} parent=11 // pred_region
          _
        $region68: #{_lambda_.3} parent=11 // pred_fallthru
          _
        // Predicated region
        $region69: #{_lambda_.3} parent=11 // pred_check
          %p501 = pneg %p397
        $region70: #{_lambda_.3} parent=11 // pred_check_branch
          %503 = sbr.rel (%p501) target = $region72
        $region71: #{_lambda_.3} parent=11 // pred_region
          _
        $region72: #{_lambda_.3} parent=11 // pred_fallthru
          _
        // Predicated region
        $region73: #{_lambda_.3} parent=11 // pred_check
          %p504 = pneg %p418
        $region74: #{_lambda_.3} parent=11 // pred_check_branch
          %506 = sbr.rel (%p504) target = $region76
        $region75: #{_lambda_.3} parent=11 // pred_region
          _
        $region76: #{_lambda_.3} parent=11 // pred_fallthru
          _
      $region12: #{_lambda_.3} parent=5 // pred_fallthru
        _
      %p507 = scmp.lt.s32.totalorder %s30, 2
      // Predicated region
      $region77: #{_lambda_.3} parent=5 // pred_check
        %p508 = pneg %p507
      $region78: #{_lambda_.3} parent=5 // pred_check_branch
        %510 = sbr.rel (%p508) target = $region80
      $region79: #{_lambda_.3} parent=5 // pred_region
        // Predicated region
        $region81: #{_lambda_.3} parent=79 // pred_check
          %p511 = pneg %p50
        $region82: #{_lambda_.3} parent=79 // pred_check_branch
          %513 = sbr.rel (%p511) target = $region84
        $region83: #{_lambda_.3} parent=79 // pred_region
          %s514 = sand.u32 %s40, 1
          %s515 = scalar_lea.sflag [#allocation3], %s514
          %s516 = sand.u32 %s40, 1
          %s517 = smul.addr %s516, 8
          %s518 = scalar_lea.vmem [#allocation2], %s517
          %s520 = ssub.s32 128, 128
          %521 = vsyncadd %s515, %s520
          %s522 = smul.addr %s30, 128
          %s523 = scalar_lea.hbm %s0, %s522
          %s525 = sshll.u32 %s518, 4
          %s526 = int_to_ptr.vmem [resolvable:$true] %s525
          %528 = dma.hbm_to_vmem [thread:$0]  %s523, 128, %s526, %s515
        $region84: #{_lambda_.3} parent=79 // pred_fallthru
          _
        // Predicated region
        $region85: #{_lambda_.3} parent=79 // pred_check
          %p529 = pneg %p76
        $region86: #{_lambda_.3} parent=79 // pred_check_branch
          %531 = sbr.rel (%p529) target = $region88
        $region87: #{_lambda_.3} parent=79 // pred_region
          %p532 = scmp.lt.s32.totalorder %s30, 1
          %s533 = scalar_select %p532, %s30, 1
          %s534 = scalar_lea.vmem %s1, %s533
        $region88: #{_lambda_.3} parent=79 // pred_fallthru
          _
      $region80: #{_lambda_.3} parent=5 // pred_fallthru
        _
      %p535 = scmp.le.s32.totalorder 1, %s30
      %p536 = scmp.lt.s32.totalorder %s30, 3
      %p537 = pnand %p535, %p536
      %p538 = pneg %p537
      // Predicated region
      $region89: #{_lambda_.3} parent=5 // pred_check
        _
      $region90: #{_lambda_.3} parent=5 // pred_check_branch
        %540 = sbr.rel (%p537) target = $region92
      $region91: #{_lambda_.3} parent=5 // pred_region
        %s541 = ssub.s32 %s30, 1
        %s542 = sand.u32 %s43, 1
        %s543 = scalar_lea.sflag [#allocation3], %s542
        %s544 = sand.u32 %s43, 1
        %s545 = smul.addr %s544, 8
        %s546 = scalar_lea.vmem [#allocation2], %s545
        // Predicated region
        $region93: #{_lambda_.3} parent=91 // pred_check
          %p547 = pneg %p56
        $region94: #{_lambda_.3} parent=91 // pred_check_branch
          %549 = sbr.rel (%p547) target = $region96
        $region95: #{_lambda_.3} parent=91 // pred_region
          %550 = dma.done %s543, 128
        $region96: #{_lambda_.3} parent=91 // pred_fallthru
          _
        %s551 = sand.u32 %s43, 1
        %s552 = scalar_lea.sflag [#allocation3], %s551
        %s553 = sand.u32 %s43, 1
        %s554 = smul.addr %s553, 8
        %s555 = scalar_lea.vmem [#allocation2], %s554
        %p556 = pneg %p56
        %p557 = pneg %p53
        %p558 = scmp.lt.s32.totalorder %s35, 1
        %s559 = scalar_select %p558, %s35, 1
        %s560 = scalar_lea.vmem %s1, %s559
        %p561 = pneg %p82
        %p562 = pneg %p79
        %p563 = pneg %p103
        %p564 = pneg %p100
        %p565 = pneg %p124
        %p566 = pneg %p121
        %p567 = pneg %p145
        %p568 = pneg %p142
        %p569 = pneg %p166
        %p570 = pneg %p163
        %p571 = pneg %p187
        %p572 = pneg %p184
        %p573 = pneg %p208
        %p574 = pneg %p205
        %p575 = pneg %p229
        %p576 = pneg %p226
        %p577 = pneg %p250
        %p578 = pneg %p247
        %p579 = pneg %p271
        %p580 = pneg %p268
        %p581 = pneg %p292
        %p582 = pneg %p289
        %p583 = pneg %p313
        %p584 = pneg %p310
        %p585 = pneg %p334
        %p586 = pneg %p331
        %p587 = pneg %p355
        %p588 = pneg %p352
        %p589 = pneg %p376
        %p590 = pneg %p373
        %p591 = pneg %p397
        %p592 = pneg %p394
        %p593 = pneg %p418
        %p594 = pneg %p415
        %p595 = pneg %p444
        %p596 = pneg %p441
        %s597 = sand.u32 %s431, 1
        %s598 = scalar_lea.sflag [#allocation4], %s597
        %s599 = sand.u32 %s431, 1
        %s600 = smul.addr %s599, 8
        %s601 = scalar_lea.vmem [#allocation5], %s600
        %p602 = scmp.lt.s32.totalorder %s35, 1
        %s603 = scalar_select %p602, %s35, 1
        %s604 = scalar_lea.vmem %s1, %s603
        %v606 = vld [vmem:[%s546] sm:$0xff]
        %v607 = vld [vmem:[%s604] sm:$0x1]
        %v608 = vpack.c.bf16 %v606, %v606
        %v609 = vld [vmem:[%s2] sm:$0xf]
        %v610 = vld [vmem:[%s2 + $0x4] sm:$0xf]
        %v611 = vld [vmem:[%s2 + $0x8] sm:$0xf]
        %v612 = vld [vmem:[%s2 + $0xc] sm:$0xf]
        %v613 = vld [vmem:[%s2 + $0x10] sm:$0xf]
        %v614 = vld [vmem:[%s2 + $0x14] sm:$0xf]
        %v615 = vld [vmem:[%s2 + $0x18] sm:$0xf]
        %v616 = vld [vmem:[%s2 + $0x1c] sm:$0xf]
        %v617 = vld [vmem:[%s2 + $0x20] sm:$0xf]
        %v618 = vld [vmem:[%s2 + $0x24] sm:$0xf]
        %v619 = vld [vmem:[%s2 + $0x28] sm:$0xf]
        %v620 = vld [vmem:[%s2 + $0x2c] sm:$0xf]
        %v621 = vld [vmem:[%s2 + $0x30] sm:$0xf]
        %v622 = vld [vmem:[%s2 + $0x34] sm:$0xf]
        %v623 = vld [vmem:[%s2 + $0x38] sm:$0xf]
        %v624 = vld [vmem:[%s2 + $0x3c] sm:$0xf]
        %v625 = vld [vmem:[%s3] sm:$0x1]
        %v626 = vld [vmem:[%s3 + $0x1] sm:$0x1]
        %v627 = vld [vmem:[%s3 + $0x2] sm:$0x1]
        %v628 = vld [vmem:[%s3 + $0x3] sm:$0x1]
        %v633 = vlaneseq
        %v634 = vshrl.u32 %v633, 7
        %v635 = vsub.s32 0, %v634
        %v636 = vrot.slane %v625, %v635
        %v637 = vlaneseq
        %v638 = vshrl.u32 %v637, 7
        %v639 = vsub.s32 0, %v638
        %v640 = vrot.slane %v626, %v639
        %v641 = vlaneseq
        %v642 = vshrl.u32 %v641, 7
        %v643 = vsub.s32 0, %v642
        %v644 = vrot.slane %v627, %v643
        %v645 = vlaneseq
        %v646 = vshrl.u32 %v645, 7
        %v647 = vsub.s32 0, %v646
        %v648 = vrot.slane %v628, %v647
        %v657 = vunpack.c.l.b16 %v609
        %v658 = vunpack.c.l.b16 %v610
        %v659 = vunpack.c.l.b16 %v611
        %v660 = vunpack.c.l.b16 %v612
        %v661 = vpack.c.b16 %v658, %v657
        %v662 = vpack.c.b16 %v660, %v659
        %vm665 = vcmask 261120
        %v667 = vsel %vm665, %v608, 0
        %669 = vmatprep.subr.bf16.mxu0 0
        %670 = vmatpush1.bf16.msra.mxu0 %v661
        %671 = vmatprep.subr.bf16.mxu0 0
        %672 = vmatpush1.bf16.msra.mxu0 %v662
        %673 = vmatprep.subr.bf16.mxu0 0
        %674 = vmatpush1.bf16.msra.mxu0 0
        %675 = vmatprep.subr.bf16.mxu0 0
        %676 = vmatpush1.bf16.msra.mxu0 0
        %677 = vmatprep.subr.bf16.mxu0 0
        %678 = vmatpush1.bf16.msra.mxu0 0
        %679 = vmatprep.subr.bf16.mxu0 0
        %680 = vmatpush1.bf16.msra.mxu0 0
        %681 = vmatprep.subr.bf16.mxu0 0
        %682 = vmatpush1.bf16.msra.mxu0 0
        %683 = vmatprep.subr.bf16.mxu0 0
        %684 = vmatpush1.bf16.msra.mxu0 0
        %685 = vmatprep.subr.bf16.mxu0 0
        %686 = vmatpush1.bf16.msra.mxu0 0
        %687 = vmatprep.subr.bf16.mxu0 0
        %688 = vmatpush1.bf16.msra.mxu0 0
        %689 = vmatprep.subr.bf16.mxu0 0
        %690 = vmatpush1.bf16.msra.mxu0 0
        %691 = vmatprep.subr.bf16.mxu0 0
        %692 = vmatpush1.bf16.msra.mxu0 0
        %693 = vmatprep.subr.bf16.mxu0 0
        %694 = vmatpush1.bf16.msra.mxu0 0
        %695 = vmatprep.subr.bf16.mxu0 0
        %696 = vmatpush1.bf16.msra.mxu0 0
        %697 = vmatprep.subr.bf16.mxu0 0
        %698 = vmatpush1.bf16.msra.mxu0 0
        %699 = vmatprep.subr.bf16.mxu0 0
        %700 = vmatpush1.bf16.msra.mxu0 0
        %701 = vmatprep.mubr.bf16.mxu0 0
        %702 = vmatmul.mubr.bf16.gmra.mrb[0].mxu0 %v667
        %v703 = vpop.f32.mrb[0].mxu0
        %v704 = vadd.f32 %v636, %v703
        %v705 = vpop.f32.mrb[0].mxu0
        %v706 = vpop.f32.mrb[0].mxu0
        %v707 = vpop.f32.mrb[0].mxu0
        %708 = vdwg.mxu0
        %v713 = vunpack.c.l.b16 %v613
        %v714 = vunpack.c.l.b16 %v614
        %v715 = vunpack.c.l.b16 %v615
        %v716 = vunpack.c.l.b16 %v616
        %v717 = vpack.c.b16 %v714, %v713
        %v718 = vpack.c.b16 %v716, %v715
        %721 = vmatprep.subr.bf16.mxu0 0
        %722 = vmatpush1.bf16.msra.mxu0 %v717
        %723 = vmatprep.subr.bf16.mxu0 0
        %724 = vmatpush1.bf16.msra.mxu0 %v718
        %725 = vmatprep.subr.bf16.mxu0 0
        %726 = vmatpush1.bf16.msra.mxu0 0
        %727 = vmatprep.subr.bf16.mxu0 0
        %728 = vmatpush1.bf16.msra.mxu0 0
        %729 = vmatprep.subr.bf16.mxu0 0
        %730 = vmatpush1.bf16.msra.mxu0 0
        %731 = vmatprep.subr.bf16.mxu0 0
        %732 = vmatpush1.bf16.msra.mxu0 0
        %733 = vmatprep.subr.bf16.mxu0 0
        %734 = vmatpush1.bf16.msra.mxu0 0
        %735 = vmatprep.subr.bf16.mxu0 0
        %736 = vmatpush1.bf16.msra.mxu0 0
        %737 = vmatprep.subr.bf16.mxu0 0
        %738 = vmatpush1.bf16.msra.mxu0 0
        %739 = vmatprep.subr.bf16.mxu0 0
        %740 = vmatpush1.bf16.msra.mxu0 0
        %741 = vmatprep.subr.bf16.mxu0 0
        %742 = vmatpush1.bf16.msra.mxu0 0
        %743 = vmatprep.subr.bf16.mxu0 0
        %744 = vmatpush1.bf16.msra.mxu0 0
        %745 = vmatprep.subr.bf16.mxu0 0
        %746 = vmatpush1.bf16.msra.mxu0 0
        %747 = vmatprep.subr.bf16.mxu0 0
        %748 = vmatpush1.bf16.msra.mxu0 0
        %749 = vmatprep.subr.bf16.mxu0 0
        %750 = vmatpush1.bf16.msra.mxu0 0
        %751 = vmatprep.subr.bf16.mxu0 0
        %752 = vmatpush1.bf16.msra.mxu0 0
        %753 = vmatprep.mubr.bf16.mxu0 0
        %754 = vmatmul.mubr.bf16.gmra.mrb[0].mxu0 %v667
        %v755 = vpop.f32.mrb[0].mxu0
        %v756 = vadd.f32 %v640, %v755
        %v757 = vpop.f32.mrb[0].mxu0
        %v758 = vpop.f32.mrb[0].mxu0
        %v759 = vpop.f32.mrb[0].mxu0
        %760 = vdwg.mxu0
        %v765 = vunpack.c.l.b16 %v617
        %v766 = vunpack.c.l.b16 %v618
        %v767 = vunpack.c.l.b16 %v619
        %v768 = vunpack.c.l.b16 %v620
        %v769 = vpack.c.b16 %v766, %v765
        %v770 = vpack.c.b16 %v768, %v767
        %773 = vmatprep.subr.bf16.mxu0 0
        %774 = vmatpush1.bf16.msra.mxu0 %v769
        %775 = vmatprep.subr.bf16.mxu0 0
        %776 = vmatpush1.bf16.msra.mxu0 %v770
        %777 = vmatprep.subr.bf16.mxu0 0
        %778 = vmatpush1.bf16.msra.mxu0 0
        %779 = vmatprep.subr.bf16.mxu0 0
        %780 = vmatpush1.bf16.msra.mxu0 0
        %781 = vmatprep.subr.bf16.mxu0 0
        %782 = vmatpush1.bf16.msra.mxu0 0
        %783 = vmatprep.subr.bf16.mxu0 0
        %784 = vmatpush1.bf16.msra.mxu0 0
        %785 = vmatprep.subr.bf16.mxu0 0
        %786 = vmatpush1.bf16.msra.mxu0 0
        %787 = vmatprep.subr.bf16.mxu0 0
        %788 = vmatpush1.bf16.msra.mxu0 0
        %789 = vmatprep.subr.bf16.mxu0 0
        %790 = vmatpush1.bf16.msra.mxu0 0
        %791 = vmatprep.subr.bf16.mxu0 0
        %792 = vmatpush1.bf16.msra.mxu0 0
        %793 = vmatprep.subr.bf16.mxu0 0
        %794 = vmatpush1.bf16.msra.mxu0 0
        %795 = vmatprep.subr.bf16.mxu0 0
        %796 = vmatpush1.bf16.msra.mxu0 0
        %797 = vmatprep.subr.bf16.mxu0 0
        %798 = vmatpush1.bf16.msra.mxu0 0
        %799 = vmatprep.subr.bf16.mxu0 0
        %800 = vmatpush1.bf16.msra.mxu0 0
        %801 = vmatprep.subr.bf16.mxu0 0
        %802 = vmatpush1.bf16.msra.mxu0 0
        %803 = vmatprep.subr.bf16.mxu0 0
        %804 = vmatpush1.bf16.msra.mxu0 0
        %805 = vmatprep.mubr.bf16.mxu0 0
        %806 = vmatmul.mubr.bf16.gmra.mrb[0].mxu0 %v667
        %v807 = vpop.f32.mrb[0].mxu0
        %v808 = vadd.f32 %v644, %v807
        %v809 = vpop.f32.mrb[0].mxu0
        %v810 = vpop.f32.mrb[0].mxu0
        %v811 = vpop.f32.mrb[0].mxu0
        %812 = vdwg.mxu0
        %v817 = vunpack.c.l.b16 %v621
        %v818 = vunpack.c.l.b16 %v622
        %v819 = vunpack.c.l.b16 %v623
        %v820 = vunpack.c.l.b16 %v624
        %v821 = vpack.c.b16 %v818, %v817
        %v822 = vpack.c.b16 %v820, %v819
        %825 = vmatprep.subr.bf16.mxu0 0
        %826 = vmatpush1.bf16.msra.mxu0 %v821
        %827 = vmatprep.subr.bf16.mxu0 0
        %828 = vmatpush1.bf16.msra.mxu0 %v822
        %829 = vmatprep.subr.bf16.mxu0 0
        %830 = vmatpush1.bf16.msra.mxu0 0
        %831 = vmatprep.subr.bf16.mxu0 0
        %832 = vmatpush1.bf16.msra.mxu0 0
        %833 = vmatprep.subr.bf16.mxu0 0
        %834 = vmatpush1.bf16.msra.mxu0 0
        %835 = vmatprep.subr.bf16.mxu0 0
        %836 = vmatpush1.bf16.msra.mxu0 0
        %837 = vmatprep.subr.bf16.mxu0 0
        %838 = vmatpush1.bf16.msra.mxu0 0
        %839 = vmatprep.subr.bf16.mxu0 0
        %840 = vmatpush1.bf16.msra.mxu0 0
        %841 = vmatprep.subr.bf16.mxu0 0
        %842 = vmatpush1.bf16.msra.mxu0 0
        %843 = vmatprep.subr.bf16.mxu0 0
        %844 = vmatpush1.bf16.msra.mxu0 0
        %845 = vmatprep.subr.bf16.mxu0 0
        %846 = vmatpush1.bf16.msra.mxu0 0
        %847 = vmatprep.subr.bf16.mxu0 0
        %848 = vmatpush1.bf16.msra.mxu0 0
        %849 = vmatprep.subr.bf16.mxu0 0
        %850 = vmatpush1.bf16.msra.mxu0 0
        %851 = vmatprep.subr.bf16.mxu0 0
        %852 = vmatpush1.bf16.msra.mxu0 0
        %853 = vmatprep.subr.bf16.mxu0 0
        %854 = vmatpush1.bf16.msra.mxu0 0
        %855 = vmatprep.subr.bf16.mxu0 0
        %856 = vmatpush1.bf16.msra.mxu0 0
        %857 = vmatprep.mubr.bf16.mxu0 0
        %858 = vmatmul.mubr.bf16.gmra.mrb[0].mxu0 %v667
        %v859 = vpop.f32.mrb[0].mxu0
        %v860 = vadd.f32 %v648, %v859
        %v861 = vpop.f32.mrb[0].mxu0
        %v862 = vpop.f32.mrb[0].mxu0
        %v863 = vpop.f32.mrb[0].mxu0
        %864 = vdwg.mxu0
        %v865 = vld [vmem:[%s4] sm:$0xf]
        %v866 = vld [vmem:[%s4 + $0x4] sm:$0xf]
        %v867 = vld [vmem:[%s4 + $0x8] sm:$0xf]
        %v868 = vld [vmem:[%s4 + $0xc] sm:$0xf]
        %v869 = vld [vmem:[%s4 + $0x10] sm:$0xf]
        %v870 = vld [vmem:[%s4 + $0x14] sm:$0xf]
        %v871 = vld [vmem:[%s4 + $0x18] sm:$0xf]
        %v872 = vld [vmem:[%s4 + $0x1c] sm:$0xf]
        %v873 = vld [vmem:[%s4 + $0x20] sm:$0xf]
        %v874 = vld [vmem:[%s4 + $0x24] sm:$0xf]
        %v875 = vld [vmem:[%s4 + $0x28] sm:$0xf]
        %v876 = vld [vmem:[%s4 + $0x2c] sm:$0xf]
        %v877 = vld [vmem:[%s4 + $0x30] sm:$0xf]
        %v878 = vld [vmem:[%s4 + $0x34] sm:$0xf]
        %v879 = vld [vmem:[%s4 + $0x38] sm:$0xf]
        %v880 = vld [vmem:[%s4 + $0x3c] sm:$0xf]
        %v881 = vld [vmem:[%s5] sm:$0x1]
        %v882 = vld [vmem:[%s5 + $0x1] sm:$0x1]
        %v883 = vld [vmem:[%s5 + $0x2] sm:$0x1]
        %v884 = vld [vmem:[%s5 + $0x3] sm:$0x1]
        %v889 = vlaneseq
        %v890 = vshrl.u32 %v889, 7
        %v891 = vsub.s32 0, %v890
        %v892 = vrot.slane %v881, %v891
        %v893 = vlaneseq
        %v894 = vshrl.u32 %v893, 7
        %v895 = vsub.s32 0, %v894
        %v896 = vrot.slane %v882, %v895
        %v897 = vlaneseq
        %v898 = vshrl.u32 %v897, 7
        %v899 = vsub.s32 0, %v898
        %v900 = vrot.slane %v883, %v899
        %v901 = vlaneseq
        %v902 = vshrl.u32 %v901, 7
        %v903 = vsub.s32 0, %v902
        %v904 = vrot.slane %v884, %v903
        %v913 = vunpack.c.l.b16 %v865
        %v914 = vunpack.c.l.b16 %v866
        %v915 = vunpack.c.l.b16 %v867
        %v916 = vunpack.c.l.b16 %v868
        %v917 = vpack.c.b16 %v914, %v913
        %v918 = vpack.c.b16 %v916, %v915
        %921 = vmatprep.subr.bf16.mxu0 0
        %922 = vmatpush1.bf16.msra.mxu0 %v917
        %923 = vmatprep.subr.bf16.mxu0 0
        %924 = vmatpush1.bf16.msra.mxu0 %v918
        %925 = vmatprep.subr.bf16.mxu0 0
        %926 = vmatpush1.bf16.msra.mxu0 0
        %927 = vmatprep.subr.bf16.mxu0 0
        %928 = vmatpush1.bf16.msra.mxu0 0
        %929 = vmatprep.subr.bf16.mxu0 0
        %930 = vmatpush1.bf16.msra.mxu0 0
        %931 = vmatprep.subr.bf16.mxu0 0
        %932 = vmatpush1.bf16.msra.mxu0 0
        %933 = vmatprep.subr.bf16.mxu0 0
        %934 = vmatpush1.bf16.msra.mxu0 0
        %935 = vmatprep.subr.bf16.mxu0 0
        %936 = vmatpush1.bf16.msra.mxu0 0
        %937 = vmatprep.subr.bf16.mxu0 0
        %938 = vmatpush1.bf16.msra.mxu0 0
        %939 = vmatprep.subr.bf16.mxu0 0
        %940 = vmatpush1.bf16.msra.mxu0 0
        %941 = vmatprep.subr.bf16.mxu0 0
        %942 = vmatpush1.bf16.msra.mxu0 0
        %943 = vmatprep.subr.bf16.mxu0 0
        %944 = vmatpush1.bf16.msra.mxu0 0
        %945 = vmatprep.subr.bf16.mxu0 0
        %946 = vmatpush1.bf16.msra.mxu0 0
        %947 = vmatprep.subr.bf16.mxu0 0
        %948 = vmatpush1.bf16.msra.mxu0 0
        %949 = vmatprep.subr.bf16.mxu0 0
        %950 = vmatpush1.bf16.msra.mxu0 0
        %951 = vmatprep.subr.bf16.mxu0 0
        %952 = vmatpush1.bf16.msra.mxu0 0
        %953 = vmatprep.mubr.bf16.mxu0 0
        %954 = vmatmul.mubr.bf16.gmra.mrb[0].mxu0 %v667
        %v955 = vpop.f32.mrb[0].mxu0
        %v956 = vadd.f32 %v892, %v955
        %v957 = vpop.f32.mrb[0].mxu0
        %v958 = vpop.f32.mrb[0].mxu0
        %v959 = vpop.f32.mrb[0].mxu0
        %960 = vdwg.mxu0
        %v965 = vunpack.c.l.b16 %v869
        %v966 = vunpack.c.l.b16 %v870
        %v967 = vunpack.c.l.b16 %v871
        %v968 = vunpack.c.l.b16 %v872
        %v969 = vpack.c.b16 %v966, %v965
        %v970 = vpack.c.b16 %v968, %v967
        %973 = vmatprep.subr.bf16.mxu0 0
        %974 = vmatpush1.bf16.msra.mxu0 %v969
        %975 = vmatprep.subr.bf16.mxu0 0
        %976 = vmatpush1.bf16.msra.mxu0 %v970
        %977 = vmatprep.subr.bf16.mxu0 0
        %978 = vmatpush1.bf16.msra.mxu0 0
        %979 = vmatprep.subr.bf16.mxu0 0
        %980 = vmatpush1.bf16.msra.mxu0 0
        %981 = vmatprep.subr.bf16.mxu0 0
        %982 = vmatpush1.bf16.msra.mxu0 0
        %983 = vmatprep.subr.bf16.mxu0 0
        %984 = vmatpush1.bf16.msra.mxu0 0
        %985 = vmatprep.subr.bf16.mxu0 0
        %986 = vmatpush1.bf16.msra.mxu0 0
        %987 = vmatprep.subr.bf16.mxu0 0
        %988 = vmatpush1.bf16.msra.mxu0 0
        %989 = vmatprep.subr.bf16.mxu0 0
        %990 = vmatpush1.bf16.msra.mxu0 0
        %991 = vmatprep.subr.bf16.mxu0 0
        %992 = vmatpush1.bf16.msra.mxu0 0
        %993 = vmatprep.subr.bf16.mxu0 0
        %994 = vmatpush1.bf16.msra.mxu0 0
        %995 = vmatprep.subr.bf16.mxu0 0
        %996 = vmatpush1.bf16.msra.mxu0 0
        %997 = vmatprep.subr.bf16.mxu0 0
        %998 = vmatpush1.bf16.msra.mxu0 0
        %999 = vmatprep.subr.bf16.mxu0 0
        %1000 = vmatpush1.bf16.msra.mxu0 0
        %1001 = vmatprep.subr.bf16.mxu0 0
        %1002 = vmatpush1.bf16.msra.mxu0 0
        %1003 = vmatprep.subr.bf16.mxu0 0
        %1004 = vmatpush1.bf16.msra.mxu0 0
        %1005 = vmatprep.mubr.bf16.mxu0 0
        %1006 = vmatmul.mubr.bf16.gmra.mrb[0].mxu0 %v667
        %v1007 = vpop.f32.mrb[0].mxu0
        %v1008 = vadd.f32 %v896, %v1007
        %v1009 = vpop.f32.mrb[0].mxu0
        %v1010 = vpop.f32.mrb[0].mxu0
        %v1011 = vpop.f32.mrb[0].mxu0
        %1012 = vdwg.mxu0
        %v1017 = vunpack.c.l.b16 %v873
        %v1018 = vunpack.c.l.b16 %v874
        %v1019 = vunpack.c.l.b16 %v875
        %v1020 = vunpack.c.l.b16 %v876
        %v1021 = vpack.c.b16 %v1018, %v1017
        %v1022 = vpack.c.b16 %v1020, %v1019
        %1025 = vmatprep.subr.bf16.mxu0 0
        %1026 = vmatpush1.bf16.msra.mxu0 %v1021
        %1027 = vmatprep.subr.bf16.mxu0 0
        %1028 = vmatpush1.bf16.msra.mxu0 %v1022
        %1029 = vmatprep.subr.bf16.mxu0 0
        %1030 = vmatpush1.bf16.msra.mxu0 0
        %1031 = vmatprep.subr.bf16.mxu0 0
        %1032 = vmatpush1.bf16.msra.mxu0 0
        %1033 = vmatprep.subr.bf16.mxu0 0
        %1034 = vmatpush1.bf16.msra.mxu0 0
        %1035 = vmatprep.subr.bf16.mxu0 0
        %1036 = vmatpush1.bf16.msra.mxu0 0
        %1037 = vmatprep.subr.bf16.mxu0 0
        %1038 = vmatpush1.bf16.msra.mxu0 0
        %1039 = vmatprep.subr.bf16.mxu0 0
        %1040 = vmatpush1.bf16.msra.mxu0 0
        %1041 = vmatprep.subr.bf16.mxu0 0
        %1042 = vmatpush1.bf16.msra.mxu0 0
        %1043 = vmatprep.subr.bf16.mxu0 0
        %1044 = vmatpush1.bf16.msra.mxu0 0
        %1045 = vmatprep.subr.bf16.mxu0 0
        %1046 = vmatpush1.bf16.msra.mxu0 0
        %1047 = vmatprep.subr.bf16.mxu0 0
        %1048 = vmatpush1.bf16.msra.mxu0 0
        %1049 = vmatprep.subr.bf16.mxu0 0
        %1050 = vmatpush1.bf16.msra.mxu0 0
        %1051 = vmatprep.subr.bf16.mxu0 0
        %1052 = vmatpush1.bf16.msra.mxu0 0
        %1053 = vmatprep.subr.bf16.mxu0 0
        %1054 = vmatpush1.bf16.msra.mxu0 0
        %1055 = vmatprep.subr.bf16.mxu0 0
        %1056 = vmatpush1.bf16.msra.mxu0 0
        %1057 = vmatprep.mubr.bf16.mxu0 0
        %1058 = vmatmul.mubr.bf16.gmra.mrb[0].mxu0 %v667
        %v1059 = vpop.f32.mrb[0].mxu0
        %v1060 = vadd.f32 %v900, %v1059
        %v1061 = vpop.f32.mrb[0].mxu0
        %v1062 = vpop.f32.mrb[0].mxu0
        %v1063 = vpop.f32.mrb[0].mxu0
        %1064 = vdwg.mxu0
        %v1069 = vunpack.c.l.b16 %v877
        %v1070 = vunpack.c.l.b16 %v878
        %v1071 = vunpack.c.l.b16 %v879
        %v1072 = vunpack.c.l.b16 %v880
        %v1073 = vpack.c.b16 %v1070, %v1069
        %v1074 = vpack.c.b16 %v1072, %v1071
        %1077 = vmatprep.subr.bf16.mxu0 0
        %1078 = vmatpush1.bf16.msra.mxu0 %v1073
        %1079 = vmatprep.subr.bf16.mxu0 0
        %1080 = vmatpush1.bf16.msra.mxu0 %v1074
        %1081 = vmatprep.subr.bf16.mxu0 0
        %1082 = vmatpush1.bf16.msra.mxu0 0
        %1083 = vmatprep.subr.bf16.mxu0 0
        %1084 = vmatpush1.bf16.msra.mxu0 0
        %1085 = vmatprep.subr.bf16.mxu0 0
        %1086 = vmatpush1.bf16.msra.mxu0 0
        %1087 = vmatprep.subr.bf16.mxu0 0
        %1088 = vmatpush1.bf16.msra.mxu0 0
        %1089 = vmatprep.subr.bf16.mxu0 0
        %1090 = vmatpush1.bf16.msra.mxu0 0
        %1091 = vmatprep.subr.bf16.mxu0 0
        %1092 = vmatpush1.bf16.msra.mxu0 0
        %1093 = vmatprep.subr.bf16.mxu0 0
        %1094 = vmatpush1.bf16.msra.mxu0 0
        %1095 = vmatprep.subr.bf16.mxu0 0
        %1096 = vmatpush1.bf16.msra.mxu0 0
        %1097 = vmatprep.subr.bf16.mxu0 0
        %1098 = vmatpush1.bf16.msra.mxu0 0
        %1099 = vmatprep.subr.bf16.mxu0 0
        %1100 = vmatpush1.bf16.msra.mxu0 0
        %1101 = vmatprep.subr.bf16.mxu0 0
        %1102 = vmatpush1.bf16.msra.mxu0 0
        %1103 = vmatprep.subr.bf16.mxu0 0
        %1104 = vmatpush1.bf16.msra.mxu0 0
        %1105 = vmatprep.subr.bf16.mxu0 0
        %1106 = vmatpush1.bf16.msra.mxu0 0
        %1107 = vmatprep.subr.bf16.mxu0 0
        %1108 = vmatpush1.bf16.msra.mxu0 0
        %1109 = vmatprep.mubr.bf16.mxu0 0
        %1110 = vmatmul.mubr.bf16.gmra.mrb[0].mxu0 %v667
        %v1111 = vpop.f32.mrb[0].mxu0
        %v1112 = vadd.f32 %v904, %v1111
        %v1113 = vpop.f32.mrb[0].mxu0
        %v1114 = vpop.f32.mrb[0].mxu0
        %v1115 = vpop.f32.mrb[0].mxu0
        %1116 = vdwg.mxu0
        %v1117 = vld [vmem:[%s6] sm:$0xf]
        %v1118 = vld [vmem:[%s6 + $0x4] sm:$0xf]
        %v1119 = vld [vmem:[%s6 + $0x8] sm:$0xf]
        %v1120 = vld [vmem:[%s6 + $0xc] sm:$0xf]
        %v1121 = vld [vmem:[%s6 + $0x10] sm:$0xf]
        %v1122 = vld [vmem:[%s6 + $0x14] sm:$0xf]
        %v1123 = vld [vmem:[%s6 + $0x18] sm:$0xf]
        %v1124 = vld [vmem:[%s6 + $0x1c] sm:$0xf]
        %v1125 = vld [vmem:[%s6 + $0x20] sm:$0xf]
        %v1126 = vld [vmem:[%s6 + $0x24] sm:$0xf]
        %v1127 = vld [vmem:[%s6 + $0x28] sm:$0xf]
        %v1128 = vld [vmem:[%s6 + $0x2c] sm:$0xf]
        %v1129 = vld [vmem:[%s6 + $0x30] sm:$0xf]
        %v1130 = vld [vmem:[%s6 + $0x34] sm:$0xf]
        %v1131 = vld [vmem:[%s6 + $0x38] sm:$0xf]
        %v1132 = vld [vmem:[%s6 + $0x3c] sm:$0xf]
        %v1133 = vld [vmem:[%s7] sm:$0x1]
        %v1134 = vld [vmem:[%s7 + $0x1] sm:$0x1]
        %v1135 = vld [vmem:[%s7 + $0x2] sm:$0x1]
        %v1136 = vld [vmem:[%s7 + $0x3] sm:$0x1]
        %v1141 = vlaneseq
        %v1142 = vshrl.u32 %v1141, 7
        %v1143 = vsub.s32 0, %v1142
        %v1144 = vrot.slane %v1133, %v1143
        %v1145 = vlaneseq
        %v1146 = vshrl.u32 %v1145, 7
        %v1147 = vsub.s32 0, %v1146
        %v1148 = vrot.slane %v1134, %v1147
        %v1149 = vlaneseq
        %v1150 = vshrl.u32 %v1149, 7
        %v1151 = vsub.s32 0, %v1150
        %v1152 = vrot.slane %v1135, %v1151
        %v1153 = vlaneseq
        %v1154 = vshrl.u32 %v1153, 7
        %v1155 = vsub.s32 0, %v1154
        %v1156 = vrot.slane %v1136, %v1155
        %v1165 = vunpack.c.l.b16 %v1117
        %v1166 = vunpack.c.l.b16 %v1118
        %v1167 = vunpack.c.l.b16 %v1119
        %v1168 = vunpack.c.l.b16 %v1120
        %v1169 = vpack.c.b16 %v1166, %v1165
        %v1170 = vpack.c.b16 %v1168, %v1167
        %1173 = vmatprep.subr.bf16.mxu0 0
        %1174 = vmatpush1.bf16.msra.mxu0 %v1169
        %1175 = vmatprep.subr.bf16.mxu0 0
        %1176 = vmatpush1.bf16.msra.mxu0 %v1170
        %1177 = vmatprep.subr.bf16.mxu0 0
        %1178 = vmatpush1.bf16.msra.mxu0 0
        %1179 = vmatprep.subr.bf16.mxu0 0
        %1180 = vmatpush1.bf16.msra.mxu0 0
        %1181 = vmatprep.subr.bf16.mxu0 0
        %1182 = vmatpush1.bf16.msra.mxu0 0
        %1183 = vmatprep.subr.bf16.mxu0 0
        %1184 = vmatpush1.bf16.msra.mxu0 0
        %1185 = vmatprep.subr.bf16.mxu0 0
        %1186 = vmatpush1.bf16.msra.mxu0 0
        %1187 = vmatprep.subr.bf16.mxu0 0
        %1188 = vmatpush1.bf16.msra.mxu0 0
        %1189 = vmatprep.subr.bf16.mxu0 0
        %1190 = vmatpush1.bf16.msra.mxu0 0
        %1191 = vmatprep.subr.bf16.mxu0 0
        %1192 = vmatpush1.bf16.msra.mxu0 0
        %1193 = vmatprep.subr.bf16.mxu0 0
        %1194 = vmatpush1.bf16.msra.mxu0 0
        %1195 = vmatprep.subr.bf16.mxu0 0
        %1196 = vmatpush1.bf16.msra.mxu0 0
        %1197 = vmatprep.subr.bf16.mxu0 0
        %1198 = vmatpush1.bf16.msra.mxu0 0
        %1199 = vmatprep.subr.bf16.mxu0 0
        %1200 = vmatpush1.bf16.msra.mxu0 0
        %1201 = vmatprep.subr.bf16.mxu0 0
        %1202 = vmatpush1.bf16.msra.mxu0 0
        %1203 = vmatprep.subr.bf16.mxu0 0
        %1204 = vmatpush1.bf16.msra.mxu0 0
        %1205 = vmatprep.mubr.bf16.mxu0 0
        %1206 = vmatmul.mubr.bf16.gmra.mrb[0].mxu0 %v667
        %v1207 = vpop.f32.mrb[0].mxu0
        %v1208 = vadd.f32 %v1144, %v1207
        %v1209 = vpop.f32.mrb[0].mxu0
        %v1210 = vpop.f32.mrb[0].mxu0
        %v1211 = vpop.f32.mrb[0].mxu0
        %1212 = vdwg.mxu0
        %v1217 = vunpack.c.l.b16 %v1121
        %v1218 = vunpack.c.l.b16 %v1122
        %v1219 = vunpack.c.l.b16 %v1123
        %v1220 = vunpack.c.l.b16 %v1124
        %v1221 = vpack.c.b16 %v1218, %v1217
        %v1222 = vpack.c.b16 %v1220, %v1219
        %1225 = vmatprep.subr.bf16.mxu0 0
        %1226 = vmatpush1.bf16.msra.mxu0 %v1221
        %1227 = vmatprep.subr.bf16.mxu0 0
        %1228 = vmatpush1.bf16.msra.mxu0 %v1222
        %1229 = vmatprep.subr.bf16.mxu0 0
        %1230 = vmatpush1.bf16.msra.mxu0 0
        %1231 = vmatprep.subr.bf16.mxu0 0
        %1232 = vmatpush1.bf16.msra.mxu0 0
        %1233 = vmatprep.subr.bf16.mxu0 0
        %1234 = vmatpush1.bf16.msra.mxu0 0
        %1235 = vmatprep.subr.bf16.mxu0 0
        %1236 = vmatpush1.bf16.msra.mxu0 0
        %1237 = vmatprep.subr.bf16.mxu0 0
        %1238 = vmatpush1.bf16.msra.mxu0 0
        %1239 = vmatprep.subr.bf16.mxu0 0
        %1240 = vmatpush1.bf16.msra.mxu0 0
        %1241 = vmatprep.subr.bf16.mxu0 0
        %1242 = vmatpush1.bf16.msra.mxu0 0
        %1243 = vmatprep.subr.bf16.mxu0 0
        %1244 = vmatpush1.bf16.msra.mxu0 0
        %1245 = vmatprep.subr.bf16.mxu0 0
        %1246 = vmatpush1.bf16.msra.mxu0 0
        %1247 = vmatprep.subr.bf16.mxu0 0
        %1248 = vmatpush1.bf16.msra.mxu0 0
        %1249 = vmatprep.subr.bf16.mxu0 0
        %1250 = vmatpush1.bf16.msra.mxu0 0
        %1251 = vmatprep.subr.bf16.mxu0 0
        %1252 = vmatpush1.bf16.msra.mxu0 0
        %1253 = vmatprep.subr.bf16.mxu0 0
        %1254 = vmatpush1.bf16.msra.mxu0 0
        %1255 = vmatprep.subr.bf16.mxu0 0
        %1256 = vmatpush1.bf16.msra.mxu0 0
        %1257 = vmatprep.mubr.bf16.mxu0 0
        %1258 = vmatmul.mubr.bf16.gmra.mrb[0].mxu0 %v667
        %v1259 = vpop.f32.mrb[0].mxu0
        %v1260 = vadd.f32 %v1148, %v1259
        %v1261 = vpop.f32.mrb[0].mxu0
        %v1262 = vpop.f32.mrb[0].mxu0
        %v1263 = vpop.f32.mrb[0].mxu0
        %1264 = vdwg.mxu0
        %v1269 = vunpack.c.l.b16 %v1125
        %v1270 = vunpack.c.l.b16 %v1126
        %v1271 = vunpack.c.l.b16 %v1127
        %v1272 = vunpack.c.l.b16 %v1128
        %v1273 = vpack.c.b16 %v1270, %v1269
        %v1274 = vpack.c.b16 %v1272, %v1271
        %1277 = vmatprep.subr.bf16.mxu0 0
        %1278 = vmatpush1.bf16.msra.mxu0 %v1273
        %1279 = vmatprep.subr.bf16.mxu0 0
        %1280 = vmatpush1.bf16.msra.mxu0 %v1274
        %1281 = vmatprep.subr.bf16.mxu0 0
        %1282 = vmatpush1.bf16.msra.mxu0 0
        %1283 = vmatprep.subr.bf16.mxu0 0
        %1284 = vmatpush1.bf16.msra.mxu0 0
        %1285 = vmatprep.subr.bf16.mxu0 0
        %1286 = vmatpush1.bf16.msra.mxu0 0
        %1287 = vmatprep.subr.bf16.mxu0 0
        %1288 = vmatpush1.bf16.msra.mxu0 0
        %1289 = vmatprep.subr.bf16.mxu0 0
        %1290 = vmatpush1.bf16.msra.mxu0 0
        %1291 = vmatprep.subr.bf16.mxu0 0
        %1292 = vmatpush1.bf16.msra.mxu0 0
        %1293 = vmatprep.subr.bf16.mxu0 0
        %1294 = vmatpush1.bf16.msra.mxu0 0
        %1295 = vmatprep.subr.bf16.mxu0 0
        %1296 = vmatpush1.bf16.msra.mxu0 0
        %1297 = vmatprep.subr.bf16.mxu0 0
        %1298 = vmatpush1.bf16.msra.mxu0 0
        %1299 = vmatprep.subr.bf16.mxu0 0
        %1300 = vmatpush1.bf16.msra.mxu0 0
        %1301 = vmatprep.subr.bf16.mxu0 0
        %1302 = vmatpush1.bf16.msra.mxu0 0
        %1303 = vmatprep.subr.bf16.mxu0 0
        %1304 = vmatpush1.bf16.msra.mxu0 0
        %1305 = vmatprep.subr.bf16.mxu0 0
        %1306 = vmatpush1.bf16.msra.mxu0 0
        %1307 = vmatprep.subr.bf16.mxu0 0
        %1308 = vmatpush1.bf16.msra.mxu0 0
        %1309 = vmatprep.mubr.bf16.mxu0 0
        %1310 = vmatmul.mubr.bf16.gmra.mrb[0].mxu0 %v667
        %v1311 = vpop.f32.mrb[0].mxu0
        %v1312 = vadd.f32 %v1152, %v1311
        %v1313 = vpop.f32.mrb[0].mxu0
        %v1314 = vpop.f32.mrb[0].mxu0
        %v1315 = vpop.f32.mrb[0].mxu0
        %1316 = vdwg.mxu0
        %v1321 = vunpack.c.l.b16 %v1129
        %v1322 = vunpack.c.l.b16 %v1130
        %v1323 = vunpack.c.l.b16 %v1131
        %v1324 = vunpack.c.l.b16 %v1132
        %v1325 = vpack.c.b16 %v1322, %v1321
        %v1326 = vpack.c.b16 %v1324, %v1323
        %1329 = vmatprep.subr.bf16.mxu0 0
        %1330 = vmatpush1.bf16.msra.mxu0 %v1325
        %1331 = vmatprep.subr.bf16.mxu0 0
        %1332 = vmatpush1.bf16.msra.mxu0 %v1326
        %1333 = vmatprep.subr.bf16.mxu0 0
        %1334 = vmatpush1.bf16.msra.mxu0 0
        %1335 = vmatprep.subr.bf16.mxu0 0
        %1336 = vmatpush1.bf16.msra.mxu0 0
        %1337 = vmatprep.subr.bf16.mxu0 0
        %1338 = vmatpush1.bf16.msra.mxu0 0
        %1339 = vmatprep.subr.bf16.mxu0 0
        %1340 = vmatpush1.bf16.msra.mxu0 0
        %1341 = vmatprep.subr.bf16.mxu0 0
        %1342 = vmatpush1.bf16.msra.mxu0 0
        %1343 = vmatprep.subr.bf16.mxu0 0
        %1344 = vmatpush1.bf16.msra.mxu0 0
        %1345 = vmatprep.subr.bf16.mxu0 0
        %1346 = vmatpush1.bf16.msra.mxu0 0
        %1347 = vmatprep.subr.bf16.mxu0 0
        %1348 = vmatpush1.bf16.msra.mxu0 0
        %1349 = vmatprep.subr.bf16.mxu0 0
        %1350 = vmatpush1.bf16.msra.mxu0 0
        %1351 = vmatprep.subr.bf16.mxu0 0
        %1352 = vmatpush1.bf16.msra.mxu0 0
        %1353 = vmatprep.subr.bf16.mxu0 0
        %1354 = vmatpush1.bf16.msra.mxu0 0
        %1355 = vmatprep.subr.bf16.mxu0 0
        %1356 = vmatpush1.bf16.msra.mxu0 0
        %1357 = vmatprep.subr.bf16.mxu0 0
        %1358 = vmatpush1.bf16.msra.mxu0 0
        %1359 = vmatprep.subr.bf16.mxu0 0
        %1360 = vmatpush1.bf16.msra.mxu0 0
        %1361 = vmatprep.mubr.bf16.mxu0 0
        %1362 = vmatmul.mubr.bf16.gmra.mrb[0].mxu0 %v667
        %v1363 = vpop.f32.mrb[0].mxu0
        %v1364 = vadd.f32 %v1156, %v1363
        %v1365 = vpop.f32.mrb[0].mxu0
        %v1366 = vpop.f32.mrb[0].mxu0
        %v1367 = vpop.f32.mrb[0].mxu0
        %1368 = vdwg.mxu0
        %v1369 = vmul.f32 %v704, 0.35355338
        %v1370 = vmul.f32 %v756, 0.35355338
        %v1371 = vmul.f32 %v808, 0.35355338
        %v1372 = vmul.f32 %v860, 0.35355338
        %v1373 = vpack.c.bf16 %v1369, %v1369
        %v1374 = vpack.c.bf16 %v1370, %v1370
        %v1375 = vpack.c.bf16 %v1371, %v1371
        %v1376 = vpack.c.bf16 %v1372, %v1372
        %v1377 = vpack.c.bf16 %v956, %v956
        %v1378 = vpack.c.bf16 %v1008, %v1008
        %v1379 = vpack.c.bf16 %v1060, %v1060
        %v1380 = vpack.c.bf16 %v1112, %v1112
        %v1382 = vlaneseq
        %v1383 = vshrl.u32 %v1382, 7
        %v1384 = vsub.s32 0, %v1383
        %v1385 = vrot.slane %v607, %v1384
        %vm1387 = vcmask 64512
        %v1389 = vsel %vm1387, %v1373, 0
        %v1392 = vsel %vm1387, %v1377, 0
        %1394 = vmatprep.subr.bf16.mxu0 0
        %1395 = vmatpush1.bf16.xpose.msra.mxu0 %v1392
        %1396 = vmatprep.subr.bf16.mxu0 0
        %1397 = vmatpush1.bf16.xpose.msra.mxu0 0
        %1398 = vmatprep.subr.bf16.mxu0 0
        %1399 = vmatpush1.bf16.xpose.msra.mxu0 0
        %1400 = vmatprep.subr.bf16.mxu0 0
        %1401 = vmatpush1.bf16.xpose.msra.mxu0 0
        %1402 = vmatprep.subr.bf16.mxu0 0
        %1403 = vmatpush1.bf16.xpose.msra.mxu0 0
        %1404 = vmatprep.subr.bf16.mxu0 0
        %1405 = vmatpush1.bf16.xpose.msra.mxu0 0
        %1406 = vmatprep.subr.bf16.mxu0 0
        %1407 = vmatpush1.bf16.xpose.msra.mxu0 0
        %1408 = vmatprep.subr.bf16.mxu0 0
        %1409 = vmatpush1.bf16.xpose.msra.mxu0 0
        %1410 = vmatprep.subr.bf16.mxu0 0
        %1411 = vmatpush1.bf16.xpose.msra.mxu0 0
        %1412 = vmatprep.subr.bf16.mxu0 0
        %1413 = vmatpush1.bf16.xpose.msra.mxu0 0
        %1414 = vmatprep.subr.bf16.mxu0 0
        %1415 = vmatpush1.bf16.xpose.msra.mxu0 0
        %1416 = vmatprep.subr.bf16.mxu0 0
        %1417 = vmatpush1.bf16.xpose.msra.mxu0 0
        %1418 = vmatprep.subr.bf16.mxu0 0
        %1419 = vmatpush1.bf16.xpose.msra.mxu0 0
        %1420 = vmatprep.subr.bf16.mxu0 0
        %1421 = vmatpush1.bf16.xpose.msra.mxu0 0
        %1422 = vmatprep.subr.bf16.mxu0 0
        %1423 = vmatpush1.bf16.xpose.msra.mxu0 0
        %1424 = vmatprep.subr.bf16.mxu0 0
        %1425 = vmatpush1.bf16.xpose.msra.mxu0 0
        %1426 = vmatprep.mubr.bf16.mxu0 0
        %1427 = vmatmul.mubr.bf16.gmra.mrb[0].mxu0 %v1389
        %v1428 = vpop.f32.mrb[0].mxu0
        %v1429 = vadd.f32 %v1385, %v1428
        %v1430 = vpop.f32.mrb[0].mxu0
        %v1431 = vpop.f32.mrb[0].mxu0
        %v1432 = vpop.f32.mrb[0].mxu0
        %1433 = vdwg.mxu0
        %v1435 = vsel %vm1387, %v1374, 0
        %v1438 = vsel %vm1387, %v1378, 0
        %1440 = vmatprep.subr.bf16.mxu0 0
        %1441 = vmatpush1.bf16.xpose.msra.mxu0 %v1438
        %1442 = vmatprep.subr.bf16.mxu0 0
        %1443 = vmatpush1.bf16.xpose.msra.mxu0 0
        %1444 = vmatprep.subr.bf16.mxu0 0
        %1445 = vmatpush1.bf16.xpose.msra.mxu0 0
        %1446 = vmatprep.subr.bf16.mxu0 0
        %1447 = vmatpush1.bf16.xpose.msra.mxu0 0
        %1448 = vmatprep.subr.bf16.mxu0 0
        %1449 = vmatpush1.bf16.xpose.msra.mxu0 0
        %1450 = vmatprep.subr.bf16.mxu0 0
        %1451 = vmatpush1.bf16.xpose.msra.mxu0 0
        %1452 = vmatprep.subr.bf16.mxu0 0
        %1453 = vmatpush1.bf16.xpose.msra.mxu0 0
        %1454 = vmatprep.subr.bf16.mxu0 0
        %1455 = vmatpush1.bf16.xpose.msra.mxu0 0
        %1456 = vmatprep.subr.bf16.mxu0 0
        %1457 = vmatpush1.bf16.xpose.msra.mxu0 0
        %1458 = vmatprep.subr.bf16.mxu0 0
        %1459 = vmatpush1.bf16.xpose.msra.mxu0 0
        %1460 = vmatprep.subr.bf16.mxu0 0
        %1461 = vmatpush1.bf16.xpose.msra.mxu0 0
        %1462 = vmatprep.subr.bf16.mxu0 0
        %1463 = vmatpush1.bf16.xpose.msra.mxu0 0
        %1464 = vmatprep.subr.bf16.mxu0 0
        %1465 = vmatpush1.bf16.xpose.msra.mxu0 0
        %1466 = vmatprep.subr.bf16.mxu0 0
        %1467 = vmatpush1.bf16.xpose.msra.mxu0 0
        %1468 = vmatprep.subr.bf16.mxu0 0
        %1469 = vmatpush1.bf16.xpose.msra.mxu0 0
        %1470 = vmatprep.subr.bf16.mxu0 0
        %1471 = vmatpush1.bf16.xpose.msra.mxu0 0
        %1472 = vmatprep.mubr.bf16.mxu0 0
        %1473 = vmatmul.mubr.bf16.gmra.mrb[0].mxu0 %v1435
        %v1474 = vpop.f32.mrb[0].mxu0
        %v1475 = vadd.f32 %v1385, %v1474
        %v1476 = vpop.f32.mrb[0].mxu0
        %v1477 = vpop.f32.mrb[0].mxu0
        %v1478 = vpop.f32.mrb[0].mxu0
        %1479 = vdwg.mxu0
        %v1481 = vsel %vm1387, %v1375, 0
        %v1484 = vsel %vm1387, %v1379, 0
        %1486 = vmatprep.subr.bf16.mxu0 0
        %1487 = vmatpush1.bf16.xpose.msra.mxu0 %v1484
        %1488 = vmatprep.subr.bf16.mxu0 0
        %1489 = vmatpush1.bf16.xpose.msra.mxu0 0
        %1490 = vmatprep.subr.bf16.mxu0 0
        %1491 = vmatpush1.bf16.xpose.msra.mxu0 0
        %1492 = vmatprep.subr.bf16.mxu0 0
        %1493 = vmatpush1.bf16.xpose.msra.mxu0 0
        %1494 = vmatprep.subr.bf16.mxu0 0
        %1495 = vmatpush1.bf16.xpose.msra.mxu0 0
        %1496 = vmatprep.subr.bf16.mxu0 0
        %1497 = vmatpush1.bf16.xpose.msra.mxu0 0
        %1498 = vmatprep.subr.bf16.mxu0 0
        %1499 = vmatpush1.bf16.xpose.msra.mxu0 0
        %1500 = vmatprep.subr.bf16.mxu0 0
        %1501 = vmatpush1.bf16.xpose.msra.mxu0 0
        %1502 = vmatprep.subr.bf16.mxu0 0
        %1503 = vmatpush1.bf16.xpose.msra.mxu0 0
        %1504 = vmatprep.subr.bf16.mxu0 0
        %1505 = vmatpush1.bf16.xpose.msra.mxu0 0
        %1506 = vmatprep.subr.bf16.mxu0 0
        %1507 = vmatpush1.bf16.xpose.msra.mxu0 0
        %1508 = vmatprep.subr.bf16.mxu0 0
        %1509 = vmatpush1.bf16.xpose.msra.mxu0 0
        %1510 = vmatprep.subr.bf16.mxu0 0
        %1511 = vmatpush1.bf16.xpose.msra.mxu0 0
        %1512 = vmatprep.subr.bf16.mxu0 0
        %1513 = vmatpush1.bf16.xpose.msra.mxu0 0
        %1514 = vmatprep.subr.bf16.mxu0 0
        %1515 = vmatpush1.bf16.xpose.msra.mxu0 0
        %1516 = vmatprep.subr.bf16.mxu0 0
        %1517 = vmatpush1.bf16.xpose.msra.mxu0 0
        %1518 = vmatprep.mubr.bf16.mxu0 0
        %1519 = vmatmul.mubr.bf16.gmra.mrb[0].mxu0 %v1481
        %v1520 = vpop.f32.mrb[0].mxu0
        %v1521 = vadd.f32 %v1385, %v1520
        %v1522 = vpop.f32.mrb[0].mxu0
        %v1523 = vpop.f32.mrb[0].mxu0
        %v1524 = vpop.f32.mrb[0].mxu0
        %1525 = vdwg.mxu0
        %v1527 = vsel %vm1387, %v1376, 0
        %v1530 = vsel %vm1387, %v1380, 0
        %1532 = vmatprep.subr.bf16.mxu0 0
        %1533 = vmatpush1.bf16.xpose.msra.mxu0 %v1530
        %1534 = vmatprep.subr.bf16.mxu0 0
        %1535 = vmatpush1.bf16.xpose.msra.mxu0 0
        %1536 = vmatprep.subr.bf16.mxu0 0
        %1537 = vmatpush1.bf16.xpose.msra.mxu0 0
        %1538 = vmatprep.subr.bf16.mxu0 0
        %1539 = vmatpush1.bf16.xpose.msra.mxu0 0
        %1540 = vmatprep.subr.bf16.mxu0 0
        %1541 = vmatpush1.bf16.xpose.msra.mxu0 0
        %1542 = vmatprep.subr.bf16.mxu0 0
        %1543 = vmatpush1.bf16.xpose.msra.mxu0 0
        %1544 = vmatprep.subr.bf16.mxu0 0
        %1545 = vmatpush1.bf16.xpose.msra.mxu0 0
        %1546 = vmatprep.subr.bf16.mxu0 0
        %1547 = vmatpush1.bf16.xpose.msra.mxu0 0
        %1548 = vmatprep.subr.bf16.mxu0 0
        %1549 = vmatpush1.bf16.xpose.msra.mxu0 0
        %1550 = vmatprep.subr.bf16.mxu0 0
        %1551 = vmatpush1.bf16.xpose.msra.mxu0 0
        %1552 = vmatprep.subr.bf16.mxu0 0
        %1553 = vmatpush1.bf16.xpose.msra.mxu0 0
        %1554 = vmatprep.subr.bf16.mxu0 0
        %1555 = vmatpush1.bf16.xpose.msra.mxu0 0
        %1556 = vmatprep.subr.bf16.mxu0 0
        %1557 = vmatpush1.bf16.xpose.msra.mxu0 0
        %1558 = vmatprep.subr.bf16.mxu0 0
        %1559 = vmatpush1.bf16.xpose.msra.mxu0 0
        %1560 = vmatprep.subr.bf16.mxu0 0
        %1561 = vmatpush1.bf16.xpose.msra.mxu0 0
        %1562 = vmatprep.subr.bf16.mxu0 0
        %1563 = vmatpush1.bf16.xpose.msra.mxu0 0
        %1564 = vmatprep.mubr.bf16.mxu0 0
        %1565 = vmatmul.mubr.bf16.gmra.mrb[0].mxu0 %v1527
        %v1566 = vpop.f32.mrb[0].mxu0
        %v1567 = vadd.f32 %v1385, %v1566
        %v1568 = vpop.f32.mrb[0].mxu0
        %v1569 = vpop.f32.mrb[0].mxu0
        %v1570 = vpop.f32.mrb[0].mxu0
        %1571 = vdwg.mxu0
        %v1572 = vsel %vm1387, %v1429, -inf
        %1573 = vmax.xlane.f32.xlu0 %v1572
        %v1574 = vpop.xlane.xlu0 %1573
        %v1575 = vsel %vm1387, %v1475, -inf
        %1576 = vmax.xlane.f32.xlu0 %v1575
        %v1577 = vpop.xlane.xlu0 %1576
        %v1578 = vsel %vm1387, %v1521, -inf
        %1579 = vmax.xlane.f32.xlu0 %v1578
        %v1580 = vpop.xlane.xlu0 %1579
        %v1581 = vsel %vm1387, %v1567, -inf
        %1582 = vmax.xlane.f32.xlu0 %v1581
        %v1583 = vpop.xlane.xlu0 %1582
        %v1584 = vsub.f32 %v1429, %v1574
        %v1585 = vsub.f32 %v1475, %v1577
        %v1586 = vsub.f32 %v1521, %v1580
        %v1587 = vsub.f32 %v1567, %v1583
        %v1588 = vmul.f32 %v1584, 1.442695
        %v1589 = vpow.pop %v1588
        %v1590 = vmul.f32 %v1585, 1.442695
        %v1591 = vpow.pop %v1590
        %v1592 = vmul.f32 %v1586, 1.442695
        %v1593 = vpow.pop %v1592
        %v1594 = vmul.f32 %v1587, 1.442695
        %v1595 = vpow.pop %v1594
        %v1596 = vsel %vm1387, %v1589, 0.0
        %1597 = vadd.xlane.f32.xlu0 %v1596
        %v1598 = vpop.xlane.xlu0 %1597
        %v1599 = vsel %vm1387, %v1591, 0.0
        %1600 = vadd.xlane.f32.xlu0 %v1599
        %v1601 = vpop.xlane.xlu0 %1600
        %v1602 = vsel %vm1387, %v1593, 0.0
        %1603 = vadd.xlane.f32.xlu0 %v1602
        %v1604 = vpop.xlane.xlu0 %1603
        %v1605 = vsel %vm1387, %v1595, 0.0
        %1606 = vadd.xlane.f32.xlu0 %v1605
        %v1607 = vpop.xlane.xlu0 %1606
        %v1608 = vrcp.pop %v1598
        %v1609 = vrcp.pop %v1601
        %v1610 = vrcp.pop %v1604
        %v1611 = vrcp.pop %v1607
        %v1612 = vmul.f32 %v1589, %v1608
        %v1613 = vmul.f32 %v1591, %v1609
        %v1614 = vmul.f32 %v1593, %v1610
        %v1615 = vmul.f32 %v1595, %v1611
        %v1616 = vpack.c.bf16 %v1612, %v1612
        %v1617 = vpack.c.bf16 %v1613, %v1613
        %v1618 = vpack.c.bf16 %v1614, %v1614
        %v1619 = vpack.c.bf16 %v1615, %v1615
        %v1620 = vpack.c.bf16 %v1208, %v1208
        %v1621 = vpack.c.bf16 %v1260, %v1260
        %v1622 = vpack.c.bf16 %v1312, %v1312
        %v1623 = vpack.c.bf16 %v1364, %v1364
        %v1625 = vsel %vm1387, %v1616, 0
        %vm1627 = vcmask 1043456
        %v1629 = vsel %vm1627, %v1620, 0
        %1631 = vmatprep.subr.bf16.mxu0 0
        %1632 = vmatpush1.bf16.msra.mxu0 %v1629
        %1633 = vmatprep.subr.bf16.mxu0 0
        %1634 = vmatpush1.bf16.msra.mxu0 0
        %1635 = vmatprep.subr.bf16.mxu0 0
        %1636 = vmatpush1.bf16.msra.mxu0 0
        %1637 = vmatprep.subr.bf16.mxu0 0
        %1638 = vmatpush1.bf16.msra.mxu0 0
        %1639 = vmatprep.subr.bf16.mxu0 0
        %1640 = vmatpush1.bf16.msra.mxu0 0
        %1641 = vmatprep.subr.bf16.mxu0 0
        %1642 = vmatpush1.bf16.msra.mxu0 0
        %1643 = vmatprep.subr.bf16.mxu0 0
        %1644 = vmatpush1.bf16.msra.mxu0 0
        %1645 = vmatprep.subr.bf16.mxu0 0
        %1646 = vmatpush1.bf16.msra.mxu0 0
        %1647 = vmatprep.subr.bf16.mxu0 0
        %1648 = vmatpush1.bf16.msra.mxu0 0
        %1649 = vmatprep.subr.bf16.mxu0 0
        %1650 = vmatpush1.bf16.msra.mxu0 0
        %1651 = vmatprep.subr.bf16.mxu0 0
        %1652 = vmatpush1.bf16.msra.mxu0 0
        %1653 = vmatprep.subr.bf16.mxu0 0
        %1654 = vmatpush1.bf16.msra.mxu0 0
        %1655 = vmatprep.subr.bf16.mxu0 0
        %1656 = vmatpush1.bf16.msra.mxu0 0
        %1657 = vmatprep.subr.bf16.mxu0 0
        %1658 = vmatpush1.bf16.msra.mxu0 0
        %1659 = vmatprep.subr.bf16.mxu0 0
        %1660 = vmatpush1.bf16.msra.mxu0 0
        %1661 = vmatprep.subr.bf16.mxu0 0
        %1662 = vmatpush1.bf16.msra.mxu0 0
        %1663 = vmatprep.mubr.bf16.mxu0 0
        %1664 = vmatmul.mubr.bf16.gmra.mrb[0].mxu0 %v1625
        %v1665 = vpop.f32.mrb[0].mxu0
        %v1666 = vadd.f32 0.0, %v1665
        %v1667 = vpop.f32.mrb[0].mxu0
        %v1668 = vpop.f32.mrb[0].mxu0
        %v1669 = vpop.f32.mrb[0].mxu0
        %1670 = vdwg.mxu0
        %v1672 = vsel %vm1387, %v1617, 0
        %v1675 = vsel %vm1627, %v1621, 0
        %1677 = vmatprep.subr.bf16.mxu0 0
        %1678 = vmatpush1.bf16.msra.mxu0 %v1675
        %1679 = vmatprep.subr.bf16.mxu0 0
        %1680 = vmatpush1.bf16.msra.mxu0 0
        %1681 = vmatprep.subr.bf16.mxu0 0
        %1682 = vmatpush1.bf16.msra.mxu0 0
        %1683 = vmatprep.subr.bf16.mxu0 0
        %1684 = vmatpush1.bf16.msra.mxu0 0
        %1685 = vmatprep.subr.bf16.mxu0 0
        %1686 = vmatpush1.bf16.msra.mxu0 0
        %1687 = vmatprep.subr.bf16.mxu0 0
        %1688 = vmatpush1.bf16.msra.mxu0 0
        %1689 = vmatprep.subr.bf16.mxu0 0
        %1690 = vmatpush1.bf16.msra.mxu0 0
        %1691 = vmatprep.subr.bf16.mxu0 0
        %1692 = vmatpush1.bf16.msra.mxu0 0
        %1693 = vmatprep.subr.bf16.mxu0 0
        %1694 = vmatpush1.bf16.msra.mxu0 0
        %1695 = vmatprep.subr.bf16.mxu0 0
        %1696 = vmatpush1.bf16.msra.mxu0 0
        %1697 = vmatprep.subr.bf16.mxu0 0
        %1698 = vmatpush1.bf16.msra.mxu0 0
        %1699 = vmatprep.subr.bf16.mxu0 0
        %1700 = vmatpush1.bf16.msra.mxu0 0
        %1701 = vmatprep.subr.bf16.mxu0 0
        %1702 = vmatpush1.bf16.msra.mxu0 0
        %1703 = vmatprep.subr.bf16.mxu0 0
        %1704 = vmatpush1.bf16.msra.mxu0 0
        %1705 = vmatprep.subr.bf16.mxu0 0
        %1706 = vmatpush1.bf16.msra.mxu0 0
        %1707 = vmatprep.subr.bf16.mxu0 0
        %1708 = vmatpush1.bf16.msra.mxu0 0
        %1709 = vmatprep.mubr.bf16.mxu0 0
        %1710 = vmatmul.mubr.bf16.gmra.mrb[0].mxu0 %v1672
        %v1711 = vpop.f32.mrb[0].mxu0
        %v1712 = vadd.f32 0.0, %v1711
        %v1713 = vpop.f32.mrb[0].mxu0
        %v1714 = vpop.f32.mrb[0].mxu0
        %v1715 = vpop.f32.mrb[0].mxu0
        %1716 = vdwg.mxu0
        %v1718 = vsel %vm1387, %v1618, 0
        %v1721 = vsel %vm1627, %v1622, 0
        %1723 = vmatprep.subr.bf16.mxu0 0
        %1724 = vmatpush1.bf16.msra.mxu0 %v1721
        %1725 = vmatprep.subr.bf16.mxu0 0
        %1726 = vmatpush1.bf16.msra.mxu0 0
        %1727 = vmatprep.subr.bf16.mxu0 0
        %1728 = vmatpush1.bf16.msra.mxu0 0
        %1729 = vmatprep.subr.bf16.mxu0 0
        %1730 = vmatpush1.bf16.msra.mxu0 0
        %1731 = vmatprep.subr.bf16.mxu0 0
        %1732 = vmatpush1.bf16.msra.mxu0 0
        %1733 = vmatprep.subr.bf16.mxu0 0
        %1734 = vmatpush1.bf16.msra.mxu0 0
        %1735 = vmatprep.subr.bf16.mxu0 0
        %1736 = vmatpush1.bf16.msra.mxu0 0
        %1737 = vmatprep.subr.bf16.mxu0 0
        %1738 = vmatpush1.bf16.msra.mxu0 0
        %1739 = vmatprep.subr.bf16.mxu0 0
        %1740 = vmatpush1.bf16.msra.mxu0 0
        %1741 = vmatprep.subr.bf16.mxu0 0
        %1742 = vmatpush1.bf16.msra.mxu0 0
        %1743 = vmatprep.subr.bf16.mxu0 0
        %1744 = vmatpush1.bf16.msra.mxu0 0
        %1745 = vmatprep.subr.bf16.mxu0 0
        %1746 = vmatpush1.bf16.msra.mxu0 0
        %1747 = vmatprep.subr.bf16.mxu0 0
        %1748 = vmatpush1.bf16.msra.mxu0 0
        %1749 = vmatprep.subr.bf16.mxu0 0
        %1750 = vmatpush1.bf16.msra.mxu0 0
        %1751 = vmatprep.subr.bf16.mxu0 0
        %1752 = vmatpush1.bf16.msra.mxu0 0
        %1753 = vmatprep.subr.bf16.mxu0 0
        %1754 = vmatpush1.bf16.msra.mxu0 0
        %1755 = vmatprep.mubr.bf16.mxu0 0
        %1756 = vmatmul.mubr.bf16.gmra.mrb[0].mxu0 %v1718
        %v1757 = vpop.f32.mrb[0].mxu0
        %v1758 = vadd.f32 0.0, %v1757
        %v1759 = vpop.f32.mrb[0].mxu0
        %v1760 = vpop.f32.mrb[0].mxu0
        %v1761 = vpop.f32.mrb[0].mxu0
        %1762 = vdwg.mxu0
        %v1764 = vsel %vm1387, %v1619, 0
        %v1767 = vsel %vm1627, %v1623, 0
        %1769 = vmatprep.subr.bf16.mxu0 0
        %1770 = vmatpush1.bf16.msra.mxu0 %v1767
        %1771 = vmatprep.subr.bf16.mxu0 0
        %1772 = vmatpush1.bf16.msra.mxu0 0
        %1773 = vmatprep.subr.bf16.mxu0 0
        %1774 = vmatpush1.bf16.msra.mxu0 0
        %1775 = vmatprep.subr.bf16.mxu0 0
        %1776 = vmatpush1.bf16.msra.mxu0 0
        %1777 = vmatprep.subr.bf16.mxu0 0
        %1778 = vmatpush1.bf16.msra.mxu0 0
        %1779 = vmatprep.subr.bf16.mxu0 0
        %1780 = vmatpush1.bf16.msra.mxu0 0
        %1781 = vmatprep.subr.bf16.mxu0 0
        %1782 = vmatpush1.bf16.msra.mxu0 0
        %1783 = vmatprep.subr.bf16.mxu0 0
        %1784 = vmatpush1.bf16.msra.mxu0 0
        %1785 = vmatprep.subr.bf16.mxu0 0
        %1786 = vmatpush1.bf16.msra.mxu0 0
        %1787 = vmatprep.subr.bf16.mxu0 0
        %1788 = vmatpush1.bf16.msra.mxu0 0
        %1789 = vmatprep.subr.bf16.mxu0 0
        %1790 = vmatpush1.bf16.msra.mxu0 0
        %1791 = vmatprep.subr.bf16.mxu0 0
        %1792 = vmatpush1.bf16.msra.mxu0 0
        %1793 = vmatprep.subr.bf16.mxu0 0
        %1794 = vmatpush1.bf16.msra.mxu0 0
        %1795 = vmatprep.subr.bf16.mxu0 0
        %1796 = vmatpush1.bf16.msra.mxu0 0
        %1797 = vmatprep.subr.bf16.mxu0 0
        %1798 = vmatpush1.bf16.msra.mxu0 0
        %1799 = vmatprep.subr.bf16.mxu0 0
        %1800 = vmatpush1.bf16.msra.mxu0 0
        %1801 = vmatprep.mubr.bf16.mxu0 0
        %1802 = vmatmul.mubr.bf16.gmra.mrb[0].mxu0 %v1764
        %v1803 = vpop.f32.mrb[0].mxu0
        %v1804 = vadd.f32 0.0, %v1803
        %v1805 = vpop.f32.mrb[0].mxu0
        %v1806 = vpop.f32.mrb[0].mxu0
        %v1807 = vpop.f32.mrb[0].mxu0
        %1808 = vdwg.mxu0
        %v1809 = vpack.c.bf16 %v1666, %v1666
        %v1810 = vpack.c.bf16 %v1712, %v1712
        %v1811 = vpack.c.bf16 %v1758, %v1758
        %v1812 = vpack.c.bf16 %v1804, %v1804
        %v1813 = vld [vmem:[%s8] sm:$0xf]
        %v1814 = vld [vmem:[%s8 + $0x4] sm:$0xf]
        %v1815 = vld [vmem:[%s8 + $0x8] sm:$0xf]
        %v1816 = vld [vmem:[%s8 + $0xc] sm:$0xf]
        %v1818 = vsel %vm1387, %v1809, 0
        %v1821 = vsel %vm1627, %v1813, 0
        %1823 = vmatprep.subr.bf16.mxu0 0
        %1824 = vmatpush1.bf16.msra.mxu0 %v1821
        %1825 = vmatprep.subr.bf16.mxu0 0
        %1826 = vmatpush1.bf16.msra.mxu0 0
        %1827 = vmatprep.subr.bf16.mxu0 0
        %1828 = vmatpush1.bf16.msra.mxu0 0
        %1829 = vmatprep.subr.bf16.mxu0 0
        %1830 = vmatpush1.bf16.msra.mxu0 0
        %1831 = vmatprep.subr.bf16.mxu0 0
        %1832 = vmatpush1.bf16.msra.mxu0 0
        %1833 = vmatprep.subr.bf16.mxu0 0
        %1834 = vmatpush1.bf16.msra.mxu0 0
        %1835 = vmatprep.subr.bf16.mxu0 0
        %1836 = vmatpush1.bf16.msra.mxu0 0
        %1837 = vmatprep.subr.bf16.mxu0 0
        %1838 = vmatpush1.bf16.msra.mxu0 0
        %1839 = vmatprep.subr.bf16.mxu0 0
        %1840 = vmatpush1.bf16.msra.mxu0 0
        %1841 = vmatprep.subr.bf16.mxu0 0
        %1842 = vmatpush1.bf16.msra.mxu0 0
        %1843 = vmatprep.subr.bf16.mxu0 0
        %1844 = vmatpush1.bf16.msra.mxu0 0
        %1845 = vmatprep.subr.bf16.mxu0 0
        %1846 = vmatpush1.bf16.msra.mxu0 0
        %1847 = vmatprep.subr.bf16.mxu0 0
        %1848 = vmatpush1.bf16.msra.mxu0 0
        %1849 = vmatprep.subr.bf16.mxu0 0
        %1850 = vmatpush1.bf16.msra.mxu0 0
        %1851 = vmatprep.subr.bf16.mxu0 0
        %1852 = vmatpush1.bf16.msra.mxu0 0
        %1853 = vmatprep.subr.bf16.mxu0 0
        %1854 = vmatpush1.bf16.msra.mxu0 0
        %1855 = vmatprep.mubr.bf16.mxu0 0
        %1856 = vmatmul.mubr.bf16.gmra.mrb[0].mxu0 %v1818
        %v1857 = vpop.f32.mrb[0].mxu0
        %v1858 = vadd.f32 0.0, %v1857
        %v1859 = vpop.f32.mrb[0].mxu0
        %v1860 = vpop.f32.mrb[0].mxu0
        %v1861 = vpop.f32.mrb[0].mxu0
        %1862 = vdwg.mxu0
        %v1864 = vsel %vm1387, %v1810, 0
        %v1867 = vsel %vm1627, %v1814, 0
        %1869 = vmatprep.subr.bf16.mxu0 0
        %1870 = vmatpush1.bf16.msra.mxu0 %v1867
        %1871 = vmatprep.subr.bf16.mxu0 0
        %1872 = vmatpush1.bf16.msra.mxu0 0
        %1873 = vmatprep.subr.bf16.mxu0 0
        %1874 = vmatpush1.bf16.msra.mxu0 0
        %1875 = vmatprep.subr.bf16.mxu0 0
        %1876 = vmatpush1.bf16.msra.mxu0 0
        %1877 = vmatprep.subr.bf16.mxu0 0
        %1878 = vmatpush1.bf16.msra.mxu0 0
        %1879 = vmatprep.subr.bf16.mxu0 0
        %1880 = vmatpush1.bf16.msra.mxu0 0
        %1881 = vmatprep.subr.bf16.mxu0 0
        %1882 = vmatpush1.bf16.msra.mxu0 0
        %1883 = vmatprep.subr.bf16.mxu0 0
        %1884 = vmatpush1.bf16.msra.mxu0 0
        %1885 = vmatprep.subr.bf16.mxu0 0
        %1886 = vmatpush1.bf16.msra.mxu0 0
        %1887 = vmatprep.subr.bf16.mxu0 0
        %1888 = vmatpush1.bf16.msra.mxu0 0
        %1889 = vmatprep.subr.bf16.mxu0 0
        %1890 = vmatpush1.bf16.msra.mxu0 0
        %1891 = vmatprep.subr.bf16.mxu0 0
        %1892 = vmatpush1.bf16.msra.mxu0 0
        %1893 = vmatprep.subr.bf16.mxu0 0
        %1894 = vmatpush1.bf16.msra.mxu0 0
        %1895 = vmatprep.subr.bf16.mxu0 0
        %1896 = vmatpush1.bf16.msra.mxu0 0
        %1897 = vmatprep.subr.bf16.mxu0 0
        %1898 = vmatpush1.bf16.msra.mxu0 0
        %1899 = vmatprep.subr.bf16.mxu0 0
        %1900 = vmatpush1.bf16.msra.mxu0 0
        %1901 = vmatprep.mubr.bf16.mxu0 0
        %1902 = vmatmul.mubr.bf16.gmra.mrb[0].mxu0 %v1864
        %v1903 = vpop.f32.mrb[0].mxu0
        %v1904 = vadd.f32 0.0, %v1903
        %v1905 = vpop.f32.mrb[0].mxu0
        %v1906 = vpop.f32.mrb[0].mxu0
        %v1907 = vpop.f32.mrb[0].mxu0
        %1908 = vdwg.mxu0
        %v1910 = vsel %vm1387, %v1811, 0
        %v1913 = vsel %vm1627, %v1815, 0
        %1915 = vmatprep.subr.bf16.mxu0 0
        %1916 = vmatpush1.bf16.msra.mxu0 %v1913
        %1917 = vmatprep.subr.bf16.mxu0 0
        %1918 = vmatpush1.bf16.msra.mxu0 0
        %1919 = vmatprep.subr.bf16.mxu0 0
        %1920 = vmatpush1.bf16.msra.mxu0 0
        %1921 = vmatprep.subr.bf16.mxu0 0
        %1922 = vmatpush1.bf16.msra.mxu0 0
        %1923 = vmatprep.subr.bf16.mxu0 0
        %1924 = vmatpush1.bf16.msra.mxu0 0
        %1925 = vmatprep.subr.bf16.mxu0 0
        %1926 = vmatpush1.bf16.msra.mxu0 0
        %1927 = vmatprep.subr.bf16.mxu0 0
        %1928 = vmatpush1.bf16.msra.mxu0 0
        %1929 = vmatprep.subr.bf16.mxu0 0
        %1930 = vmatpush1.bf16.msra.mxu0 0
        %1931 = vmatprep.subr.bf16.mxu0 0
        %1932 = vmatpush1.bf16.msra.mxu0 0
        %1933 = vmatprep.subr.bf16.mxu0 0
        %1934 = vmatpush1.bf16.msra.mxu0 0
        %1935 = vmatprep.subr.bf16.mxu0 0
        %1936 = vmatpush1.bf16.msra.mxu0 0
        %1937 = vmatprep.subr.bf16.mxu0 0
        %1938 = vmatpush1.bf16.msra.mxu0 0
        %1939 = vmatprep.subr.bf16.mxu0 0
        %1940 = vmatpush1.bf16.msra.mxu0 0
        %1941 = vmatprep.subr.bf16.mxu0 0
        %1942 = vmatpush1.bf16.msra.mxu0 0
        %1943 = vmatprep.subr.bf16.mxu0 0
        %1944 = vmatpush1.bf16.msra.mxu0 0
        %1945 = vmatprep.subr.bf16.mxu0 0
        %1946 = vmatpush1.bf16.msra.mxu0 0
        %1947 = vmatprep.mubr.bf16.mxu0 0
        %1948 = vmatmul.mubr.bf16.gmra.mrb[0].mxu0 %v1910
        %v1949 = vpop.f32.mrb[0].mxu0
        %v1950 = vadd.f32 0.0, %v1949
        %v1951 = vpop.f32.mrb[0].mxu0
        %v1952 = vpop.f32.mrb[0].mxu0
        %v1953 = vpop.f32.mrb[0].mxu0
        %1954 = vdwg.mxu0
        %v1956 = vsel %vm1387, %v1812, 0
        %v1959 = vsel %vm1627, %v1816, 0
        %1961 = vmatprep.subr.bf16.mxu0 0
        %1962 = vmatpush1.bf16.msra.mxu0 %v1959
        %1963 = vmatprep.subr.bf16.mxu0 0
        %1964 = vmatpush1.bf16.msra.mxu0 0
        %1965 = vmatprep.subr.bf16.mxu0 0
        %1966 = vmatpush1.bf16.msra.mxu0 0
        %1967 = vmatprep.subr.bf16.mxu0 0
        %1968 = vmatpush1.bf16.msra.mxu0 0
        %1969 = vmatprep.subr.bf16.mxu0 0
        %1970 = vmatpush1.bf16.msra.mxu0 0
        %1971 = vmatprep.subr.bf16.mxu0 0
        %1972 = vmatpush1.bf16.msra.mxu0 0
        %1973 = vmatprep.subr.bf16.mxu0 0
        %1974 = vmatpush1.bf16.msra.mxu0 0
        %1975 = vmatprep.subr.bf16.mxu0 0
        %1976 = vmatpush1.bf16.msra.mxu0 0
        %1977 = vmatprep.subr.bf16.mxu0 0
        %1978 = vmatpush1.bf16.msra.mxu0 0
        %1979 = vmatprep.subr.bf16.mxu0 0
        %1980 = vmatpush1.bf16.msra.mxu0 0
        %1981 = vmatprep.subr.bf16.mxu0 0
        %1982 = vmatpush1.bf16.msra.mxu0 0
        %1983 = vmatprep.subr.bf16.mxu0 0
        %1984 = vmatpush1.bf16.msra.mxu0 0
        %1985 = vmatprep.subr.bf16.mxu0 0
        %1986 = vmatpush1.bf16.msra.mxu0 0
        %1987 = vmatprep.subr.bf16.mxu0 0
        %1988 = vmatpush1.bf16.msra.mxu0 0
        %1989 = vmatprep.subr.bf16.mxu0 0
        %1990 = vmatpush1.bf16.msra.mxu0 0
        %1991 = vmatprep.subr.bf16.mxu0 0
        %1992 = vmatpush1.bf16.msra.mxu0 0
        %1993 = vmatprep.mubr.bf16.mxu0 0
        %1994 = vmatmul.mubr.bf16.gmra.mrb[0].mxu0 %v1956
        %v1995 = vpop.f32.mrb[0].mxu0
        %v1996 = vadd.f32 0.0, %v1995
        %v1997 = vpop.f32.mrb[0].mxu0
        %v1998 = vpop.f32.mrb[0].mxu0
        %v1999 = vpop.f32.mrb[0].mxu0
        %2000 = vdwg.mxu0
        %v2001 = vsel %vm665, %v1858, 0.0
        %v2002 = vsel %vm665, %v1904, 0.0
        %v2003 = vadd.f32 %v2001, %v2002
        %v2004 = vsel %vm665, %v1950, 0.0
        %v2005 = vadd.f32 %v2003, %v2004
        %v2006 = vsel %vm665, %v1996, 0.0
        %v2007 = vadd.f32 %v2005, %v2006
        %v2008 = vld [vmem:[%s9] sm:$0x1]
        %v2010 = vlaneseq
        %v2011 = vshrl.u32 %v2010, 7
        %v2012 = vsub.s32 0, %v2011
        %v2013 = vrot.slane %v2008, %v2012
        %v2015 = vadd.f32 %v2007, %v2013
        %v2016 = vadd.f32 %v606, %v2015
        %v2017 = vsel %vm665, %v2016, 0.0
        %2018 = vadd.xlane.f32.xlu0 %v2017
        %v2019 = vpop.xlane.xlu0 %2018
        %v2020 = vrcp.pop 32.0
        %v2021 = vmul.f32 %v2019, %v2020
        %v2022 = vsub.f32 %v2016, %v2021
        %v2023 = vmul.f32 %v2022, %v2022
        %v2024 = vsel %vm665, %v2023, 0.0
        %2025 = vadd.xlane.f32.xlu0 %v2024
        %v2026 = vpop.xlane.xlu0 %2025
        %v2027 = vmul.f32 %v2026, %v2020
        %v2028 = vadd.f32 %v2027, 1e-05
        %v2029 = vrsqrt.pop %v2028
        %v2030 = vmul.f32 %v2022, %v2029
        %v2031 = vld [vmem:[%s10] sm:$0x1]
        %v2033 = vlaneseq
        %v2034 = vshrl.u32 %v2033, 7
        %v2035 = vsub.s32 0, %v2034
        %v2036 = vrot.slane %v2031, %v2035
        %v2038 = vmul.f32 %v2030, %v2036
        %v2039 = vld [vmem:[%s11] sm:$0x1]
        %v2041 = vlaneseq
        %v2042 = vshrl.u32 %v2041, 7
        %v2043 = vsub.s32 0, %v2042
        %v2044 = vrot.slane %v2039, %v2043
        %v2046 = vadd.f32 %v2038, %v2044
        %v2047 = vpack.c.bf16 %v2046, %v2046
        %v2048 = vld [vmem:[%s12] sm:$0xf]
        %v2049 = vld [vmem:[%s12 + $0x4] sm:$0xf]
        %v2050 = vld [vmem:[%s12 + $0x8] sm:$0xf]
        %v2051 = vld [vmem:[%s12 + $0xc] sm:$0xf]
        %v2052 = vld [vmem:[%s13] sm:$0x1]
        %v2054 = vlaneseq
        %v2055 = vshrl.u32 %v2054, 7
        %v2056 = vsub.s32 0, %v2055
        %v2057 = vrot.slane %v2052, %v2056
        %v2063 = vunpack.c.l.b16 %v2048
        %v2064 = vunpack.c.l.b16 %v2049
        %v2065 = vunpack.c.l.b16 %v2050
        %v2066 = vunpack.c.l.b16 %v2051
        %v2067 = vpack.c.b16 %v2064, %v2063
        %v2068 = vpack.c.b16 %v2066, %v2065
        %v2072 = vsel %vm665, %v2047, 0
        %2074 = vmatprep.subr.bf16.mxu0 0
        %2075 = vmatpush1.bf16.msra.mxu0 %v2067
        %2076 = vmatprep.subr.bf16.mxu0 0
        %2077 = vmatpush1.bf16.msra.mxu0 %v2068
        %2078 = vmatprep.subr.bf16.mxu0 0
        %2079 = vmatpush1.bf16.msra.mxu0 0
        %2080 = vmatprep.subr.bf16.mxu0 0
        %2081 = vmatpush1.bf16.msra.mxu0 0
        %2082 = vmatprep.subr.bf16.mxu0 0
        %2083 = vmatpush1.bf16.msra.mxu0 0
        %2084 = vmatprep.subr.bf16.mxu0 0
        %2085 = vmatpush1.bf16.msra.mxu0 0
        %2086 = vmatprep.subr.bf16.mxu0 0
        %2087 = vmatpush1.bf16.msra.mxu0 0
        %2088 = vmatprep.subr.bf16.mxu0 0
        %2089 = vmatpush1.bf16.msra.mxu0 0
        %2090 = vmatprep.subr.bf16.mxu0 0
        %2091 = vmatpush1.bf16.msra.mxu0 0
        %2092 = vmatprep.subr.bf16.mxu0 0
        %2093 = vmatpush1.bf16.msra.mxu0 0
        %2094 = vmatprep.subr.bf16.mxu0 0
        %2095 = vmatpush1.bf16.msra.mxu0 0
        %2096 = vmatprep.subr.bf16.mxu0 0
        %2097 = vmatpush1.bf16.msra.mxu0 0
        %2098 = vmatprep.subr.bf16.mxu0 0
        %2099 = vmatpush1.bf16.msra.mxu0 0
        %2100 = vmatprep.subr.bf16.mxu0 0
        %2101 = vmatpush1.bf16.msra.mxu0 0
        %2102 = vmatprep.subr.bf16.mxu0 0
        %2103 = vmatpush1.bf16.msra.mxu0 0
        %2104 = vmatprep.subr.bf16.mxu0 0
        %2105 = vmatpush1.bf16.msra.mxu0 0
        %2106 = vmatprep.mubr.bf16.mxu0 0
        %2107 = vmatmul.mubr.bf16.gmra.mrb[0].mxu0 %v2072
        %v2108 = vpop.f32.mrb[0].mxu0
        %v2109 = vadd.f32 %v2057, %v2108
        %v2110 = vpop.f32.mrb[0].mxu0
        %v2111 = vpop.f32.mrb[0].mxu0
        %v2112 = vpop.f32.mrb[0].mxu0
        %2113 = vdwg.mxu0
        %v2114 = vmul.f32 %v2109, 0.5
        %v2115 = vmul.f32 %v2109, 0.70710677
        %v2116 = vand.u32 2147483647, %v2115
        %v2117 = vmul.f32 %v2116, 0.3275911
        %v2118 = vadd.f32 %v2117, 1.0
        %v2119 = vrcp.pop %v2118
        %v2120 = vmul.f32 1.0, %v2119
        %v2121 = vmul.f32 %v2120, 1.0614054
        %v2122 = vadd.f32 %v2121, -1.4531521
        %v2123 = vmul.f32 %v2122, %v2120
        %v2124 = vadd.f32 %v2123, 1.4214138
        %v2125 = vmul.f32 %v2124, %v2120
        %v2126 = vadd.f32 %v2125, -0.28449672
        %v2127 = vmul.f32 %v2126, %v2120
        %v2128 = vadd.f32 %v2127, 0.2548296
        %v2129 = vmul.f32 %v2128, %v2120
        %v2130 = vsub.f32 0.0, %v2116
        %v2131 = vmul.f32 %v2130, %v2116
        %v2132 = vmul.f32 %v2131, 1.442695
        %v2133 = vpow.pop %v2132
        %v2134 = vmul.f32 %v2129, %v2133
        %v2135 = vsub.f32 1.0, %v2134
        %vm2136 = vcmp.ge.f32.partialorder %v2115, 0.0
        %v2137 = vsub.f32 0.0, %v2135
        %v2138 = vsel %vm2136, %v2135, %v2137
        %v2139 = vadd.f32 %v2138, 1.0
        %v2140 = vmul.f32 %v2114, %v2139
        %v2141 = vpack.c.bf16 %v2140, %v2140
        %v2142 = vld [vmem:[%s14] sm:$0xf]
        %v2143 = vld [vmem:[%s14 + $0x4] sm:$0xf]
        %v2144 = vld [vmem:[%s14 + $0x8] sm:$0xf]
        %v2145 = vld [vmem:[%s14 + $0xc] sm:$0xf]
        %v2146 = vld [vmem:[%s14 + $0x10] sm:$0xf]
        %v2147 = vld [vmem:[%s14 + $0x14] sm:$0xf]
        %v2148 = vld [vmem:[%s14 + $0x18] sm:$0xf]
        %v2149 = vld [vmem:[%s14 + $0x1c] sm:$0xf]
        %v2150 = vld [vmem:[%s15] sm:$0x1]
        %v2152 = vlaneseq
        %v2153 = vshrl.u32 %v2152, 7
        %v2154 = vsub.s32 0, %v2153
        %v2155 = vrot.slane %v2150, %v2154
        %v2165 = vunpack.c.l.b16 %v2142
        %v2166 = vunpack.c.l.b16 %v2143
        %v2167 = vunpack.c.l.b16 %v2144
        %v2168 = vunpack.c.l.b16 %v2145
        %v2169 = vunpack.c.l.b16 %v2146
        %v2170 = vunpack.c.l.b16 %v2147
        %v2171 = vunpack.c.l.b16 %v2148
        %v2172 = vunpack.c.l.b16 %v2149
        %v2173 = vpack.c.b16 %v2166, %v2165
        %v2174 = vpack.c.b16 %v2168, %v2167
        %v2175 = vpack.c.b16 %v2170, %v2169
        %v2176 = vpack.c.b16 %v2172, %v2171
        %vm2181 = vcmask 523264
        %v2183 = vsel %vm2181, %v2141, 0
        %2185 = vmatprep.subr.bf16.mxu0 0
        %2186 = vmatpush1.bf16.msra.mxu0 %v2173
        %2187 = vmatprep.subr.bf16.mxu0 0
        %2188 = vmatpush1.bf16.msra.mxu0 %v2174
        %2189 = vmatprep.subr.bf16.mxu0 0
        %2190 = vmatpush1.bf16.msra.mxu0 %v2175
        %2191 = vmatprep.subr.bf16.mxu0 0
        %2192 = vmatpush1.bf16.msra.mxu0 %v2176
        %2193 = vmatprep.subr.bf16.mxu0 0
        %2194 = vmatpush1.bf16.msra.mxu0 0
        %2195 = vmatprep.subr.bf16.mxu0 0
        %2196 = vmatpush1.bf16.msra.mxu0 0
        %2197 = vmatprep.subr.bf16.mxu0 0
        %2198 = vmatpush1.bf16.msra.mxu0 0
        %2199 = vmatprep.subr.bf16.mxu0 0
        %2200 = vmatpush1.bf16.msra.mxu0 0
        %2201 = vmatprep.subr.bf16.mxu0 0
        %2202 = vmatpush1.bf16.msra.mxu0 0
        %2203 = vmatprep.subr.bf16.mxu0 0
        %2204 = vmatpush1.bf16.msra.mxu0 0
        %2205 = vmatprep.subr.bf16.mxu0 0
        %2206 = vmatpush1.bf16.msra.mxu0 0
        %2207 = vmatprep.subr.bf16.mxu0 0
        %2208 = vmatpush1.bf16.msra.mxu0 0
        %2209 = vmatprep.subr.bf16.mxu0 0
        %2210 = vmatpush1.bf16.msra.mxu0 0
        %2211 = vmatprep.subr.bf16.mxu0 0
        %2212 = vmatpush1.bf16.msra.mxu0 0
        %2213 = vmatprep.subr.bf16.mxu0 0
        %2214 = vmatpush1.bf16.msra.mxu0 0
        %2215 = vmatprep.subr.bf16.mxu0 0
        %2216 = vmatpush1.bf16.msra.mxu0 0
        %2217 = vmatprep.mubr.bf16.mxu0 0
        %2218 = vmatmul.mubr.bf16.gmra.mrb[0].mxu0 %v2183
        %v2219 = vpop.f32.mrb[0].mxu0
        %v2220 = vadd.f32 %v2155, %v2219
        %v2221 = vpop.f32.mrb[0].mxu0
        %v2222 = vpop.f32.mrb[0].mxu0
        %v2223 = vpop.f32.mrb[0].mxu0
        %2224 = vdwg.mxu0
        %v2225 = vadd.f32 %v2046, %v2220
        %v2226 = vsel %vm665, %v2225, 0.0
        %2227 = vadd.xlane.f32.xlu0 %v2226
        %v2228 = vpop.xlane.xlu0 %2227
        %v2229 = vmul.f32 %v2228, %v2020
        %v2230 = vsub.f32 %v2225, %v2229
        %v2231 = vmul.f32 %v2230, %v2230
        %v2232 = vsel %vm665, %v2231, 0.0
        %2233 = vadd.xlane.f32.xlu0 %v2232
        %v2234 = vpop.xlane.xlu0 %2233
        %v2235 = vmul.f32 %v2234, %v2020
        %v2236 = vadd.f32 %v2235, 1e-05
        %v2237 = vrsqrt.pop %v2236
        %v2238 = vmul.f32 %v2230, %v2237
        %v2239 = vld [vmem:[%s16] sm:$0x1]
        %v2241 = vlaneseq
        %v2242 = vshrl.u32 %v2241, 7
        %v2243 = vsub.s32 0, %v2242
        %v2244 = vrot.slane %v2239, %v2243
        %v2246 = vmul.f32 %v2238, %v2244
        %v2247 = vld [vmem:[%s17] sm:$0x1]
        %v2249 = vlaneseq
        %v2250 = vshrl.u32 %v2249, 7
        %v2251 = vsub.s32 0, %v2250
        %v2252 = vrot.slane %v2247, %v2251
        %v2254 = vadd.f32 %v2246, %v2252
        %2255 = vst.msk [vmem:[%s601] sm:$0xff] %vm665, %v2254
        %s2256 = sand.u32 %s431, 1
        %s2257 = scalar_lea.sflag [#allocation4], %s2256
        %s2258 = sand.u32 %s431, 1
        %s2259 = smul.addr %s2258, 8
        %s2260 = scalar_lea.vmem [#allocation5], %s2259
        // Predicated region
        $region97: #{_lambda_.3} parent=91 // pred_check
          %p2261 = pneg %p441
        $region98: #{_lambda_.3} parent=91 // pred_check_branch
          %2263 = sbr.rel (%p2261) target = $region100
        $region99: #{_lambda_.3} parent=91 // pred_region
          %s2265 = ssub.s32 128, 128
          %2266 = vsyncadd %s2257, %s2265
          %s2267 = smul.addr %s35, 128
          %s2268 = scalar_lea.hbm %s18, %s2267
          %s2270 = sshll.u32 %s2260, 4
          %s2271 = int_to_ptr.vmem [resolvable:$true] %s2270
          %2273 = dma.vmem_to_hbm [thread:$0]  %s2271, 128, %s2268, %s2257
        $region100: #{_lambda_.3} parent=91 // pred_fallthru
          _
      $region92: #{_lambda_.3} parent=5 // pred_fallthru
        _
      %p2274 = scmp.le.s32.totalorder 2, %s30
      // Predicated region
      $region101: #{_lambda_.3} parent=5 // pred_check
        %p2275 = pneg %p2274
      $region102: #{_lambda_.3} parent=5 // pred_check_branch
        %2277 = sbr.rel (%p2275) target = $region104
      $region103: #{_lambda_.3} parent=5 // pred_region
        %s2278 = ssub.s32 %s30, 2
        // Predicated region
        $region105: #{_lambda_.3} parent=103 // pred_check
          %p2279 = pneg %p447
        $region106: #{_lambda_.3} parent=103 // pred_check_branch
          %2281 = sbr.rel (%p2279) target = $region108
        $region107: #{_lambda_.3} parent=103 // pred_region
          %s2282 = sand.u32 %s432, 1
          %s2283 = scalar_lea.sflag [#allocation4], %s2282
          %s2284 = sand.u32 %s432, 1
          %s2285 = smul.addr %s2284, 8
          %s2286 = scalar_lea.vmem [#allocation5], %s2285
          %2287 = dma.done %s2283, 128
        $region108: #{_lambda_.3} parent=103 // pred_fallthru
          _
      $region104: #{_lambda_.3} parent=5 // pred_fallthru
        _
    $region6: #{_lambda_.3} parent=1 // loop_footer
      %s34 = sadd.s32 1, %s30
    $region7: #{_lambda_.3} parent=1 // loop_footer_branch
      %29 = sbr.rel target = $region3
    $region8: #{_lambda_.3} parent=1 // loop_exit
      _
    %2288 = vsyncpa [#allocation3], 1
    %s2289 = scalar_lea.sflag [#allocation3], 1
    %2290 = vsyncpa %s2289, 1
    %2291 = vsyncpa [#allocation4], 1
    %s2292 = scalar_lea.sflag [#allocation4], 1
    %2293 = vsyncpa %s2292, 1

</llo_original>
